<compile_context>
chip_gen: v7x
topology: tpu7x:2x2x1
jax: 0.10.0
libtpu: 0.0.40
codegen_flags: <defaults>
</compile_context>

<pallas_src>
import math

import jax
import jax.numpy as jnp
from jax.experimental import pallas as pl
from jax.experimental.pallas import tpu as pltpu


# ----------------------------------------------------------------------------
# Single-buffering support probe (pipeline_mode=pl.Buffered(1)).
# ----------------------------------------------------------------------------
_SINGLE_BUFFER_OK = None


def _single_buffer_supported():
    global _SINGLE_BUFFER_OK
    if _SINGLE_BUFFER_OK is None:
        try:
            def _probe_kernel(x_ref, o_ref):
                o_ref[...] = x_ref[...]

            probe = pl.pallas_call(
                _probe_kernel,
                out_shape=jax.ShapeDtypeStruct((8, 128), jnp.float32),
                grid=(2,),
                in_specs=[pl.BlockSpec((8, 128), lambda i: (0, 0),
                                       pipeline_mode=pl.Buffered(1))],
                out_specs=pl.BlockSpec((8, 128), lambda i: (0, 0)),
            )
            jax.block_until_ready(probe(jnp.zeros((8, 128), jnp.float32)))
            _SINGLE_BUFFER_OK = True
        except Exception:
            _SINGLE_BUFFER_OK = False
    return _SINGLE_BUFFER_OK


def _spec(shape, index_map, single=False):
    """BlockSpec; single=True requests a single pipeline buffer (constant-index
    operands that never change across the grid — pure VMEM saving)."""
    if single and _single_buffer_supported():
        return pl.BlockSpec(shape, index_map, pipeline_mode=pl.Buffered(1))
    return pl.BlockSpec(shape, index_map)


# ----------------------------------------------------------------------------
# Kernel
# ----------------------------------------------------------------------------
def _make_resblock_kernel(n_head, mask_kind, kv_tile):
    """One ResidualAttentionBlock over a (B_TILE, L, D) batch block.

    Grid: (batch-block b, mlp-hidden-chunk kc).  Attention + LN2 run at kc == 0
    and are cached in VMEM scratch; each kc accumulates one MLP hidden chunk.
    mask_kind: "none" | "shared" (one (L,L) mask) | "batched" ((N,L,L) mask).
    """
    H = n_head
    eps = 1e-5

    def kernel(*refs):
        if mask_kind == "none":
            (x_ref, ln1_g, ln1_b, wqkv, bqkv, wo, bo, ln2_g, ln2_b,
             wfc, bfc, wpr, bpr, o_ref, z_sc, acc_sc) = refs
            mask_ref = None
        else:
            (x_ref, mask_ref, ln1_g, ln1_b, wqkv, bqkv, wo, bo, ln2_g, ln2_b,
             wfc, bfc, wpr, bpr, o_ref, z_sc, acc_sc) = refs

        kc = pl.program_id(1)
        n_kc = pl.num_programs(1)
        B, L, D = x_ref.shape
        M = B * L
        hd = D // H
        kvt = min(kv_tile, L)
        n_kv = L // kvt                      # kv_tile is chosen to divide L

        @pl.when(kc == 0)
        def _attention_and_ln2():
            x = x_ref[...].astype(jnp.float32).reshape(M, D)

            # ---- LayerNorm 1 (fp32, matches the fp16-safe LayerNorm) ----
            mu = jnp.mean(x, axis=-1, keepdims=True)
            var = jnp.mean((x - mu) ** 2, axis=-1, keepdims=True)
            y = (x - mu) * jax.lax.rsqrt(var + eps)
            y = y * ln1_g[0] + ln1_b[0]

            # ---- Fused QKV projection over all B_TILE*L rows (MXU M-dim).
            # q-columns are pre-scaled by 1/sqrt(hd) in prepare_layer.
            qkv = jnp.dot(y.astype(jnp.bfloat16), wqkv[...],
                          preferred_element_type=jnp.float32) + bqkv[0]  # (M, 3D)

            if mask_kind == "shared":
                mask_full = mask_ref[...].astype(jnp.float32)            # (L, L)

            # ---- Per-sequence attention, heads batched on a leading axis,
            # flash-style KV tiling with online max/sum.
            for bi in range(B):
                r0 = bi * L
                qb = qkv[r0:r0 + L, :D]
                kb = qkv[r0:r0 + L, D:2 * D]
                vb = qkv[r0:r0 + L, 2 * D:]
                # TODO(synk): pltpu.einshape / lane-resident head layout to
                # avoid these XLU relayouts.
                qh = jnp.transpose(qb.reshape(L, H, hd), (1, 0, 2)).astype(jnp.bfloat16)
                kh = jnp.transpose(kb.reshape(L, H, hd), (1, 0, 2)).astype(jnp.bfloat16)
                vh = jnp.transpose(vb.reshape(L, H, hd), (1, 0, 2)).astype(jnp.bfloat16)

                if mask_kind == "batched":
                    mask_b = mask_ref[bi].astype(jnp.float32)            # (L, L)
                elif mask_kind == "shared":
                    mask_b = mask_full
                else:
                    mask_b = None

                m_run = jnp.full((H, L, 1), -1e30, jnp.float32)
                l_run = jnp.zeros((H, L, 1), jnp.float32)
                acc = jnp.zeros((H, L, hd), jnp.float32)
                for t in range(n_kv):
                    k0 = t * kvt
                    s = jnp.einsum('hqd,hkd->hqk', qh, kh[:, k0:k0 + kvt, :],
                                   preferred_element_type=jnp.float32)   # (H,L,kvt)
                    if mask_b is not None:
                        s = s + mask_b[None, :, k0:k0 + kvt]             # fp32 mask
                    m_new = jnp.maximum(m_run, jnp.max(s, axis=-1, keepdims=True))
                    alpha = jnp.exp(m_run - m_new)
                    p = jnp.exp(s - m_new)
                    l_run = alpha * l_run + jnp.sum(p, axis=-1, keepdims=True)
                    acc = alpha * acc + jnp.einsum(
                        'hqk,hkd->hqd', p.astype(jnp.bfloat16), vh[:, k0:k0 + kvt, :],
                        preferred_element_type=jnp.float32)
                    m_run = m_new

                oh = acc * pl.reciprocal(l_run, approx=True)             # (H, L, hd)
                # Stage the merged-head context in acc_sc (reused as scratch).
                acc_sc[r0:r0 + L, :] = jnp.transpose(oh, (1, 0, 2)).reshape(L, D)

            # ---- Output projection over the full (M, D) block ----
            attn = jnp.dot(acc_sc[...].astype(jnp.bfloat16), wo[...],
                           preferred_element_type=jnp.float32) + bo[0]
            x1 = x + attn                                                # residual 1

            # ---- LayerNorm 2 (fp32) ----
            mu2 = jnp.mean(x1, axis=-1, keepdims=True)
            var2 = jnp.mean((x1 - mu2) ** 2, axis=-1, keepdims=True)
            z = (x1 - mu2) * jax.lax.rsqrt(var2 + eps)
            z = z * ln2_g[0] + ln2_b[0]

            z_sc[...] = z.astype(jnp.bfloat16)       # MXU input for MLP chunks
            acc_sc[...] = x1 + bpr[0]                # residual + c_proj bias (once)

        # ---- One MLP hidden chunk: (M,D)@(D,CH) -> QuickGELU -> (M,CH)@(CH,D) ----
        h = jnp.dot(z_sc[...], wfc[...], preferred_element_type=jnp.float32) + bfc[0]
        h = h * jax.nn.sigmoid(1.702 * h)            # QuickGELU, fp32
        acc_sc[...] += jnp.dot(h.astype(jnp.bfloat16), wpr[...],
                               preferred_element_type=jnp.float32)

        @pl.when(kc == n_kc - 1)
        def _finalize():
            o_ref[...] = acc_sc[...].reshape(B, L, D).astype(o_ref.dtype)

    return kernel


# ----------------------------------------------------------------------------
# Tiling / VMEM budgeting
# ----------------------------------------------------------------------------
def _vmem_budget():
    """Scoped-VMEM budget with headroom; falls back to the smallest part (v7x
    64 MiB) when the hardware query is unavailable."""
    try:
        cap = int(pltpu.get_tpu_info().vmem_capacity_bytes)
    except Exception:
        cap = 64 << 20
    return max(int(cap * 0.85), 32 << 20)


def _vmem_estimate(bt, L, D, CH, H, mask_kind, kv_tile):
    """Rough upper bound on VMEM need for one grid step (pipeline buffers +
    scratch + live in-kernel intermediates)."""
    f32, bf16 = 4, 2
    M = bt * L
    n_chunks = (4 * D) // CH
    wbuf = 1 if n_chunks == 1 else 2
    kv = min(kv_tile, L)
    b = 0
    b += 2 * M * D * f32                              # x (double-buffered)
    b += 2 * M * D * f32                              # output
    if mask_kind == "shared":
        b += L * L * f32
    elif mask_kind == "batched":
        b += 2 * bt * L * L * f32
    b += D * 3 * D * bf16 + 3 * D * f32               # wqkv, bqkv (resident)
    b += D * D * bf16 + D * f32                       # wo, bo
    b += 5 * D * f32                                  # ln1/ln2 g+b, bpr
    b += wbuf * (D * CH * bf16 + CH * f32 + CH * D * bf16)   # MLP chunk weights
    b += M * D * (bf16 + f32)                         # z_sc + acc_sc scratch
    b += M * 3 * D * f32                              # qkv
    b += 3 * L * D * bf16                             # per-seq q/k/v heads
    b += 3 * H * L * kv * f32                         # score / exp / prob tile
    b += H * L * (D // H) * f32                       # attention accumulator
    b += 4 * M * D * f32                              # y, attn, x1, z
    b += 2 * M * CH * f32                             # MLP hidden
    b += 2 << 20                                      # misc headroom
    return b


def _choose_tiling(N, L, D, H, mask_kind):
    budget = _vmem_budget()
    # Flash KV tile: only tile long sequences.
    if L > 512:
        kv_tile = next((t for t in (512, 256, 128) if L % t == 0), L)
    else:
        kv_tile = L
    # MLP hidden-chunk candidates (prefer fully resident weights).
    ch_cands = []
    for c in (4 * D, 2 * D, D, 512, 256, 128):
        if 0 < c <= 4 * D and (4 * D) % c == 0 and (c % 128 == 0 or c == 4 * D):
            if c not in ch_cands:
                ch_cands.append(c)
    # Batch-tile candidates (divisors of N, bounded block rows).
    bt_cands = [bt for bt in range(min(N, 8), 0, -1)
                if N % bt == 0 and (bt * L <= 1024 or bt == 1)]
    for CH in ch_cands:            # resident MLP weights first (HBM traffic),
        for bt in bt_cands:        # then the largest batch tile that fits.
            if _vmem_estimate(bt, L, D, CH, H, mask_kind, kv_tile) <= budget:
                return bt, CH, kv_tile, budget
    return 1, ch_cands[-1], kv_tile, budget


# ----------------------------------------------------------------------------
# pallas_call wrapper (one ResidualAttentionBlock)
# ----------------------------------------------------------------------------
def _resblock_call(x_nld, mask, mask_kind, p, n_head):
    N, L, D = x_nld.shape
    bt, CH, kv_tile, budget = _choose_tiling(N, L, D, n_head, mask_kind)
    n_chunks = (4 * D) // CH
    mlp_resident = (n_chunks == 1)
    M = bt * L

    kernel = _make_resblock_kernel(n_head, mask_kind, kv_tile)

    in_specs = [pl.BlockSpec((bt, L, D), lambda b, kc: (b, 0, 0))]   # x
    inputs = [x_nld]
    if mask_kind == "shared":
        in_specs.append(_spec((L, L), lambda b, kc: (0, 0), single=True))
        inputs.append(mask)
    elif mask_kind == "batched":
        in_specs.append(pl.BlockSpec((bt, L, L), lambda b, kc: (b, 0, 0)))
        inputs.append(mask)

    def const(shape):
        return _spec(shape, lambda b, kc: (0, 0), single=True)

    in_specs += [
        const((1, D)), const((1, D)),                                 # ln1 g/b
        const((D, 3 * D)), const((1, 3 * D)),                         # wqkv, bqkv
        const((D, D)), const((1, D)),                                 # wo, bo
        const((1, D)), const((1, D)),                                 # ln2 g/b
        _spec((D, CH), lambda b, kc: (0, kc), single=mlp_resident),   # wfc chunk
        _spec((1, CH), lambda b, kc: (0, kc), single=mlp_resident),   # bfc chunk
        _spec((CH, D), lambda b, kc: (kc, 0), single=mlp_resident),   # wpr chunk
        const((1, D)),                                                # bpr
    ]
    inputs += [p["ln1_g"], p["ln1_b"], p["wqkv"], p["bqkv"], p["wo"], p["bo"],
               p["ln2_g"], p["ln2_b"], p["wfc"], p["bfc"], p["wpr"], p["bpr"]]

    return pl.pallas_call(
        kernel,
        out_shape=jax.ShapeDtypeStruct((N, L, D), x_nld.dtype),
        grid_spec=pltpu.PrefetchScalarGridSpec(
            num_scalar_prefetch=0,
            grid=(N // bt, n_chunks),
            in_specs=in_specs,
            out_specs=pl.BlockSpec((bt, L, D), lambda b, kc: (b, 0, 0)),
            scratch_shapes=[pltpu.VMEM((M, D), jnp.bfloat16),   # LN2 output
                            pltpu.VMEM((M, D), jnp.float32)],   # fp32 accumulator
        ),
        compiler_params=pltpu.CompilerParams(
            dimension_semantics=("parallel", "arbitrary"),
            vmem_limit_bytes=int(budget)),
    )(*inputs)


def transformer_forward(x_lnd, attn_mask, layer_params, n_head):
    """Equivalent of Transformer.forward(x, attn_mask).

    x_lnd     : (L, N, D)   PyTorch MultiheadAttention (seq, batch, width) layout
    attn_mask : None, (L, L) shared additive mask, or (N, L, L) per-batch
                additive mask (applied to every head, fp32).
    """
    L, N, D = x_lnd.shape
    x = jnp.transpose(x_lnd, (1, 0, 2))              # -> (N, L, D)
    if attn_mask is None:
        mask_kind, mask = "none", None
    elif attn_mask.ndim == 2:
        mask_kind, mask = "shared", attn_mask.astype(jnp.float32)
    else:
        mask_kind, mask = "batched", attn_mask.astype(jnp.float32)
    for p in layer_params:
        x = _resblock_call(x, mask, mask_kind, p, n_head)
    return jnp.transpose(x, (1, 0, 2))               # -> (L, N, D)


# ----------------------------------------------------------------------------
# Parameters
# ----------------------------------------------------------------------------
def init_raw_params(key, width, layers, heads):
    """Synthetic parameters in PyTorch layout (weight = (out, in))."""
    D = width
    s = 0.02
    params = []
    for _ in range(layers):
        key, *ks = jax.random.split(key, 7)
        params.append({
            "ln1_g": jnp.ones((D,), jnp.float32),
            "ln1_b": jnp.zeros((D,), jnp.float32),
            "in_proj_w": (jax.random.normal(ks[0], (3 * D, D)) * s).astype(jnp.float32),
            "in_proj_b": (jax.random.normal(ks[1], (3 * D,)) * s).astype(jnp.float32),
            "out_proj_w": (jax.random.normal(ks[2], (D, D)) * s).astype(jnp.float32),
            "out_proj_b": jnp.zeros((D,), jnp.float32),
            "ln2_g": jnp.ones((D,), jnp.float32),
            "ln2_b": jnp.zeros((D,), jnp.float32),
            "c_fc_w": (jax.random.normal(ks[3], (4 * D, D)) * s).astype(jnp.float32),
            "c_fc_b": jnp.zeros((4 * D,), jnp.float32),
            "c_proj_w": (jax.random.normal(ks[4], (D, 4 * D)) * s).astype(jnp.float32),
            "c_proj_b": jnp.zeros((D,), jnp.float32),
        })
    return params


def prepare_layer(rp, n_head):
    """PyTorch layout -> kernel layout: weights transposed to (in, out) and cast
    to bf16 (MXU inputs); biases/LN params fp32; QKV fused into one (D, 3D)
    matrix with the 1/sqrt(head_dim) attention scale folded into the q columns."""
    D = rp["ln1_g"].shape[0]
    hd = D // n_head
    scale = 1.0 / math.sqrt(hd)
    col_scale = jnp.concatenate(
        [jnp.full((D,), scale, jnp.float32), jnp.ones((2 * D,), jnp.float32)])
    wqkv = rp["in_proj_w"].astype(jnp.float32).T * col_scale[None, :]   # (D, 3D)
    bqkv = rp["in_proj_b"].astype(jnp.float32) * col_scale
    return {
        "ln1_g": rp["ln1_g"].reshape(1, D).astype(jnp.float32),
        "ln1_b": rp["ln1_b"].reshape(1, D).astype(jnp.float32),
        "wqkv": wqkv.astype(jnp.bfloat16),
        "bqkv": bqkv.reshape(1, 3 * D).astype(jnp.float32),
        "wo": rp["out_proj_w"].astype(jnp.float32).T.astype(jnp.bfloat16),
        "bo": rp["out_proj_b"].reshape(1, D).astype(jnp.float32),
        "ln2_g": rp["ln2_g"].reshape(1, D).astype(jnp.float32),
        "ln2_b": rp["ln2_b"].reshape(1, D).astype(jnp.float32),
        "wfc": rp["c_fc_w"].astype(jnp.float32).T.astype(jnp.bfloat16),    # (D, 4D)
        "bfc": rp["c_fc_b"].reshape(1, 4 * D).astype(jnp.float32),
        "wpr": rp["c_proj_w"].astype(jnp.float32).T.astype(jnp.bfloat16),  # (4D, D)
        "bpr": rp["c_proj_b"].reshape(1, D).astype(jnp.float32),
    }


if __name__ == "__main__":
    # Small but lane-dense config: width=128 (one lane tile), heads=4, 2 layers,
    # seq=8 (one sublane tile), batch=2.  The batch tile becomes 2 and the MLP
    # stays fully resident (CH = 4*128 = 512, single chunk).
    WIDTH, LAYERS, HEADS = 128, 2, 4
    L, N = 8, 2

    key = jax.random.PRNGKey(0)
    key, kx = jax.random.split(key)
    x = jax.random.normal(kx, (L, N, WIDTH), dtype=jnp.float32)  # (seq, batch, width)

    # Shared additive causal mask (L, L) in fp32 — passed once, not per batch.
    causal = jnp.where(jnp.tril(jnp.ones((L, L), jnp.bool_)),
                       0.0, -1e9).astype(jnp.float32)

    raw_params = init_raw_params(key, WIDTH, LAYERS, HEADS)
    params = [prepare_layer(rp, HEADS) for rp in raw_params]

    out = transformer_forward(x, causal, params, HEADS)
    out = jax.block_until_ready(out)
    assert out.shape == (L, N, WIDTH)
    assert bool(jnp.all(jnp.isfinite(out)))
    print("KERNEL_OK")
</pallas_src>

<mosaic_0001>
module attributes {stable_mosaic.version = 11 : i64} {
  func.func @_probe_kernel(%arg0: i32, %arg1: memref<8x128xf32, #tpu.memory_space<vmem>>, %arg2: memref<8x128xf32, #tpu.memory_space<vmem>>) attributes {dimension_semantics = [#tpu.dimension_semantics<arbitrary>], iteration_bounds = array<i64: 2>, scalar_prefetch = 0 : i64, scratch_operands = 0 : i64, tpu.core_type = #tpu.core_type<tc>, window_params = [{pipeline_mode = #tpu.pipeline_mode<synchronous>, transform_indices = @transform_0, window_bounds = array<i64: 8, 128>}, {pipeline_mode = #tpu.pipeline_mode<synchronous>, transform_indices = @transform_1, window_bounds = array<i64: 8, 128>}]} {
    %c0 = arith.constant 0 : index
    %c0_0 = arith.constant 0 : index
    %0 = vector.load %arg1[%c0, %c0_0] : memref<8x128xf32, #tpu.memory_space<vmem>>, vector<8x128xf32>
    %c0_1 = arith.constant 0 : index
    %c0_2 = arith.constant 0 : index
    %1 = vector.load %arg2[%c0_1, %c0_2] : memref<8x128xf32, #tpu.memory_space<vmem>>, vector<8x128xf32>
    tpu.vector_store %arg2[%c0_1, %c0_2], %0 {strides = array<i32>} : memref<8x128xf32, #tpu.memory_space<vmem>>, vector<8x128xf32>,
    return
  }
  func.func @transform_0(%arg0: i32) -> (i32, i32) {
    %c0_i32 = arith.constant 0 : i32
    %c0_i32_0 = arith.constant 0 : i32
    %c0_i32_1 = arith.constant 0 : i32
    return %c0_i32, %c0_i32_0 : i32, i32
  }
  func.func @transform_1(%arg0: i32) -> (i32, i32) {
    %c0_i32 = arith.constant 0 : i32
    %c0_i32_0 = arith.constant 0 : i32
    %c0_i32_1 = arith.constant 0 : i32
    return %c0_i32, %c0_i32_0 : i32, i32
  }
}

module attributes {stable_mosaic.version = 11 : i64} {
  func.func @kernel(%arg0: i32, %arg1: i32, %arg2: memref<2x8x128xf32, #tpu.memory_space<vmem>>, %arg3: memref<8x8xf32, #tpu.memory_space<vmem>>, %arg4: memref<1x128xf32, #tpu.memory_space<vmem>>, %arg5: memref<1x128xf32, #tpu.memory_space<vmem>>, %arg6: memref<128x384xbf16, #tpu.memory_space<vmem>>, %arg7: memref<1x384xf32, #tpu.memory_space<vmem>>, %arg8: memref<128x128xbf16, #tpu.memory_space<vmem>>, %arg9: memref<1x128xf32, #tpu.memory_space<vmem>>, %arg10: memref<1x128xf32, #tpu.memory_space<vmem>>, %arg11: memref<1x128xf32, #tpu.memory_space<vmem>>, %arg12: memref<128x512xbf16, #tpu.memory_space<vmem>>, %arg13: memref<1x512xf32, #tpu.memory_space<vmem>>, %arg14: memref<512x128xbf16, #tpu.memory_space<vmem>>, %arg15: memref<1x128xf32, #tpu.memory_space<vmem>>, %arg16: memref<2x8x128xf32, #tpu.memory_space<vmem>>, %arg17: memref<16x128xbf16, #tpu.memory_space<vmem>>, %arg18: memref<16x128xf32, #tpu.memory_space<vmem>>) attributes {dimension_semantics = [#tpu.dimension_semantics<parallel>, #tpu.dimension_semantics<arbitrary>], iteration_bounds = array<i64: 1, 1>, scalar_prefetch = 0 : i64, scratch_operands = 2 : i64, tpu.core_type = #tpu.core_type<tc>, window_params = [{transform_indices = @transform_0, window_bounds = array<i64: 2, 8, 128>}, {pipeline_mode = #tpu.pipeline_mode<synchronous>, transform_indices = @transform_1, window_bounds = array<i64: 8, 8>}, {pipeline_mode = #tpu.pipeline_mode<synchronous>, transform_indices = @transform_2, window_bounds = array<i64: 1, 128>}, {pipeline_mode = #tpu.pipeline_mode<synchronous>, transform_indices = @transform_3, window_bounds = array<i64: 1, 128>}, {pipeline_mode = #tpu.pipeline_mode<synchronous>, transform_indices = @transform_4, window_bounds = array<i64: 128, 384>}, {pipeline_mode = #tpu.pipeline_mode<synchronous>, transform_indices = @transform_5, window_bounds = array<i64: 1, 384>}, {pipeline_mode = #tpu.pipeline_mode<synchronous>, transform_indices = @transform_6, window_bounds = array<i64: 128, 128>}, {pipeline_mode = #tpu.pipeline_mode<synchronous>, transform_indices = @transform_7, window_bounds = array<i64: 1, 128>}, {pipeline_mode = #tpu.pipeline_mode<synchronous>, transform_indices = @transform_8, window_bounds = array<i64: 1, 128>}, {pipeline_mode = #tpu.pipeline_mode<synchronous>, transform_indices = @transform_9, window_bounds = array<i64: 1, 128>}, {transform_indices = @transform_10, window_bounds = array<i64: 128, 512>}, {transform_indices = @transform_11, window_bounds = array<i64: 1, 512>}, {transform_indices = @transform_12, window_bounds = array<i64: 512, 128>}, {pipeline_mode = #tpu.pipeline_mode<synchronous>, transform_indices = @transform_13, window_bounds = array<i64: 1, 128>}, {transform_indices = @transform_14, window_bounds = array<i64: 2, 8, 128>}]} {
    %c0_i32 = arith.constant 0 : i32
    %0 = arith.cmpi eq, %arg1, %c0_i32 : i32
    %1 = arith.extui %0 : i1 to i32
    %c0_i32_0 = arith.constant 0 : i32
    %2 = arith.cmpi ne, %1, %c0_i32_0 : i32
    scf.if %2 {
      %c0_17 = arith.constant 0 : index
      %c0_18 = arith.constant 0 : index
      %c0_19 = arith.constant 0 : index
      %28 = vector.load %arg2[%c0_17, %c0_18, %c0_19] : memref<2x8x128xf32, #tpu.memory_space<vmem>>, vector<2x8x128xf32>
      %29 = vector.shape_cast %28 : vector<2x8x128xf32> to vector<16x128xf32>
      %cst_20 = arith.constant dense<0.000000e+00> : vector<16xf32>
      %30 = vector.multi_reduction <add>, %29, %cst_20 [1] : vector<16x128xf32> to vector<16xf32>
      %31 = vector.shape_cast %30 : vector<16xf32> to vector<16x1xf32>
      %cst_21 = arith.constant 1.280000e+02 : f32
      %32 = vector.broadcast %cst_21 : f32 to vector<16x1xf32>
      %33 = arith.divf %31, %32 : vector<16x1xf32>
      %34 = vector.broadcast %33 : vector<16x1xf32> to vector<16x128xf32>
      %35 = arith.subf %29, %34 : vector<16x128xf32>
      %36 = arith.mulf %35, %35 : vector<16x128xf32>
      %cst_22 = arith.constant dense<0.000000e+00> : vector<16xf32>
      %37 = vector.multi_reduction <add>, %36, %cst_22 [1] : vector<16x128xf32> to vector<16xf32>
      %38 = vector.shape_cast %37 : vector<16xf32> to vector<16x1xf32>
      %cst_23 = arith.constant 1.280000e+02 : f32
      %39 = vector.broadcast %cst_23 : f32 to vector<16x1xf32>
      %40 = arith.divf %38, %39 : vector<16x1xf32>
      %41 = vector.broadcast %33 : vector<16x1xf32> to vector<16x128xf32>
      %42 = arith.subf %29, %41 : vector<16x128xf32>
      %cst_24 = arith.constant 9.99999974E-6 : f32
      %43 = vector.broadcast %cst_24 : f32 to vector<16x1xf32>
      %44 = arith.addf %40, %43 : vector<16x1xf32>
      %45 = math.rsqrt %44 : vector<16x1xf32>
      %46 = vector.broadcast %45 : vector<16x1xf32> to vector<16x128xf32>
      %47 = arith.mulf %42, %46 : vector<16x128xf32>
      %c0_25 = arith.constant 0 : index
      %c0_26 = arith.constant 0 : index
      %48 = vector.load %arg4[%c0_25, %c0_26] : memref<1x128xf32, #tpu.memory_space<vmem>>, vector<1x128xf32>
      %49 = vector.shape_cast %48 : vector<1x128xf32> to vector<128xf32>
      %50 = vector.shape_cast %49 : vector<128xf32> to vector<1x128xf32>
      %51 = vector.broadcast %50 : vector<1x128xf32> to vector<16x128xf32>
      %52 = arith.mulf %47, %51 : vector<16x128xf32>
      %c0_27 = arith.constant 0 : index
      %c0_28 = arith.constant 0 : index
      %53 = vector.load %arg5[%c0_27, %c0_28] : memref<1x128xf32, #tpu.memory_space<vmem>>, vector<1x128xf32>
      %54 = vector.shape_cast %53 : vector<1x128xf32> to vector<128xf32>
      %55 = vector.shape_cast %54 : vector<128xf32> to vector<1x128xf32>
      %56 = vector.broadcast %55 : vector<1x128xf32> to vector<16x128xf32>
      %57 = arith.addf %52, %56 : vector<16x128xf32>
      %58 = arith.truncf %57 : vector<16x128xf32> to vector<16x128xbf16>
      %c0_29 = arith.constant 0 : index
      %c0_30 = arith.constant 0 : index
      %59 = vector.load %arg6[%c0_29, %c0_30] : memref<128x384xbf16, #tpu.memory_space<vmem>>, vector<128x384xbf16>
      %cst_31 = arith.constant dense<0.000000e+00> : vector<16x384xf32>
      %60 = tpu.matmul %58, %59, %cst_31 {dimension_numbers = #tpu.dot_dimension_numbers<[1], [0], [0], [1], [0, 0, 1, 1], [], []>} : vector<16x128xbf16>, vector<128x384xbf16>, vector<16x384xf32> -> vector<16x384xf32>
      %c0_32 = arith.constant 0 : index
      %c0_33 = arith.constant 0 : index
      %61 = vector.load %arg7[%c0_32, %c0_33] : memref<1x384xf32, #tpu.memory_space<vmem>>, vector<1x384xf32>
      %62 = vector.shape_cast %61 : vector<1x384xf32> to vector<384xf32>
      %63 = vector.shape_cast %62 : vector<384xf32> to vector<1x384xf32>
      %64 = vector.broadcast %63 : vector<1x384xf32> to vector<16x384xf32>
      %65 = arith.addf %60, %64 : vector<16x384xf32>
      %c0_34 = arith.constant 0 : index
      %c0_35 = arith.constant 0 : index
      %66 = vector.load %arg3[%c0_34, %c0_35] : memref<8x8xf32, #tpu.memory_space<vmem>>, vector<8x8xf32>
      %67 = vector.extract_strided_slice %65 {offsets = [0, 0], sizes = [8, 128], strides = [1, 1]} : vector<16x384xf32> to vector<8x128xf32>
      %68 = vector.extract_strided_slice %65 {offsets = [0, 128], sizes = [8, 128], strides = [1, 1]} : vector<16x384xf32> to vector<8x128xf32>
      %69 = vector.extract_strided_slice %65 {offsets = [0, 256], sizes = [8, 128], strides = [1, 1]} : vector<16x384xf32> to vector<8x128xf32>
      %70 = vector.shape_cast %67 : vector<8x128xf32> to vector<8x4x32xf32>
      %71 = tpu.transpose %70, [1, 0, 2] : vector<8x4x32xf32> -> vector<4x8x32xf32>
      %72 = arith.truncf %71 : vector<4x8x32xf32> to vector<4x8x32xbf16>
      %73 = vector.shape_cast %68 : vector<8x128xf32> to vector<8x4x32xf32>
      %74 = tpu.transpose %73, [1, 0, 2] : vector<8x4x32xf32> -> vector<4x8x32xf32>
      %75 = arith.truncf %74 : vector<4x8x32xf32> to vector<4x8x32xbf16>
      %76 = vector.shape_cast %69 : vector<8x128xf32> to vector<8x4x32xf32>
      %77 = tpu.transpose %76, [1, 0, 2] : vector<8x4x32xf32> -> vector<4x8x32xf32>
      %78 = arith.truncf %77 : vector<4x8x32xf32> to vector<4x8x32xbf16>
      %cst_36 = arith.constant -1.000000e+30 : f32
      %79 = vector.broadcast %cst_36 : f32 to vector<4x8x1xf32>
      %cst_37 = arith.constant 0.000000e+00 : f32
      %80 = vector.broadcast %cst_37 : f32 to vector<4x8x1xf32>
      %cst_38 = arith.constant 0.000000e+00 : f32
      %81 = vector.broadcast %cst_38 : f32 to vector<4x8x32xf32>
      "tpu.trace_start"() <{level = 10 : i32, message = "hqd,hkd->hqk"}> : () -> ()
      %cst_39 = arith.constant dense<0.000000e+00> : vector<4x8x8xf32>
      %82 = tpu.matmul %72, %75, %cst_39 {dimension_numbers = #tpu.dot_dimension_numbers<[2], [2], [1], [1], [0, 0, 0, 1, 1, 1], [0], [0]>} : vector<4x8x32xbf16>, vector<4x8x32xbf16>, vector<4x8x8xf32> -> vector<4x8x8xf32>
      "tpu.trace_stop"() : () -> ()
      %83 = vector.shape_cast %66 : vector<8x8xf32> to vector<1x8x8xf32>
      %84 = vector.broadcast %83 : vector<1x8x8xf32> to vector<4x8x8xf32>
      %85 = arith.addf %82, %84 : vector<4x8x8xf32>
      %cst_40 = arith.constant dense<0xFF800000> : vector<4x8xf32>
      %86 = vector.multi_reduction <maximumf>, %85, %cst_40 [2] : vector<4x8x8xf32> to vector<4x8xf32>
      %87 = vector.shape_cast %86 : vector<4x8xf32> to vector<4x8x1xf32>
      %88 = arith.maximumf %79, %87 : vector<4x8x1xf32>
      %89 = arith.subf %79, %88 : vector<4x8x1xf32>
      %90 = math.exp %89 : vector<4x8x1xf32>
      %91 = vector.broadcast %88 : vector<4x8x1xf32> to vector<4x8x8xf32>
      %92 = arith.subf %85, %91 : vector<4x8x8xf32>
      %93 = math.exp %92 : vector<4x8x8xf32>
      %94 = arith.mulf %90, %80 : vector<4x8x1xf32>
      %cst_41 = arith.constant dense<0.000000e+00> : vector<4x8xf32>
      %95 = vector.multi_reduction <add>, %93, %cst_41 [2] : vector<4x8x8xf32> to vector<4x8xf32>
      %96 = vector.shape_cast %95 : vector<4x8xf32> to vector<4x8x1xf32>
      %97 = arith.addf %94, %96 : vector<4x8x1xf32>
      %98 = vector.broadcast %90 : vector<4x8x1xf32> to vector<4x8x32xf32>
      %99 = arith.mulf %98, %81 : vector<4x8x32xf32>
      %100 = arith.truncf %93 : vector<4x8x8xf32> to vector<4x8x8xbf16>
      "tpu.trace_start"() <{level = 10 : i32, message = "hqk,hkd->hqd"}> : () -> ()
      %cst_42 = arith.constant dense<0.000000e+00> : vector<4x8x32xf32>
      %101 = tpu.matmul %100, %78, %cst_42 {dimension_numbers = #tpu.dot_dimension_numbers<[2], [1], [1], [2], [0, 0, 0, 1, 1, 2], [0], [0]>} : vector<4x8x8xbf16>, vector<4x8x32xbf16>, vector<4x8x32xf32> -> vector<4x8x32xf32>
      "tpu.trace_stop"() : () -> ()
      %102 = arith.addf %99, %101 : vector<4x8x32xf32>
      %103 = tpu.reciprocal %97 {approx = true} : vector<4x8x1xf32> -> vector<4x8x1xf32>
      %104 = vector.broadcast %103 : vector<4x8x1xf32> to vector<4x8x32xf32>
      %105 = arith.mulf %102, %104 : vector<4x8x32xf32>
      %106 = tpu.transpose %105, [1, 0, 2] : vector<4x8x32xf32> -> vector<8x4x32xf32>
      %107 = vector.shape_cast %106 : vector<8x4x32xf32> to vector<8x128xf32>
      %c0_43 = arith.constant 0 : index
      %c0_44 = arith.constant 0 : index
      %108 = vector.load %arg18[%c0_43, %c0_44] : memref<16x128xf32, #tpu.memory_space<vmem>>, vector<8x128xf32>
      tpu.vector_store %arg18[%c0_43, %c0_44], %107 {strides = array<i32>} : memref<16x128xf32, #tpu.memory_space<vmem>>, vector<8x128xf32>,
      %109 = vector.extract_strided_slice %65 {offsets = [8, 0], sizes = [8, 128], strides = [1, 1]} : vector<16x384xf32> to vector<8x128xf32>
      %110 = vector.extract_strided_slice %65 {offsets = [8, 128], sizes = [8, 128], strides = [1, 1]} : vector<16x384xf32> to vector<8x128xf32>
      %111 = vector.extract_strided_slice %65 {offsets = [8, 256], sizes = [8, 128], strides = [1, 1]} : vector<16x384xf32> to vector<8x128xf32>
      %112 = vector.shape_cast %109 : vector<8x128xf32> to vector<8x4x32xf32>
      %113 = tpu.transpose %112, [1, 0, 2] : vector<8x4x32xf32> -> vector<4x8x32xf32>
      %114 = arith.truncf %113 : vector<4x8x32xf32> to vector<4x8x32xbf16>
      %115 = vector.shape_cast %110 : vector<8x128xf32> to vector<8x4x32xf32>
      %116 = tpu.transpose %115, [1, 0, 2] : vector<8x4x32xf32> -> vector<4x8x32xf32>
      %117 = arith.truncf %116 : vector<4x8x32xf32> to vector<4x8x32xbf16>
      %118 = vector.shape_cast %111 : vector<8x128xf32> to vector<8x4x32xf32>
      %119 = tpu.transpose %118, [1, 0, 2] : vector<8x4x32xf32> -> vector<4x8x32xf32>
      %120 = arith.truncf %119 : vector<4x8x32xf32> to vector<4x8x32xbf16>
      %cst_45 = arith.constant -1.000000e+30 : f32
      %121 = vector.broadcast %cst_45 : f32 to vector<4x8x1xf32>
      %cst_46 = arith.constant 0.000000e+00 : f32
      %122 = vector.broadcast %cst_46 : f32 to vector<4x8x1xf32>
      %cst_47 = arith.constant 0.000000e+00 : f32
      %123 = vector.broadcast %cst_47 : f32 to vector<4x8x32xf32>
      "tpu.trace_start"() <{level = 10 : i32, message = "hqd,hkd->hqk"}> : () -> ()
      %cst_48 = arith.constant dense<0.000000e+00> : vector<4x8x8xf32>
      %124 = tpu.matmul %114, %117, %cst_48 {dimension_numbers = #tpu.dot_dimension_numbers<[2], [2], [1], [1], [0, 0, 0, 1, 1, 1], [0], [0]>} : vector<4x8x32xbf16>, vector<4x8x32xbf16>, vector<4x8x8xf32> -> vector<4x8x8xf32>
      "tpu.trace_stop"() : () -> ()
      %125 = vector.shape_cast %66 : vector<8x8xf32> to vector<1x8x8xf32>
      %126 = vector.broadcast %125 : vector<1x8x8xf32> to vector<4x8x8xf32>
      %127 = arith.addf %124, %126 : vector<4x8x8xf32>
      %cst_49 = arith.constant dense<0xFF800000> : vector<4x8xf32>
      %128 = vector.multi_reduction <maximumf>, %127, %cst_49 [2] : vector<4x8x8xf32> to vector<4x8xf32>
      %129 = vector.shape_cast %128 : vector<4x8xf32> to vector<4x8x1xf32>
      %130 = arith.maximumf %121, %129 : vector<4x8x1xf32>
      %131 = arith.subf %121, %130 : vector<4x8x1xf32>
      %132 = math.exp %131 : vector<4x8x1xf32>
      %133 = vector.broadcast %130 : vector<4x8x1xf32> to vector<4x8x8xf32>
      %134 = arith.subf %127, %133 : vector<4x8x8xf32>
      %135 = math.exp %134 : vector<4x8x8xf32>
      %136 = arith.mulf %132, %122 : vector<4x8x1xf32>
      %cst_50 = arith.constant dense<0.000000e+00> : vector<4x8xf32>
      %137 = vector.multi_reduction <add>, %135, %cst_50 [2] : vector<4x8x8xf32> to vector<4x8xf32>
      %138 = vector.shape_cast %137 : vector<4x8xf32> to vector<4x8x1xf32>
      %139 = arith.addf %136, %138 : vector<4x8x1xf32>
      %140 = vector.broadcast %132 : vector<4x8x1xf32> to vector<4x8x32xf32>
      %141 = arith.mulf %140, %123 : vector<4x8x32xf32>
      %142 = arith.truncf %135 : vector<4x8x8xf32> to vector<4x8x8xbf16>
      "tpu.trace_start"() <{level = 10 : i32, message = "hqk,hkd->hqd"}> : () -> ()
      %cst_51 = arith.constant dense<0.000000e+00> : vector<4x8x32xf32>
      %143 = tpu.matmul %142, %120, %cst_51 {dimension_numbers = #tpu.dot_dimension_numbers<[2], [1], [1], [2], [0, 0, 0, 1, 1, 2], [0], [0]>} : vector<4x8x8xbf16>, vector<4x8x32xbf16>, vector<4x8x32xf32> -> vector<4x8x32xf32>
      "tpu.trace_stop"() : () -> ()
      %144 = arith.addf %141, %143 : vector<4x8x32xf32>
      %145 = tpu.reciprocal %139 {approx = true} : vector<4x8x1xf32> -> vector<4x8x1xf32>
      %146 = vector.broadcast %145 : vector<4x8x1xf32> to vector<4x8x32xf32>
      %147 = arith.mulf %144, %146 : vector<4x8x32xf32>
      %148 = tpu.transpose %147, [1, 0, 2] : vector<4x8x32xf32> -> vector<8x4x32xf32>
      %149 = vector.shape_cast %148 : vector<8x4x32xf32> to vector<8x128xf32>
      %c8 = arith.constant 8 : index
      %c0_52 = arith.constant 0 : index
      %150 = vector.load %arg18[%c8, %c0_52] : memref<16x128xf32, #tpu.memory_space<vmem>>, vector<8x128xf32>
      tpu.vector_store %arg18[%c8, %c0_52], %149 {strides = array<i32>} : memref<16x128xf32, #tpu.memory_space<vmem>>, vector<8x128xf32>,
      %c0_53 = arith.constant 0 : index
      %c0_54 = arith.constant 0 : index
      %151 = vector.load %arg18[%c0_53, %c0_54] : memref<16x128xf32, #tpu.memory_space<vmem>>, vector<16x128xf32>
      %152 = arith.truncf %151 : vector<16x128xf32> to vector<16x128xbf16>
      %c0_55 = arith.constant 0 : index
      %c0_56 = arith.constant 0 : index
      %153 = vector.load %arg8[%c0_55, %c0_56] : memref<128x128xbf16, #tpu.memory_space<vmem>>, vector<128x128xbf16>
      %cst_57 = arith.constant dense<0.000000e+00> : vector<16x128xf32>
      %154 = tpu.matmul %152, %153, %cst_57 {dimension_numbers = #tpu.dot_dimension_numbers<[1], [0], [0], [1], [0, 0, 1, 1], [], []>} : vector<16x128xbf16>, vector<128x128xbf16>, vector<16x128xf32> -> vector<16x128xf32>
      %c0_58 = arith.constant 0 : index
      %c0_59 = arith.constant 0 : index
      %155 = vector.load %arg9[%c0_58, %c0_59] : memref<1x128xf32, #tpu.memory_space<vmem>>, vector<1x128xf32>
      %156 = vector.shape_cast %155 : vector<1x128xf32> to vector<128xf32>
      %157 = vector.shape_cast %156 : vector<128xf32> to vector<1x128xf32>
      %158 = vector.broadcast %157 : vector<1x128xf32> to vector<16x128xf32>
      %159 = arith.addf %154, %158 : vector<16x128xf32>
      %160 = arith.addf %29, %159 : vector<16x128xf32>
      %cst_60 = arith.constant dense<0.000000e+00> : vector<16xf32>
      %161 = vector.multi_reduction <add>, %160, %cst_60 [1] : vector<16x128xf32> to vector<16xf32>
      %162 = vector.shape_cast %161 : vector<16xf32> to vector<16x1xf32>
      %cst_61 = arith.constant 1.280000e+02 : f32
      %163 = vector.broadcast %cst_61 : f32 to vector<16x1xf32>
      %164 = arith.divf %162, %163 : vector<16x1xf32>
      %165 = vector.broadcast %164 : vector<16x1xf32> to vector<16x128xf32>
      %166 = arith.subf %160, %165 : vector<16x128xf32>
      %167 = arith.mulf %166, %166 : vector<16x128xf32>
      %cst_62 = arith.constant dense<0.000000e+00> : vector<16xf32>
      %168 = vector.multi_reduction <add>, %167, %cst_62 [1] : vector<16x128xf32> to vector<16xf32>
      %169 = vector.shape_cast %168 : vector<16xf32> to vector<16x1xf32>
      %cst_63 = arith.constant 1.280000e+02 : f32
      %170 = vector.broadcast %cst_63 : f32 to vector<16x1xf32>
      %171 = arith.divf %169, %170 : vector<16x1xf32>
      %172 = vector.broadcast %164 : vector<16x1xf32> to vector<16x128xf32>
      %173 = arith.subf %160, %172 : vector<16x128xf32>
      %cst_64 = arith.constant 9.99999974E-6 : f32
      %174 = vector.broadcast %cst_64 : f32 to vector<16x1xf32>
      %175 = arith.addf %171, %174 : vector<16x1xf32>
      %176 = math.rsqrt %175 : vector<16x1xf32>
      %177 = vector.broadcast %176 : vector<16x1xf32> to vector<16x128xf32>
      %178 = arith.mulf %173, %177 : vector<16x128xf32>
      %c0_65 = arith.constant 0 : index
      %c0_66 = arith.constant 0 : index
      %179 = vector.load %arg10[%c0_65, %c0_66] : memref<1x128xf32, #tpu.memory_space<vmem>>, vector<1x128xf32>
      %180 = vector.shape_cast %179 : vector<1x128xf32> to vector<128xf32>
      %181 = vector.shape_cast %180 : vector<128xf32> to vector<1x128xf32>
      %182 = vector.broadcast %181 : vector<1x128xf32> to vector<16x128xf32>
      %183 = arith.mulf %178, %182 : vector<16x128xf32>
      %c0_67 = arith.constant 0 : index
      %c0_68 = arith.constant 0 : index
      %184 = vector.load %arg11[%c0_67, %c0_68] : memref<1x128xf32, #tpu.memory_space<vmem>>, vector<1x128xf32>
      %185 = vector.shape_cast %184 : vector<1x128xf32> to vector<128xf32>
      %186 = vector.shape_cast %185 : vector<128xf32> to vector<1x128xf32>
      %187 = vector.broadcast %186 : vector<1x128xf32> to vector<16x128xf32>
      %188 = arith.addf %183, %187 : vector<16x128xf32>
      %189 = arith.truncf %188 : vector<16x128xf32> to vector<16x128xbf16>
      %c0_69 = arith.constant 0 : index
      %c0_70 = arith.constant 0 : index
      %190 = vector.load %arg17[%c0_69, %c0_70] : memref<16x128xbf16, #tpu.memory_space<vmem>>, vector<16x128xbf16>
      tpu.vector_store %arg17[%c0_69, %c0_70], %189 {strides = array<i32>} : memref<16x128xbf16, #tpu.memory_space<vmem>>, vector<16x128xbf16>,
      %c0_71 = arith.constant 0 : index
      %c0_72 = arith.constant 0 : index
      %191 = vector.load %arg15[%c0_71, %c0_72] : memref<1x128xf32, #tpu.memory_space<vmem>>, vector<1x128xf32>
      %192 = vector.shape_cast %191 : vector<1x128xf32> to vector<128xf32>
      %193 = vector.shape_cast %192 : vector<128xf32> to vector<1x128xf32>
      %194 = vector.broadcast %193 : vector<1x128xf32> to vector<16x128xf32>
      %195 = arith.addf %160, %194 : vector<16x128xf32>
      %c0_73 = arith.constant 0 : index
      %c0_74 = arith.constant 0 : index
      %196 = vector.load %arg18[%c0_73, %c0_74] : memref<16x128xf32, #tpu.memory_space<vmem>>, vector<16x128xf32>
      tpu.vector_store %arg18[%c0_73, %c0_74], %195 {strides = array<i32>} : memref<16x128xf32, #tpu.memory_space<vmem>>, vector<16x128xf32>,
    } else {
    }
    %c0 = arith.constant 0 : index
    %c0_1 = arith.constant 0 : index
    %3 = vector.load %arg17[%c0, %c0_1] : memref<16x128xbf16, #tpu.memory_space<vmem>>, vector<16x128xbf16>
    %c0_2 = arith.constant 0 : index
    %c0_3 = arith.constant 0 : index
    %4 = vector.load %arg12[%c0_2, %c0_3] : memref<128x512xbf16, #tpu.memory_space<vmem>>, vector<128x512xbf16>
    %cst = arith.constant dense<0.000000e+00> : vector<16x512xf32>
    %5 = tpu.matmul %3, %4, %cst {dimension_numbers = #tpu.dot_dimension_numbers<[1], [0], [0], [1], [0, 0, 1, 1], [], []>} : vector<16x128xbf16>, vector<128x512xbf16>, vector<16x512xf32> -> vector<16x512xf32>
    %c0_4 = arith.constant 0 : index
    %c0_5 = arith.constant 0 : index
    %6 = vector.load %arg13[%c0_4, %c0_5] : memref<1x512xf32, #tpu.memory_space<vmem>>, vector<1x512xf32>
    %7 = vector.shape_cast %6 : vector<1x512xf32> to vector<512xf32>
    %8 = vector.shape_cast %7 : vector<512xf32> to vector<1x512xf32>
    %9 = vector.broadcast %8 : vector<1x512xf32> to vector<16x512xf32>
    %10 = arith.addf %5, %9 : vector<16x512xf32>
    %cst_6 = arith.constant 1.702000e+00 : f32
    %11 = vector.broadcast %cst_6 : f32 to vector<16x512xf32>
    %12 = arith.mulf %11, %10 : vector<16x512xf32>
    %13 = arith.negf %12 : vector<16x512xf32>
    %14 = math.exp %13 : vector<16x512xf32>
    %cst_7 = arith.constant 1.000000e+00 : f32
    %15 = vector.broadcast %cst_7 : f32 to vector<16x512xf32>
    %16 = arith.addf %15, %14 : vector<16x512xf32>
    %17 = arith.divf %15, %16 : vector<16x512xf32>
    %18 = arith.mulf %10, %17 : vector<16x512xf32>
    %c0_8 = arith.constant 0 : index
    %c0_9 = arith.constant 0 : index
    %19 = vector.load %arg18[%c0_8, %c0_9] : memref<16x128xf32, #tpu.memory_space<vmem>>, vector<16x128xf32>
    %20 = arith.truncf %18 : vector<16x512xf32> to vector<16x512xbf16>
    %c0_10 = arith.constant 0 : index
    %c0_11 = arith.constant 0 : index
    %21 = vector.load %arg14[%c0_10, %c0_11] : memref<512x128xbf16, #tpu.memory_space<vmem>>, vector<512x128xbf16>
    %cst_12 = arith.constant dense<0.000000e+00> : vector<16x128xf32>
    %22 = tpu.matmul %20, %21, %cst_12 {dimension_numbers = #tpu.dot_dimension_numbers<[1], [0], [0], [1], [0, 0, 1, 1], [], []>} : vector<16x512xbf16>, vector<512x128xbf16>, vector<16x128xf32> -> vector<16x128xf32>
    %23 = arith.addf %19, %22 : vector<16x128xf32>
    %c0_13 = arith.constant 0 : index
    %c0_14 = arith.constant 0 : index
    %24 = vector.load %arg18[%c0_13, %c0_14] : memref<16x128xf32, #tpu.memory_space<vmem>>, vector<16x128xf32>
    tpu.vector_store %arg18[%c0_13, %c0_14], %23 {strides = array<i32>} : memref<16x128xf32, #tpu.memory_space<vmem>>, vector<16x128xf32>,
    %c0_i32_15 = arith.constant 0 : i32
    %25 = arith.cmpi eq, %arg1, %c0_i32_15 : i32
    %26 = arith.extui %25 : i1 to i32
    %c0_i32_16 = arith.constant 0 : i32
    %27 = arith.cmpi ne, %26, %c0_i32_16 : i32
    scf.if %27 {
      %c0_17 = arith.constant 0 : index
      %c0_18 = arith.constant 0 : index
      %28 = vector.load %arg18[%c0_17, %c0_18] : memref<16x128xf32, #tpu.memory_space<vmem>>, vector<16x128xf32>
      %29 = vector.shape_cast %28 : vector<16x128xf32> to vector<2x8x128xf32>
      %c0_19 = arith.constant 0 : index
      %c0_20 = arith.constant 0 : index
      %c0_21 = arith.constant 0 : index
      %30 = vector.load %arg16[%c0_19, %c0_20, %c0_21] : memref<2x8x128xf32, #tpu.memory_space<vmem>>, vector<2x8x128xf32>
      tpu.vector_store %arg16[%c0_19, %c0_20, %c0_21], %29 {strides = array<i32>} : memref<2x8x128xf32, #tpu.memory_space<vmem>>, vector<2x8x128xf32>,
    } else {
    }
    return
  }
  func.func @transform_0(%arg0: i32, %arg1: i32) -> (i32, i32, i32) {
    %c0_i32 = arith.constant 0 : i32
    %c0_i32_0 = arith.constant 0 : i32
    %c0_i32_1 = arith.constant 0 : i32
    return %arg0, %c0_i32, %c0_i32_0 : i32, i32, i32
  }
  func.func @transform_1(%arg0: i32, %arg1: i32) -> (i32, i32) {
    %c0_i32 = arith.constant 0 : i32
    %c0_i32_0 = arith.constant 0 : i32
    %c0_i32_1 = arith.constant 0 : i32
    return %c0_i32, %c0_i32_0 : i32, i32
  }
  func.func @transform_2(%arg0: i32, %arg1: i32) -> (i32, i32) {
    %c0_i32 = arith.constant 0 : i32
    %c0_i32_0 = arith.constant 0 : i32
    %c0_i32_1 = arith.constant 0 : i32
    return %c0_i32, %c0_i32_0 : i32, i32
  }
  func.func @transform_3(%arg0: i32, %arg1: i32) -> (i32, i32) {
    %c0_i32 = arith.constant 0 : i32
    %c0_i32_0 = arith.constant 0 : i32
    %c0_i32_1 = arith.constant 0 : i32
    return %c0_i32, %c0_i32_0 : i32, i32
  }
  func.func @transform_4(%arg0: i32, %arg1: i32) -> (i32, i32) {
    %c0_i32 = arith.constant 0 : i32
    %c0_i32_0 = arith.constant 0 : i32
    %c0_i32_1 = arith.constant 0 : i32
    return %c0_i32, %c0_i32_0 : i32, i32
  }
  func.func @transform_5(%arg0: i32, %arg1: i32) -> (i32, i32) {
    %c0_i32 = arith.constant 0 : i32
    %c0_i32_0 = arith.constant 0 : i32
    %c0_i32_1 = arith.constant 0 : i32
    return %c0_i32, %c0_i32_0 : i32, i32
  }
  func.func @transform_6(%arg0: i32, %arg1: i32) -> (i32, i32) {
    %c0_i32 = arith.constant 0 : i32
    %c0_i32_0 = arith.constant 0 : i32
    %c0_i32_1 = arith.constant 0 : i32
    return %c0_i32, %c0_i32_0 : i32, i32
  }
  func.func @transform_7(%arg0: i32, %arg1: i32) -> (i32, i32) {
    %c0_i32 = arith.constant 0 : i32
    %c0_i32_0 = arith.constant 0 : i32
    %c0_i32_1 = arith.constant 0 : i32
    return %c0_i32, %c0_i32_0 : i32, i32
  }
  func.func @transform_8(%arg0: i32, %arg1: i32) -> (i32, i32) {
    %c0_i32 = arith.constant 0 : i32
    %c0_i32_0 = arith.constant 0 : i32
    %c0_i32_1 = arith.constant 0 : i32
    return %c0_i32, %c0_i32_0 : i32, i32
  }
  func.func @transform_9(%arg0: i32, %arg1: i32) -> (i32, i32) {
    %c0_i32 = arith.constant 0 : i32
    %c0_i32_0 = arith.constant 0 : i32
    %c0_i32_1 = arith.constant 0 : i32
    return %c0_i32, %c0_i32_0 : i32, i32
  }
  func.func @transform_10(%arg0: i32, %arg1: i32) -> (i32, i32) {
    %c0_i32 = arith.constant 0 : i32
    %c0_i32_0 = arith.constant 0 : i32
    return %c0_i32, %arg1 : i32, i32
  }
  func.func @transform_11(%arg0: i32, %arg1: i32) -> (i32, i32) {
    %c0_i32 = arith.constant 0 : i32
    %c0_i32_0 = arith.constant 0 : i32
    return %c0_i32, %arg1 : i32, i32
  }
  func.func @transform_12(%arg0: i32, %arg1: i32) -> (i32, i32) {
    %c0_i32 = arith.constant 0 : i32
    %c0_i32_0 = arith.constant 0 : i32
    return %arg1, %c0_i32 : i32, i32
  }
  func.func @transform_13(%arg0: i32, %arg1: i32) -> (i32, i32) {
    %c0_i32 = arith.constant 0 : i32
    %c0_i32_0 = arith.constant 0 : i32
    %c0_i32_1 = arith.constant 0 : i32
    return %c0_i32, %c0_i32_0 : i32, i32
  }
  func.func @transform_14(%arg0: i32, %arg1: i32) -> (i32, i32, i32) {
    %c0_i32 = arith.constant 0 : i32
    %c0_i32_0 = arith.constant 0 : i32
    %c0_i32_1 = arith.constant 0 : i32
    return %arg0, %c0_i32, %c0_i32_0 : i32, i32, i32
  }
}

</mosaic_0001>

<llo_original>
// kernel: tpu_custom_call.1
$region0: #{tpu_custom_call.1}
  #allocation0 [shape = 'u32[]', space=smem, size = 0x4, offset = 0x4, fixed_abs, tag = 'smem constant byte address 0x4 - core index']
  #allocation1 [shape = 'u32[144,128]{1,0:T(1,128)}', space=vmem, size = 0x12000, scoped, tag = 'internal scratch']
  %s0 = inlined_call_operand.hbm [shape: f32[8,128], index: 0, kind: input, shape index: {}]
  %s1 = inlined_call_operand.hbm [shape: f32[8,128], index: 1, kind: output, shape index: {}]
  %s2 = sld [smem:[#allocation0]]
  $region41: #{tpu_custom_call.1} parent=0
    _
  %s4 = ssub.s32 1, %s2
  %s5 = scalar_select 0, %s4, %s2
  $region1: #{tpu_custom_call.1} parent=0
    #allocation2 [shape = 'u8[4096]{0}', space=vmem, size = 0x1000, scoped, tag = 'input window, operand 0, single buffered']
    #allocation3 [shape = 's32[2]{0}', space=sflag, size = 0x8, scoped, tag = 'scoped memory for tpu_custom_call.1']
    #allocation4 [shape = 's32[2]{0}', space=sflag, size = 0x8, scoped, tag = 'scoped memory for tpu_custom_call.1']
    #allocation5 [shape = 'u8[4096]{0}', space=vmem, size = 0x1000, scoped, tag = 'output window, operand 0, single buffered']
    %6 = vsyncpa [#allocation3], 0
    %7 = vsyncpa [#allocation4], 0
    loop: start=0, step=1, limit=4
    $region2: #{tpu_custom_call.1} parent=1 // loop_pre_header
      _
    $region3: #{tpu_custom_call.1} parent=1 // loop_header
      %s9 = sphi 0, %s13
      %p10 = scmp.ge.s32.totalorder %s9, 4
      %s17 = sphi 0, %s17
      %s19 = sphi 0, %s17
      %s20 = sphi 0, %s19
      %s34 = sphi 0, %s20
      %s38 = sphi 0, %s38
      %s40 = sphi 0, %s38
      %s41 = sphi 0, %s40
      %s55 = sphi 0, %s41
    $region4: #{tpu_custom_call.1} parent=1 // loop_header_branch
      %12 = sbr.rel (%p10) target = $region8
    $region5: #{tpu_custom_call.1} parent=1 // loop_body
      %s14 = ssub.s32 %s9, 1
      %s15 = ssub.s32 %s9, 2
      %s16 = sadd.s32 %s9, 1
      %s18 = sadd.s32 %s17, 1
      %p21 = scmp.eq.s32.totalorder %s9, 1
      %p22 = scmp.ne.s32.totalorder %s17, %s19
      %p23 = scmp.eq.s32.totalorder %s9, 0
      %p24 = por %p22, %p23
      %p25 = scmp.ne.s32.totalorder %s17, %s19
      %p26 = scmp.eq.s32.totalorder %s14, 1
      %p27 = por %p25, %p26
      %p28 = scmp.ne.s32.totalorder %s19, %s20
      %p29 = scmp.eq.s32.totalorder %s14, 0
      %p30 = por %p28, %p29
      %p31 = scmp.ne.s32.totalorder %s19, %s20
      %p32 = scmp.eq.s32.totalorder %s15, 1
      %p33 = por %p31, %p32
      %p35 = scmp.ne.s32.totalorder %s20, %s34
      %p36 = scmp.eq.s32.totalorder %s15, 0
      %p37 = por %p35, %p36
      %s39 = sadd.s32 %s38, 1
      %p42 = scmp.eq.s32.totalorder %s9, 1
      %p43 = scmp.ne.s32.totalorder %s38, %s40
      %p44 = scmp.eq.s32.totalorder %s9, 0
      %p45 = por %p43, %p44
      %p46 = scmp.ne.s32.totalorder %s38, %s40
      %p47 = scmp.eq.s32.totalorder %s14, 1
      %p48 = por %p46, %p47
      %p49 = scmp.ne.s32.totalorder %s40, %s41
      %p50 = scmp.eq.s32.totalorder %s14, 0
      %p51 = por %p49, %p50
      %p52 = scmp.ne.s32.totalorder %s40, %s41
      %p53 = scmp.eq.s32.totalorder %s15, 1
      %p54 = por %p52, %p53
      %p56 = scmp.ne.s32.totalorder %s41, %s55
      %p57 = scmp.eq.s32.totalorder %s15, 0
      %p58 = por %p56, %p57
      %p59 = scmp.le.s32.totalorder 1, %s9
      %p60 = scmp.lt.s32.totalorder %s9, 3
      %p61 = pnand %p59, %p60
      %p62 = pneg %p61
      // Predicated region
      $region9: #{tpu_custom_call.1} parent=5 // pred_check
        _
      $region10: #{tpu_custom_call.1} parent=5 // pred_check_branch
        %64 = sbr.rel (%p61) target = $region12
      $region11: #{tpu_custom_call.1} parent=5 // pred_region
        %s65 = ssub.s32 %s9, 1
        // Predicated region
        $region13: #{tpu_custom_call.1} parent=11 // pred_check
          %p66 = pneg %p30
        $region14: #{tpu_custom_call.1} parent=11 // pred_check_branch
          %68 = sbr.rel (%p66) target = $region16
        $region15: #{tpu_custom_call.1} parent=11 // pred_region
          %s70 = ssub.s32 128, 128
          %71 = vsyncadd [#allocation3], %s70
          %s73 = sshll.u32 [#allocation2], 4
          %s74 = int_to_ptr.vmem [resolvable:$true] %s73
          %76 = dma.hbm_to_vmem [thread:$0]  %s0, 128, %s74, [#allocation3]
        $region16: #{tpu_custom_call.1} parent=11 // pred_fallthru
          _
      $region12: #{tpu_custom_call.1} parent=5 // pred_fallthru
        _
      %p77 = scmp.lt.s32.totalorder %s9, 2
      // Predicated region
      $region17: #{tpu_custom_call.1} parent=5 // pred_check
        %p78 = pneg %p77
      $region18: #{tpu_custom_call.1} parent=5 // pred_check_branch
        %80 = sbr.rel (%p78) target = $region20
      $region19: #{tpu_custom_call.1} parent=5 // pred_region
        _
      $region20: #{tpu_custom_call.1} parent=5 // pred_fallthru
        _
      %p81 = scmp.le.s32.totalorder 1, %s9
      %p82 = scmp.lt.s32.totalorder %s9, 3
      %p83 = pnand %p81, %p82
      %p84 = pneg %p83
      // Predicated region
      $region21: #{tpu_custom_call.1} parent=5 // pred_check
        _
      $region22: #{tpu_custom_call.1} parent=5 // pred_check_branch
        %86 = sbr.rel (%p83) target = $region24
      $region23: #{tpu_custom_call.1} parent=5 // pred_region
        %s87 = ssub.s32 %s9, 1
        // Predicated region
        $region25: #{tpu_custom_call.1} parent=23 // pred_check
          %p88 = pneg %p30
        $region26: #{tpu_custom_call.1} parent=23 // pred_check_branch
          %90 = sbr.rel (%p88) target = $region28
        $region27: #{tpu_custom_call.1} parent=23 // pred_region
          %91 = dma.done [#allocation3], 128
        $region28: #{tpu_custom_call.1} parent=23 // pred_fallthru
          _
        %p92 = pneg %p30
        %p93 = pneg %p27
        %p94 = pneg %p51
        %p95 = pneg %p48
        %v96 = vld [vmem:[#allocation2] sm:$0xff]
        %97 = vst [vmem:[#allocation5] sm:$0xff] %v96
        // Predicated region
        $region29: #{tpu_custom_call.1} parent=23 // pred_check
          %p98 = pneg %p48
        $region30: #{tpu_custom_call.1} parent=23 // pred_check_branch
          %100 = sbr.rel (%p98) target = $region32
        $region31: #{tpu_custom_call.1} parent=23 // pred_region
          %s102 = ssub.s32 128, 128
          %103 = vsyncadd [#allocation4], %s102
          %s105 = sshll.u32 [#allocation5], 4
          %s106 = int_to_ptr.vmem [resolvable:$true] %s105
          %108 = dma.vmem_to_hbm [thread:$0]  %s106, 128, %s1, [#allocation4]
        $region32: #{tpu_custom_call.1} parent=23 // pred_fallthru
          _
        // Predicated region
        $region33: #{tpu_custom_call.1} parent=23 // pred_check
          %p109 = pneg %p48
        $region34: #{tpu_custom_call.1} parent=23 // pred_check_branch
          %111 = sbr.rel (%p109) target = $region36
        $region35: #{tpu_custom_call.1} parent=23 // pred_region
          %112 = dma.done [#allocation4], 128
        $region36: #{tpu_custom_call.1} parent=23 // pred_fallthru
          _
      $region24: #{tpu_custom_call.1} parent=5 // pred_fallthru
        _
      %p113 = scmp.le.s32.totalorder 2, %s9
      // Predicated region
      $region37: #{tpu_custom_call.1} parent=5 // pred_check
        %p114 = pneg %p113
      $region38: #{tpu_custom_call.1} parent=5 // pred_check_branch
        %116 = sbr.rel (%p114) target = $region40
      $region39: #{tpu_custom_call.1} parent=5 // pred_region
        %s117 = ssub.s32 %s9, 2
      $region40: #{tpu_custom_call.1} parent=5 // pred_fallthru
        _
    $region6: #{tpu_custom_call.1} parent=1 // loop_footer
      %s13 = sadd.s32 1, %s9
    $region7: #{tpu_custom_call.1} parent=1 // loop_footer_branch
      %8 = sbr.rel target = $region3
    $region8: #{tpu_custom_call.1} parent=1 // loop_exit
      _
    %118 = vsyncpa [#allocation3], 1
    %s119 = scalar_lea.sflag [#allocation3], 1
    %120 = vsyncpa %s119, 1
    %121 = vsyncpa [#allocation4], 1
    %s122 = scalar_lea.sflag [#allocation4], 1
    %123 = vsyncpa %s122, 1

// kernel: tpu_custom_call.1
$region0: #{tpu_custom_call.1}
  #allocation0 [shape = 'u32[]', space=smem, size = 0x4, offset = 0x4, fixed_abs, tag = 'smem constant byte address 0x4 - core index']
  #allocation1 [shape = 'u32[144,128]{1,0:T(1,128)}', space=vmem, size = 0x12000, scoped, tag = 'internal scratch']
  #allocation2 [shape = 'bf16[16,128]{1,0:T(16,128)(2,1)}', space=vmem, size = 0x1000, scoped, tag = 'scratch operand']
  #allocation3 [shape = 'f32[16,128]{1,0:T(8,128)}', space=vmem, size = 0x2000, scoped, tag = 'scratch operand']
  %s0 = inlined_call_operand.hbm [shape: f32[2,8,128], index: 0, kind: input, shape index: {}]
  %s1 = inlined_call_operand.hbm [shape: f32[8,8], index: 1, kind: input, shape index: {}]
  %s2 = inlined_call_operand.hbm [shape: f32[1,128], index: 2, kind: input, shape index: {}]
  %s3 = inlined_call_operand.vmem [shape: f32[1,128], index: 3, kind: input, shape index: {}]
  %s4 = inlined_call_operand.hbm [shape: bf16[128,384], index: 4, kind: input, shape index: {}]
  %s5 = inlined_call_operand.vmem [shape: f32[1,384], index: 5, kind: input, shape index: {}]
  %s6 = inlined_call_operand.hbm [shape: bf16[128,128], index: 6, kind: input, shape index: {}]
  %s7 = inlined_call_operand.vmem [shape: f32[1,128], index: 7, kind: input, shape index: {}]
  %s8 = inlined_call_operand.vmem [shape: f32[1,128], index: 8, kind: input, shape index: {}]
  %s9 = inlined_call_operand.vmem [shape: f32[1,128], index: 9, kind: input, shape index: {}]
  %s10 = inlined_call_operand.hbm [shape: bf16[128,512], index: 10, kind: input, shape index: {}]
  %s11 = inlined_call_operand.vmem [shape: f32[1,512], index: 11, kind: input, shape index: {}]
  %s12 = inlined_call_operand.hbm [shape: bf16[512,128], index: 12, kind: input, shape index: {}]
  %s13 = inlined_call_operand.vmem [shape: f32[1,128], index: 13, kind: input, shape index: {}]
  %s14 = inlined_call_operand.hbm [shape: f32[2,8,128], index: 14, kind: output, shape index: {}]
  %s15 = sld [smem:[#allocation0]]
  $region102: #{tpu_custom_call.1} parent=0
    _
  %s17 = ssub.s32 1, %s15
  %s18 = scalar_select 0, %s17, %s15
  $region1: #{tpu_custom_call.1} parent=0
    #allocation4 [shape = 'u8[8192]{0}', space=vmem, size = 0x2000, scoped, tag = 'input window, operand 0, single buffered']
    #allocation5 [shape = 's32[1]{0}', space=sflag, size = 0x4, scoped, tag = 'scoped memory for tpu_custom_call.1']
    #allocation6 [shape = 's32[1]{0}', space=sflag, size = 0x4, scoped, tag = 'scoped memory for tpu_custom_call.1']
    #allocation7 [shape = 'u8[4096]{0}', space=vmem, size = 0x1000, scoped, tag = 'input window, operand 1, single buffered']
    #allocation8 [shape = 's32[1]{0}', space=sflag, size = 0x4, scoped, tag = 'scoped memory for tpu_custom_call.1']
    #allocation9 [shape = 'u8[512]{0}', space=vmem, size = 0x400, scoped, tag = 'input window, operand 2, single buffered']
    #allocation10 [shape = 'u8[98304]{0}', space=vmem, size = 0x18000, scoped, tag = 'input window, operand 4, single buffered']
    #allocation11 [shape = 's32[1]{0}', space=sflag, size = 0x4, scoped, tag = 'scoped memory for tpu_custom_call.1']
    #allocation12 [shape = 'u8[32768]{0}', space=vmem, size = 0x8000, scoped, tag = 'input window, operand 6, single buffered']
    #allocation13 [shape = 'u8[131072]{0}', space=vmem, size = 0x20000, scoped, tag = 'input window, operand 10, single buffered']
    #allocation14 [shape = 's32[1]{0}', space=sflag, size = 0x4, scoped, tag = 'scoped memory for tpu_custom_call.1']
    #allocation15 [shape = 'u8[131072]{0}', space=vmem, size = 0x20000, scoped, tag = 'input window, operand 12, single buffered']
    #allocation16 [shape = 'u8[8192]{0}', space=vmem, size = 0x2000, scoped, tag = 'output window, operand 0, single buffered']
    %19 = vsyncpa [#allocation5], 0
    %20 = vsyncpa [#allocation8], 0
    %21 = vsyncpa [#allocation11], 0
    %22 = vsyncpa [#allocation14], 0
    %23 = vsyncpa [#allocation6], 0
    // Predicated region
    $region2: #{tpu_custom_call.1} parent=1 // pred_check
      _
    $region3: #{tpu_custom_call.1} parent=1 // pred_check_branch
      %25 = sbr.rel (0) target = $region5
    $region4: #{tpu_custom_call.1} parent=1 // pred_region
      %s27 = ssub.s32 256, 256
      %28 = vsyncadd [#allocation5], %s27
      %s29 = sshll.u32 [#allocation4], 4
      %s30 = int_to_ptr.vmem [resolvable:$true] %s29
      %35 = dma.hbm_to_vmem [thread:$0]  %s0, 256, %s30, [#allocation5], 128, 128, 8
    $region5: #{tpu_custom_call.1} parent=1 // pred_fallthru
      _
    // Predicated region
    $region6: #{tpu_custom_call.1} parent=1 // pred_check
      _
    $region7: #{tpu_custom_call.1} parent=1 // pred_check_branch
      %37 = sbr.rel (0) target = $region9
    $region8: #{tpu_custom_call.1} parent=1 // pred_region
      %s39 = ssub.s32 128, 128
      %40 = vsyncadd [#allocation8], %s39
      %s42 = sshll.u32 [#allocation7], 4
      %s43 = int_to_ptr.vmem [resolvable:$true] %s42
      %45 = dma.hbm_to_vmem [thread:$0]  %s1, 128, %s43, [#allocation8]
    $region9: #{tpu_custom_call.1} parent=1 // pred_fallthru
      _
    // Predicated region
    $region10: #{tpu_custom_call.1} parent=1 // pred_check
      _
    $region11: #{tpu_custom_call.1} parent=1 // pred_check_branch
      %47 = sbr.rel (0) target = $region13
    $region12: #{tpu_custom_call.1} parent=1 // pred_region
      %s49 = ssub.s32 16, 16
      %50 = vsyncadd [#allocation8], %s49
      %s52 = sshll.u32 [#allocation9], 4
      %s53 = int_to_ptr.vmem [resolvable:$true] %s52
      %55 = dma.hbm_to_vmem [thread:$0]  %s2, 16, %s53, [#allocation8]
    $region13: #{tpu_custom_call.1} parent=1 // pred_fallthru
      _
    // Predicated region
    $region14: #{tpu_custom_call.1} parent=1 // pred_check
      _
    $region15: #{tpu_custom_call.1} parent=1 // pred_check_branch
      %57 = sbr.rel (0) target = $region17
    $region16: #{tpu_custom_call.1} parent=1 // pred_region
      _
    $region17: #{tpu_custom_call.1} parent=1 // pred_fallthru
      _
    // Predicated region
    $region18: #{tpu_custom_call.1} parent=1 // pred_check
      _
    $region19: #{tpu_custom_call.1} parent=1 // pred_check_branch
      %59 = sbr.rel (0) target = $region21
    $region20: #{tpu_custom_call.1} parent=1 // pred_region
      %s61 = ssub.s32 3072, 3072
      %62 = vsyncadd [#allocation11], %s61
      %s63 = sshll.u32 [#allocation10], 4
      %s64 = int_to_ptr.vmem [resolvable:$true] %s63
      %69 = dma.hbm_to_vmem [thread:$0]  %s4, 3072, %s64, [#allocation11], 192, 192, 12
    $region21: #{tpu_custom_call.1} parent=1 // pred_fallthru
      _
    // Predicated region
    $region22: #{tpu_custom_call.1} parent=1 // pred_check
      _
    $region23: #{tpu_custom_call.1} parent=1 // pred_check_branch
      %71 = sbr.rel (0) target = $region25
    $region24: #{tpu_custom_call.1} parent=1 // pred_region
      _
    $region25: #{tpu_custom_call.1} parent=1 // pred_fallthru
      _
    // Predicated region
    $region26: #{tpu_custom_call.1} parent=1 // pred_check
      _
    $region27: #{tpu_custom_call.1} parent=1 // pred_check_branch
      %73 = sbr.rel (0) target = $region29
    $region28: #{tpu_custom_call.1} parent=1 // pred_region
      %s75 = ssub.s32 1024, 1024
      %76 = vsyncadd [#allocation11], %s75
      %s77 = sshll.u32 [#allocation12], 4
      %s78 = int_to_ptr.vmem [resolvable:$true] %s77
      %83 = dma.hbm_to_vmem [thread:$0]  %s6, 1024, %s78, [#allocation11], 64, 64, 4
    $region29: #{tpu_custom_call.1} parent=1 // pred_fallthru
      _
    // Predicated region
    $region30: #{tpu_custom_call.1} parent=1 // pred_check
      _
    $region31: #{tpu_custom_call.1} parent=1 // pred_check_branch
      %85 = sbr.rel (0) target = $region33
    $region32: #{tpu_custom_call.1} parent=1 // pred_region
      _
    $region33: #{tpu_custom_call.1} parent=1 // pred_fallthru
      _
    // Predicated region
    $region34: #{tpu_custom_call.1} parent=1 // pred_check
      _
    $region35: #{tpu_custom_call.1} parent=1 // pred_check_branch
      %87 = sbr.rel (0) target = $region37
    $region36: #{tpu_custom_call.1} parent=1 // pred_region
      _
    $region37: #{tpu_custom_call.1} parent=1 // pred_fallthru
      _
    // Predicated region
    $region38: #{tpu_custom_call.1} parent=1 // pred_check
      _
    $region39: #{tpu_custom_call.1} parent=1 // pred_check_branch
      %89 = sbr.rel (0) target = $region41
    $region40: #{tpu_custom_call.1} parent=1 // pred_region
      _
    $region41: #{tpu_custom_call.1} parent=1 // pred_fallthru
      _
    // Predicated region
    $region42: #{tpu_custom_call.1} parent=1 // pred_check
      _
    $region43: #{tpu_custom_call.1} parent=1 // pred_check_branch
      %91 = sbr.rel (0) target = $region45
    $region44: #{tpu_custom_call.1} parent=1 // pred_region
      %s93 = ssub.s32 4096, 4096
      %94 = vsyncadd [#allocation14], %s93
      %s95 = sshll.u32 [#allocation13], 4
      %s96 = int_to_ptr.vmem [resolvable:$true] %s95
      %101 = dma.hbm_to_vmem [thread:$0]  %s10, 4096, %s96, [#allocation14], 256, 256, 16
    $region45: #{tpu_custom_call.1} parent=1 // pred_fallthru
      _
    // Predicated region
    $region46: #{tpu_custom_call.1} parent=1 // pred_check
      _
    $region47: #{tpu_custom_call.1} parent=1 // pred_check_branch
      %103 = sbr.rel (0) target = $region49
    $region48: #{tpu_custom_call.1} parent=1 // pred_region
      _
    $region49: #{tpu_custom_call.1} parent=1 // pred_fallthru
      _
    // Predicated region
    $region50: #{tpu_custom_call.1} parent=1 // pred_check
      _
    $region51: #{tpu_custom_call.1} parent=1 // pred_check_branch
      %105 = sbr.rel (0) target = $region53
    $region52: #{tpu_custom_call.1} parent=1 // pred_region
      %s107 = ssub.s32 4096, 4096
      %108 = vsyncadd [#allocation14], %s107
      %s109 = sshll.u32 [#allocation15], 4
      %s110 = int_to_ptr.vmem [resolvable:$true] %s109
      %115 = dma.hbm_to_vmem [thread:$0]  %s12, 4096, %s110, [#allocation14], 64, 64, 4
    $region53: #{tpu_custom_call.1} parent=1 // pred_fallthru
      _
    // Predicated region
    $region54: #{tpu_custom_call.1} parent=1 // pred_check
      _
    $region55: #{tpu_custom_call.1} parent=1 // pred_check_branch
      %117 = sbr.rel (0) target = $region57
    $region56: #{tpu_custom_call.1} parent=1 // pred_region
      _
    $region57: #{tpu_custom_call.1} parent=1 // pred_fallthru
      _
    // Predicated region
    $region58: #{tpu_custom_call.1} parent=1 // pred_check
      _
    $region59: #{tpu_custom_call.1} parent=1 // pred_check_branch
      %119 = sbr.rel (0) target = $region61
    $region60: #{tpu_custom_call.1} parent=1 // pred_region
      %120 = dma.done [#allocation5], 256
    $region61: #{tpu_custom_call.1} parent=1 // pred_fallthru
      _
    // Predicated region
    $region62: #{tpu_custom_call.1} parent=1 // pred_check
      _
    $region63: #{tpu_custom_call.1} parent=1 // pred_check_branch
      %122 = sbr.rel (0) target = $region65
    $region64: #{tpu_custom_call.1} parent=1 // pred_region
      %123 = dma.done [#allocation8], 128
    $region65: #{tpu_custom_call.1} parent=1 // pred_fallthru
      _
    // Predicated region
    $region66: #{tpu_custom_call.1} parent=1 // pred_check
      _
    $region67: #{tpu_custom_call.1} parent=1 // pred_check_branch
      %125 = sbr.rel (0) target = $region69
    $region68: #{tpu_custom_call.1} parent=1 // pred_region
      %126 = dma.done [#allocation8], 16
    $region69: #{tpu_custom_call.1} parent=1 // pred_fallthru
      _
    // Predicated region
    $region70: #{tpu_custom_call.1} parent=1 // pred_check
      _
    $region71: #{tpu_custom_call.1} parent=1 // pred_check_branch
      %128 = sbr.rel (0) target = $region73
    $region72: #{tpu_custom_call.1} parent=1 // pred_region
      %129 = dma.done [#allocation11], 3072
    $region73: #{tpu_custom_call.1} parent=1 // pred_fallthru
      _
    // Predicated region
    $region74: #{tpu_custom_call.1} parent=1 // pred_check
      _
    $region75: #{tpu_custom_call.1} parent=1 // pred_check_branch
      %131 = sbr.rel (0) target = $region77
    $region76: #{tpu_custom_call.1} parent=1 // pred_region
      %132 = dma.done [#allocation11], 1024
    $region77: #{tpu_custom_call.1} parent=1 // pred_fallthru
      _
    // Predicated region
    $region78: #{tpu_custom_call.1} parent=1 // pred_check
      _
    $region79: #{tpu_custom_call.1} parent=1 // pred_check_branch
      %134 = sbr.rel (0) target = $region81
    $region80: #{tpu_custom_call.1} parent=1 // pred_region
      %135 = dma.done [#allocation14], 4096
    $region81: #{tpu_custom_call.1} parent=1 // pred_fallthru
      _
    // Predicated region
    $region82: #{tpu_custom_call.1} parent=1 // pred_check
      _
    $region83: #{tpu_custom_call.1} parent=1 // pred_check_branch
      %137 = sbr.rel (0) target = $region85
    $region84: #{tpu_custom_call.1} parent=1 // pred_region
      %138 = dma.done [#allocation14], 4096
    $region85: #{tpu_custom_call.1} parent=1 // pred_fallthru
      _
    %p140 = scmp.eq.s32.totalorder 0, 0
    // Predicated region
    $region86: #{tpu_custom_call.1} parent=1 // pred_check
      %p141 = pneg %p140
    $region87: #{tpu_custom_call.1} parent=1 // pred_check_branch
      %143 = sbr.rel (%p141) target = $region89
    $region88: #{tpu_custom_call.1} parent=1 // pred_region
      %v144 = vld [vmem:[#allocation4] sm:$0xff]
      %v145 = vld [vmem:[#allocation4 + $0x8] sm:$0xff]
      %146 = vadd.xlane.f32.xlu0 %v144
      %v147 = vpop.xlane.xlu0 %146
      %148 = vadd.xlane.f32.xlu0 %v145
      %v149 = vpop.xlane.xlu0 %148
      %v150 = vrcp.pop 128.0
      %v151 = vmul.f32 %v147, %v150
      %v152 = vmul.f32 %v149, %v150
      %v153 = vsub.f32 %v144, %v151
      %v154 = vsub.f32 %v145, %v152
      %v155 = vmul.f32 %v153, %v153
      %v156 = vmul.f32 %v154, %v154
      %157 = vadd.xlane.f32.xlu0 %v155
      %v158 = vpop.xlane.xlu0 %157
      %159 = vadd.xlane.f32.xlu0 %v156
      %v160 = vpop.xlane.xlu0 %159
      %v161 = vmul.f32 %v158, %v150
      %v162 = vmul.f32 %v160, %v150
      %v163 = vadd.f32 %v161, 1e-05
      %v164 = vadd.f32 %v162, 1e-05
      %v165 = vrsqrt.pop %v163
      %v166 = vrsqrt.pop %v164
      %v167 = vmul.f32 %v153, %v165
      %v168 = vmul.f32 %v154, %v166
      %v169 = vld [vmem:[#allocation9] sm:$0x1]
      %v171 = vlaneseq
      %v172 = vshrl.u32 %v171, 7
      %v173 = vsub.s32 0, %v172
      %v174 = vrot.slane %v169, %v173
      %v176 = vmul.f32 %v167, %v174
      %v177 = vmul.f32 %v168, %v174
      %v178 = vld [vmem:[%s3] sm:$0x1]
      %v180 = vlaneseq
      %v181 = vshrl.u32 %v180, 7
      %v182 = vsub.s32 0, %v181
      %v183 = vrot.slane %v178, %v182
      %v185 = vadd.f32 %v176, %v183
      %v186 = vadd.f32 %v177, %v183
      %v187 = vpack.c.bf16 %v186, %v185
      %v188 = vld [vmem:[#allocation10] sm:$0xff]
      %v189 = vld [vmem:[#allocation10 + $0x8] sm:$0xf]
      %v190 = vld [vmem:[#allocation10 + $0xc] sm:$0xff]
      %v191 = vld [vmem:[#allocation10 + $0x14] sm:$0xf]
      %v192 = vld [vmem:[#allocation10 + $0x18] sm:$0xff]
      %v193 = vld [vmem:[#allocation10 + $0x20] sm:$0xf]
      %v194 = vld [vmem:[#allocation10 + $0x24] sm:$0xff]
      %v195 = vld [vmem:[#allocation10 + $0x2c] sm:$0xf]
      %v196 = vld [vmem:[#allocation10 + $0x30] sm:$0xff]
      %v197 = vld [vmem:[#allocation10 + $0x38] sm:$0xf]
      %v198 = vld [vmem:[#allocation10 + $0x3c] sm:$0xff]
      %v199 = vld [vmem:[#allocation10 + $0x44] sm:$0xf]
      %v200 = vld [vmem:[#allocation10 + $0x48] sm:$0xff]
      %v201 = vld [vmem:[#allocation10 + $0x50] sm:$0xf]
      %v202 = vld [vmem:[#allocation10 + $0x54] sm:$0xff]
      %v203 = vld [vmem:[#allocation10 + $0x5c] sm:$0xf]
      %v204 = vld [vmem:[#allocation10 + $0x60] sm:$0xff]
      %v205 = vld [vmem:[#allocation10 + $0x68] sm:$0xf]
      %v206 = vld [vmem:[#allocation10 + $0x6c] sm:$0xff]
      %v207 = vld [vmem:[#allocation10 + $0x74] sm:$0xf]
      %v208 = vld [vmem:[#allocation10 + $0x78] sm:$0xff]
      %v209 = vld [vmem:[#allocation10 + $0x80] sm:$0xf]
      %v210 = vld [vmem:[#allocation10 + $0x84] sm:$0xff]
      %v211 = vld [vmem:[#allocation10 + $0x8c] sm:$0xf]
      %v212 = vld [vmem:[#allocation10 + $0x90] sm:$0xff]
      %v213 = vld [vmem:[#allocation10 + $0x98] sm:$0xf]
      %v214 = vld [vmem:[#allocation10 + $0x9c] sm:$0xff]
      %v215 = vld [vmem:[#allocation10 + $0xa4] sm:$0xf]
      %v216 = vld [vmem:[#allocation10 + $0xa8] sm:$0xff]
      %v217 = vld [vmem:[#allocation10 + $0xb0] sm:$0xf]
      %v218 = vld [vmem:[#allocation10 + $0xb4] sm:$0xff]
      %v219 = vld [vmem:[#allocation10 + $0xbc] sm:$0xf]
      %v220 = vld [vmem:[%s5] sm:$0x7]
      %v222 = vlaneseq
      %v223 = vshrl.u32 %v222, 7
      %v224 = vsub.s32 0, %v223
      %v225 = vrot.slane %v220, %v224
      %v226 = vlaneseq
      %v227 = vshrl.u32 %v226, 7
      %v228 = vsub.s32 1, %v227
      %v229 = vrot.slane %v220, %v228
      %v230 = vlaneseq
      %v231 = vshrl.u32 %v230, 7
      %v232 = vsub.s32 2, %v231
      %v233 = vrot.slane %v220, %v232
      %v269 = vunpack.c.l.b16 %v188
      %v270 = vunpack.c.h.b16 %v188
      %v271 = vunpack.c.l.b16 %v189
      %v272 = vunpack.c.l.b16 %v190
      %v273 = vunpack.c.h.b16 %v190
      %v274 = vunpack.c.l.b16 %v191
      %v275 = vunpack.c.l.b16 %v192
      %v276 = vunpack.c.h.b16 %v192
      %v277 = vunpack.c.l.b16 %v193
      %v278 = vunpack.c.l.b16 %v194
      %v279 = vunpack.c.h.b16 %v194
      %v280 = vunpack.c.l.b16 %v195
      %v281 = vunpack.c.l.b16 %v196
      %v282 = vunpack.c.h.b16 %v196
      %v283 = vunpack.c.l.b16 %v197
      %v284 = vunpack.c.l.b16 %v198
      %v285 = vunpack.c.h.b16 %v198
      %v286 = vunpack.c.l.b16 %v199
      %v287 = vunpack.c.l.b16 %v200
      %v288 = vunpack.c.h.b16 %v200
      %v289 = vunpack.c.l.b16 %v201
      %v290 = vunpack.c.l.b16 %v202
      %v291 = vunpack.c.h.b16 %v202
      %v292 = vunpack.c.l.b16 %v203
      %v293 = vunpack.c.l.b16 %v204
      %v294 = vunpack.c.h.b16 %v204
      %v295 = vunpack.c.l.b16 %v205
      %v296 = vunpack.c.l.b16 %v206
      %v297 = vunpack.c.h.b16 %v206
      %v298 = vunpack.c.l.b16 %v207
      %v299 = vunpack.c.l.b16 %v208
      %v300 = vunpack.c.h.b16 %v208
      %v301 = vunpack.c.l.b16 %v209
      %v302 = vunpack.c.l.b16 %v210
      %v303 = vunpack.c.h.b16 %v210
      %v304 = vunpack.c.l.b16 %v211
      %v305 = vunpack.c.l.b16 %v212
      %v306 = vunpack.c.h.b16 %v212
      %v307 = vunpack.c.l.b16 %v213
      %v308 = vunpack.c.l.b16 %v214
      %v309 = vunpack.c.h.b16 %v214
      %v310 = vunpack.c.l.b16 %v215
      %v311 = vunpack.c.l.b16 %v216
      %v312 = vunpack.c.h.b16 %v216
      %v313 = vunpack.c.l.b16 %v217
      %v314 = vunpack.c.l.b16 %v218
      %v315 = vunpack.c.h.b16 %v218
      %v316 = vunpack.c.l.b16 %v219
      %v317 = vpack.c.b16 %v272, %v269
      %v318 = vpack.c.b16 %v273, %v270
      %v319 = vpack.c.b16 %v274, %v271
      %v320 = vpack.c.b16 %v278, %v275
      %v321 = vpack.c.b16 %v279, %v276
      %v322 = vpack.c.b16 %v280, %v277
      %v323 = vpack.c.b16 %v284, %v281
      %v324 = vpack.c.b16 %v285, %v282
      %v325 = vpack.c.b16 %v286, %v283
      %v326 = vpack.c.b16 %v290, %v287
      %v327 = vpack.c.b16 %v291, %v288
      %v328 = vpack.c.b16 %v292, %v289
      %v329 = vpack.c.b16 %v296, %v293
      %v330 = vpack.c.b16 %v297, %v294
      %v331 = vpack.c.b16 %v298, %v295
      %v332 = vpack.c.b16 %v302, %v299
      %v333 = vpack.c.b16 %v303, %v300
      %v334 = vpack.c.b16 %v304, %v301
      %v335 = vpack.c.b16 %v308, %v305
      %v336 = vpack.c.b16 %v309, %v306
      %v337 = vpack.c.b16 %v310, %v307
      %v338 = vpack.c.b16 %v314, %v311
      %v339 = vpack.c.b16 %v315, %v312
      %v340 = vpack.c.b16 %v316, %v313
      %365 = vmatprep.subr.bf16.mxu0 %v318
      %366 = vmatpush1.bf16.msra.mxu0 %v317
      %367 = vmatprep.subr.bf16.mxu0 %v321
      %368 = vmatpush1.bf16.msra.mxu0 %v320
      %369 = vmatprep.subr.bf16.mxu0 %v324
      %370 = vmatpush1.bf16.msra.mxu0 %v323
      %371 = vmatprep.subr.bf16.mxu0 %v327
      %372 = vmatpush1.bf16.msra.mxu0 %v326
      %373 = vmatprep.subr.bf16.mxu0 %v330
      %374 = vmatpush1.bf16.msra.mxu0 %v329
      %375 = vmatprep.subr.bf16.mxu0 %v333
      %376 = vmatpush1.bf16.msra.mxu0 %v332
      %377 = vmatprep.subr.bf16.mxu0 %v336
      %378 = vmatpush1.bf16.msra.mxu0 %v335
      %379 = vmatprep.subr.bf16.mxu0 %v339
      %380 = vmatpush1.bf16.msra.mxu0 %v338
      %381 = vmatprep.subr.bf16.mxu0 0
      %382 = vmatpush1.bf16.msra.mxu0 0
      %383 = vmatprep.subr.bf16.mxu0 0
      %384 = vmatpush1.bf16.msra.mxu0 0
      %385 = vmatprep.subr.bf16.mxu0 0
      %386 = vmatpush1.bf16.msra.mxu0 0
      %387 = vmatprep.subr.bf16.mxu0 0
      %388 = vmatpush1.bf16.msra.mxu0 0
      %389 = vmatprep.subr.bf16.mxu0 0
      %390 = vmatpush1.bf16.msra.mxu0 0
      %391 = vmatprep.subr.bf16.mxu0 0
      %392 = vmatpush1.bf16.msra.mxu0 0
      %393 = vmatprep.subr.bf16.mxu0 0
      %394 = vmatpush1.bf16.msra.mxu0 0
      %395 = vmatprep.subr.bf16.mxu0 0
      %396 = vmatpush1.bf16.msra.mxu0 0
      %397 = vmatprep.mubr.bf16.mxu0 0
      %398 = vmatmul.mubr.bf16.gmra.mrb[0].mxu0 %v187
      %v399 = vpop.f32.mrb[0].mxu0
      %v400 = vadd.f32 %v225, %v399
      %v401 = vpop.f32.mrb[0].mxu0
      %v402 = vadd.f32 %v229, %v401
      %v403 = vpop.f32.mrb[0].mxu0
      %v404 = vadd.f32 %v225, %v403
      %v405 = vpop.f32.mrb[0].mxu0
      %v406 = vadd.f32 %v229, %v405
      %407 = vdwg.mxu0
      %408 = vmatprep.subr.bf16.mxu0 0
      %409 = vmatpush1.bf16.msra.mxu0 %v319
      %410 = vmatprep.subr.bf16.mxu0 0
      %411 = vmatpush1.bf16.msra.mxu0 %v322
      %412 = vmatprep.subr.bf16.mxu0 0
      %413 = vmatpush1.bf16.msra.mxu0 %v325
      %414 = vmatprep.subr.bf16.mxu0 0
      %415 = vmatpush1.bf16.msra.mxu0 %v328
      %416 = vmatprep.subr.bf16.mxu0 0
      %417 = vmatpush1.bf16.msra.mxu0 %v331
      %418 = vmatprep.subr.bf16.mxu0 0
      %419 = vmatpush1.bf16.msra.mxu0 %v334
      %420 = vmatprep.subr.bf16.mxu0 0
      %421 = vmatpush1.bf16.msra.mxu0 %v337
      %422 = vmatprep.subr.bf16.mxu0 0
      %423 = vmatpush1.bf16.msra.mxu0 %v340
      %424 = vmatprep.subr.bf16.mxu0 0
      %425 = vmatpush1.bf16.msra.mxu0 0
      %426 = vmatprep.subr.bf16.mxu0 0
      %427 = vmatpush1.bf16.msra.mxu0 0
      %428 = vmatprep.subr.bf16.mxu0 0
      %429 = vmatpush1.bf16.msra.mxu0 0
      %430 = vmatprep.subr.bf16.mxu0 0
      %431 = vmatpush1.bf16.msra.mxu0 0
      %432 = vmatprep.subr.bf16.mxu0 0
      %433 = vmatpush1.bf16.msra.mxu0 0
      %434 = vmatprep.subr.bf16.mxu0 0
      %435 = vmatpush1.bf16.msra.mxu0 0
      %436 = vmatprep.subr.bf16.mxu0 0
      %437 = vmatpush1.bf16.msra.mxu0 0
      %438 = vmatprep.subr.bf16.mxu0 0
      %439 = vmatpush1.bf16.msra.mxu0 0
      %440 = vmatprep.mubr.bf16.mxu0 0
      %441 = vmatmul.mubr.bf16.gmra.mrb[0].mxu0 %v187
      %v442 = vpop.f32.mrb[0].mxu0
      %v443 = vadd.f32 %v233, %v442
      %v444 = vpop.f32.mrb[0].mxu0
      %v445 = vpop.f32.mrb[0].mxu0
      %v446 = vadd.f32 %v233, %v445
      %v447 = vpop.f32.mrb[0].mxu0
      %448 = vdwg.mxu0
      %v449 = vld [vmem:[#allocation7] sm:$0xff]
      %451 = vrot.lane.b32.xlu0 %v400, 96
      %v452 = vpop.permute.xlu0 %451
      %454 = vrot.lane.b32.xlu0 %v400, 64
      %v455 = vpop.permute.xlu0 %454
      %457 = vrot.lane.b32.xlu0 %v400, 32
      %v458 = vpop.permute.xlu0 %457
      %v460 = vcombine.low %v400, %v455
      %v461 = vcombine.high %v400, %v455
      %v463 = vunpack.c.l.s4 1983009808
      %v464 = vunpack.c.0.s8 %v463
      %v465 = vlaneseq
      %v466 = vshrl.u32 %v465, 7
      %v467 = vsub.s32 %v464, %v466
      %v468 = vrot.slane %v460, %v467
      %v470 = vunpack.c.l.s4 1983009808
      %v471 = vunpack.c.0.s8 %v470
      %v472 = vlaneseq
      %v473 = vshrl.u32 %v472, 7
      %v474 = vsub.s32 %v471, %v473
      %v475 = vrot.slane %v461, %v474
      %v476 = vcombine.low %v452, %v458
      %v477 = vcombine.high %v452, %v458
      %v479 = vunpack.c.l.s4 1983009808
      %v480 = vunpack.c.0.s8 %v479
      %v481 = vlaneseq
      %v482 = vshrl.u32 %v481, 7
      %v483 = vsub.s32 %v480, %v482
      %v484 = vrot.slane %v476, %v483
      %v486 = vunpack.c.l.s4 1983009808
      %v487 = vunpack.c.0.s8 %v486
      %v488 = vlaneseq
      %v489 = vshrl.u32 %v488, 7
      %v490 = vsub.s32 %v487, %v489
      %v491 = vrot.slane %v477, %v490
      %v492 = vcombine.low %v468, %v484
      %v493 = vcombine.high %v468, %v484
      %v495 = vunpack.c.l.s4 1934713408
      %v496 = vunpack.c.0.s8 %v495
      %v497 = vlaneseq
      %v498 = vshrl.u32 %v497, 7
      %v499 = vsub.s32 %v496, %v498
      %v500 = vrot.slane %v492, %v499
      %v502 = vunpack.c.l.s4 1934713408
      %v503 = vunpack.c.0.s8 %v502
      %v504 = vlaneseq
      %v505 = vshrl.u32 %v504, 7
      %v506 = vsub.s32 %v503, %v505
      %v507 = vrot.slane %v493, %v506
      %v508 = vcombine.low %v475, %v491
      %v509 = vcombine.high %v475, %v491
      %v511 = vunpack.c.l.s4 1934713408
      %v512 = vunpack.c.0.s8 %v511
      %v513 = vlaneseq
      %v514 = vshrl.u32 %v513, 7
      %v515 = vsub.s32 %v512, %v514
      %v516 = vrot.slane %v508, %v515
      %v518 = vunpack.c.l.s4 1934713408
      %v519 = vunpack.c.0.s8 %v518
      %v520 = vlaneseq
      %v521 = vshrl.u32 %v520, 7
      %v522 = vsub.s32 %v519, %v521
      %v523 = vrot.slane %v509, %v522
      %v524 = vcombine.high %v500, 0.0
      %v525 = vcombine.high %v507, 0.0
      %v526 = vcombine.high %v516, 0.0
      %v527 = vcombine.high %v523, 0.0
      %v528 = vcombine.low %v500, %v507
      %v530 = vunpack.c.l.s4 1983009808
      %v531 = vunpack.c.0.s8 %v530
      %v532 = vlaneseq
      %v533 = vshrl.u32 %v532, 7
      %v534 = vsub.s32 %v531, %v533
      %v535 = vrot.slane %v528, %v534
      %v536 = vcombine.low %v524, %v525
      %v538 = vunpack.c.l.s4 1983009808
      %v539 = vunpack.c.0.s8 %v538
      %v540 = vlaneseq
      %v541 = vshrl.u32 %v540, 7
      %v542 = vsub.s32 %v539, %v541
      %v543 = vrot.slane %v536, %v542
      %v544 = vcombine.low %v516, %v523
      %v546 = vunpack.c.l.s4 1983009808
      %v547 = vunpack.c.0.s8 %v546
      %v548 = vlaneseq
      %v549 = vshrl.u32 %v548, 7
      %v550 = vsub.s32 %v547, %v549
      %v551 = vrot.slane %v544, %v550
      %v552 = vcombine.low %v526, %v527
      %v554 = vunpack.c.l.s4 1983009808
      %v555 = vunpack.c.0.s8 %v554
      %v556 = vlaneseq
      %v557 = vshrl.u32 %v556, 7
      %v558 = vsub.s32 %v555, %v557
      %v559 = vrot.slane %v552, %v558
      %v560 = vcombine.low %v535, %v543
      %v561 = vcombine.high %v535, %v543
      %v563 = vunpack.c.l.s4 1934713408
      %v564 = vunpack.c.0.s8 %v563
      %v565 = vlaneseq
      %v566 = vshrl.u32 %v565, 7
      %v567 = vsub.s32 %v564, %v566
      %v568 = vrot.slane %v560, %v567
      %v570 = vunpack.c.l.s4 1934713408
      %v571 = vunpack.c.0.s8 %v570
      %v572 = vlaneseq
      %v573 = vshrl.u32 %v572, 7
      %v574 = vsub.s32 %v571, %v573
      %v575 = vrot.slane %v561, %v574
      %v576 = vcombine.low %v551, %v559
      %v577 = vcombine.high %v551, %v559
      %v579 = vunpack.c.l.s4 1934713408
      %v580 = vunpack.c.0.s8 %v579
      %v581 = vlaneseq
      %v582 = vshrl.u32 %v581, 7
      %v583 = vsub.s32 %v580, %v582
      %v584 = vrot.slane %v576, %v583
      %v586 = vunpack.c.l.s4 1934713408
      %v587 = vunpack.c.0.s8 %v586
      %v588 = vlaneseq
      %v589 = vshrl.u32 %v588, 7
      %v590 = vsub.s32 %v587, %v589
      %v591 = vrot.slane %v577, %v590
      %v592 = vcombine.low %v568, %v584
      %v593 = vcombine.high %v568, %v584
      %v594 = vcombine.low %v575, %v591
      %v595 = vcombine.high %v575, %v591
      %v596 = vpack.c.bf16 %v592, %v592
      %v597 = vpack.c.bf16 %v593, %v593
      %v598 = vpack.c.bf16 %v594, %v594
      %v599 = vpack.c.bf16 %v595, %v595
      %601 = vrot.lane.b32.xlu0 %v402, 96
      %v602 = vpop.permute.xlu0 %601
      %604 = vrot.lane.b32.xlu0 %v402, 64
      %v605 = vpop.permute.xlu0 %604
      %607 = vrot.lane.b32.xlu0 %v402, 32
      %v608 = vpop.permute.xlu0 %607
      %v610 = vcombine.low %v402, %v605
      %v611 = vcombine.high %v402, %v605
      %v613 = vunpack.c.l.s4 1983009808
      %v614 = vunpack.c.0.s8 %v613
      %v615 = vlaneseq
      %v616 = vshrl.u32 %v615, 7
      %v617 = vsub.s32 %v614, %v616
      %v618 = vrot.slane %v610, %v617
      %v620 = vunpack.c.l.s4 1983009808
      %v621 = vunpack.c.0.s8 %v620
      %v622 = vlaneseq
      %v623 = vshrl.u32 %v622, 7
      %v624 = vsub.s32 %v621, %v623
      %v625 = vrot.slane %v611, %v624
      %v626 = vcombine.low %v602, %v608
      %v627 = vcombine.high %v602, %v608
      %v629 = vunpack.c.l.s4 1983009808
      %v630 = vunpack.c.0.s8 %v629
      %v631 = vlaneseq
      %v632 = vshrl.u32 %v631, 7
      %v633 = vsub.s32 %v630, %v632
      %v634 = vrot.slane %v626, %v633
      %v636 = vunpack.c.l.s4 1983009808
      %v637 = vunpack.c.0.s8 %v636
      %v638 = vlaneseq
      %v639 = vshrl.u32 %v638, 7
      %v640 = vsub.s32 %v637, %v639
      %v641 = vrot.slane %v627, %v640
      %v642 = vcombine.low %v618, %v634
      %v643 = vcombine.high %v618, %v634
      %v645 = vunpack.c.l.s4 1934713408
      %v646 = vunpack.c.0.s8 %v645
      %v647 = vlaneseq
      %v648 = vshrl.u32 %v647, 7
      %v649 = vsub.s32 %v646, %v648
      %v650 = vrot.slane %v642, %v649
      %v652 = vunpack.c.l.s4 1934713408
      %v653 = vunpack.c.0.s8 %v652
      %v654 = vlaneseq
      %v655 = vshrl.u32 %v654, 7
      %v656 = vsub.s32 %v653, %v655
      %v657 = vrot.slane %v643, %v656
      %v658 = vcombine.low %v625, %v641
      %v659 = vcombine.high %v625, %v641
      %v661 = vunpack.c.l.s4 1934713408
      %v662 = vunpack.c.0.s8 %v661
      %v663 = vlaneseq
      %v664 = vshrl.u32 %v663, 7
      %v665 = vsub.s32 %v662, %v664
      %v666 = vrot.slane %v658, %v665
      %v668 = vunpack.c.l.s4 1934713408
      %v669 = vunpack.c.0.s8 %v668
      %v670 = vlaneseq
      %v671 = vshrl.u32 %v670, 7
      %v672 = vsub.s32 %v669, %v671
      %v673 = vrot.slane %v659, %v672
      %v674 = vcombine.high %v650, 0.0
      %v675 = vcombine.high %v657, 0.0
      %v676 = vcombine.high %v666, 0.0
      %v677 = vcombine.high %v673, 0.0
      %v678 = vcombine.low %v650, %v657
      %v680 = vunpack.c.l.s4 1983009808
      %v681 = vunpack.c.0.s8 %v680
      %v682 = vlaneseq
      %v683 = vshrl.u32 %v682, 7
      %v684 = vsub.s32 %v681, %v683
      %v685 = vrot.slane %v678, %v684
      %v686 = vcombine.low %v674, %v675
      %v688 = vunpack.c.l.s4 1983009808
      %v689 = vunpack.c.0.s8 %v688
      %v690 = vlaneseq
      %v691 = vshrl.u32 %v690, 7
      %v692 = vsub.s32 %v689, %v691
      %v693 = vrot.slane %v686, %v692
      %v694 = vcombine.low %v666, %v673
      %v696 = vunpack.c.l.s4 1983009808
      %v697 = vunpack.c.0.s8 %v696
      %v698 = vlaneseq
      %v699 = vshrl.u32 %v698, 7
      %v700 = vsub.s32 %v697, %v699
      %v701 = vrot.slane %v694, %v700
      %v702 = vcombine.low %v676, %v677
      %v704 = vunpack.c.l.s4 1983009808
      %v705 = vunpack.c.0.s8 %v704
      %v706 = vlaneseq
      %v707 = vshrl.u32 %v706, 7
      %v708 = vsub.s32 %v705, %v707
      %v709 = vrot.slane %v702, %v708
      %v710 = vcombine.low %v685, %v693
      %v711 = vcombine.high %v685, %v693
      %v713 = vunpack.c.l.s4 1934713408
      %v714 = vunpack.c.0.s8 %v713
      %v715 = vlaneseq
      %v716 = vshrl.u32 %v715, 7
      %v717 = vsub.s32 %v714, %v716
      %v718 = vrot.slane %v710, %v717
      %v720 = vunpack.c.l.s4 1934713408
      %v721 = vunpack.c.0.s8 %v720
      %v722 = vlaneseq
      %v723 = vshrl.u32 %v722, 7
      %v724 = vsub.s32 %v721, %v723
      %v725 = vrot.slane %v711, %v724
      %v726 = vcombine.low %v701, %v709
      %v727 = vcombine.high %v701, %v709
      %v729 = vunpack.c.l.s4 1934713408
      %v730 = vunpack.c.0.s8 %v729
      %v731 = vlaneseq
      %v732 = vshrl.u32 %v731, 7
      %v733 = vsub.s32 %v730, %v732
      %v734 = vrot.slane %v726, %v733
      %v736 = vunpack.c.l.s4 1934713408
      %v737 = vunpack.c.0.s8 %v736
      %v738 = vlaneseq
      %v739 = vshrl.u32 %v738, 7
      %v740 = vsub.s32 %v737, %v739
      %v741 = vrot.slane %v727, %v740
      %v742 = vcombine.low %v718, %v734
      %v743 = vcombine.high %v718, %v734
      %v744 = vcombine.low %v725, %v741
      %v745 = vcombine.high %v725, %v741
      %v746 = vpack.c.bf16 %v742, %v742
      %v747 = vpack.c.bf16 %v743, %v743
      %v748 = vpack.c.bf16 %v744, %v744
      %v749 = vpack.c.bf16 %v745, %v745
      %751 = vrot.lane.b32.xlu0 %v443, 96
      %v752 = vpop.permute.xlu0 %751
      %754 = vrot.lane.b32.xlu0 %v443, 64
      %v755 = vpop.permute.xlu0 %754
      %757 = vrot.lane.b32.xlu0 %v443, 32
      %v758 = vpop.permute.xlu0 %757
      %v760 = vcombine.low %v443, %v755
      %v761 = vcombine.high %v443, %v755
      %v763 = vunpack.c.l.s4 1983009808
      %v764 = vunpack.c.0.s8 %v763
      %v765 = vlaneseq
      %v766 = vshrl.u32 %v765, 7
      %v767 = vsub.s32 %v764, %v766
      %v768 = vrot.slane %v760, %v767
      %v770 = vunpack.c.l.s4 1983009808
      %v771 = vunpack.c.0.s8 %v770
      %v772 = vlaneseq
      %v773 = vshrl.u32 %v772, 7
      %v774 = vsub.s32 %v771, %v773
      %v775 = vrot.slane %v761, %v774
      %v776 = vcombine.low %v752, %v758
      %v777 = vcombine.high %v752, %v758
      %v779 = vunpack.c.l.s4 1983009808
      %v780 = vunpack.c.0.s8 %v779
      %v781 = vlaneseq
      %v782 = vshrl.u32 %v781, 7
      %v783 = vsub.s32 %v780, %v782
      %v784 = vrot.slane %v776, %v783
      %v786 = vunpack.c.l.s4 1983009808
      %v787 = vunpack.c.0.s8 %v786
      %v788 = vlaneseq
      %v789 = vshrl.u32 %v788, 7
      %v790 = vsub.s32 %v787, %v789
      %v791 = vrot.slane %v777, %v790
      %v792 = vcombine.low %v768, %v784
      %v793 = vcombine.high %v768, %v784
      %v795 = vunpack.c.l.s4 1934713408
      %v796 = vunpack.c.0.s8 %v795
      %v797 = vlaneseq
      %v798 = vshrl.u32 %v797, 7
      %v799 = vsub.s32 %v796, %v798
      %v800 = vrot.slane %v792, %v799
      %v802 = vunpack.c.l.s4 1934713408
      %v803 = vunpack.c.0.s8 %v802
      %v804 = vlaneseq
      %v805 = vshrl.u32 %v804, 7
      %v806 = vsub.s32 %v803, %v805
      %v807 = vrot.slane %v793, %v806
      %v808 = vcombine.low %v775, %v791
      %v809 = vcombine.high %v775, %v791
      %v811 = vunpack.c.l.s4 1934713408
      %v812 = vunpack.c.0.s8 %v811
      %v813 = vlaneseq
      %v814 = vshrl.u32 %v813, 7
      %v815 = vsub.s32 %v812, %v814
      %v816 = vrot.slane %v808, %v815
      %v818 = vunpack.c.l.s4 1934713408
      %v819 = vunpack.c.0.s8 %v818
      %v820 = vlaneseq
      %v821 = vshrl.u32 %v820, 7
      %v822 = vsub.s32 %v819, %v821
      %v823 = vrot.slane %v809, %v822
      %v824 = vcombine.high %v800, 0.0
      %v825 = vcombine.high %v807, 0.0
      %v826 = vcombine.high %v816, 0.0
      %v827 = vcombine.high %v823, 0.0
      %v828 = vcombine.low %v800, %v807
      %v830 = vunpack.c.l.s4 1983009808
      %v831 = vunpack.c.0.s8 %v830
      %v832 = vlaneseq
      %v833 = vshrl.u32 %v832, 7
      %v834 = vsub.s32 %v831, %v833
      %v835 = vrot.slane %v828, %v834
      %v836 = vcombine.low %v824, %v825
      %v838 = vunpack.c.l.s4 1983009808
      %v839 = vunpack.c.0.s8 %v838
      %v840 = vlaneseq
      %v841 = vshrl.u32 %v840, 7
      %v842 = vsub.s32 %v839, %v841
      %v843 = vrot.slane %v836, %v842
      %v844 = vcombine.low %v816, %v823
      %v846 = vunpack.c.l.s4 1983009808
      %v847 = vunpack.c.0.s8 %v846
      %v848 = vlaneseq
      %v849 = vshrl.u32 %v848, 7
      %v850 = vsub.s32 %v847, %v849
      %v851 = vrot.slane %v844, %v850
      %v852 = vcombine.low %v826, %v827
      %v854 = vunpack.c.l.s4 1983009808
      %v855 = vunpack.c.0.s8 %v854
      %v856 = vlaneseq
      %v857 = vshrl.u32 %v856, 7
      %v858 = vsub.s32 %v855, %v857
      %v859 = vrot.slane %v852, %v858
      %v860 = vcombine.low %v835, %v843
      %v861 = vcombine.high %v835, %v843
      %v863 = vunpack.c.l.s4 1934713408
      %v864 = vunpack.c.0.s8 %v863
      %v865 = vlaneseq
      %v866 = vshrl.u32 %v865, 7
      %v867 = vsub.s32 %v864, %v866
      %v868 = vrot.slane %v860, %v867
      %v870 = vunpack.c.l.s4 1934713408
      %v871 = vunpack.c.0.s8 %v870
      %v872 = vlaneseq
      %v873 = vshrl.u32 %v872, 7
      %v874 = vsub.s32 %v871, %v873
      %v875 = vrot.slane %v861, %v874
      %v876 = vcombine.low %v851, %v859
      %v877 = vcombine.high %v851, %v859
      %v879 = vunpack.c.l.s4 1934713408
      %v880 = vunpack.c.0.s8 %v879
      %v881 = vlaneseq
      %v882 = vshrl.u32 %v881, 7
      %v883 = vsub.s32 %v880, %v882
      %v884 = vrot.slane %v876, %v883
      %v886 = vunpack.c.l.s4 1934713408
      %v887 = vunpack.c.0.s8 %v886
      %v888 = vlaneseq
      %v889 = vshrl.u32 %v888, 7
      %v890 = vsub.s32 %v887, %v889
      %v891 = vrot.slane %v877, %v890
      %v892 = vcombine.low %v868, %v884
      %v893 = vcombine.high %v868, %v884
      %v894 = vcombine.low %v875, %v891
      %v895 = vcombine.high %v875, %v891
      %v896 = vpack.c.bf16 %v892, %v892
      %v897 = vpack.c.bf16 %v893, %v893
      %v898 = vpack.c.bf16 %v894, %v894
      %v899 = vpack.c.bf16 %v895, %v895
      %vm900 = vcmask 261120
      %v902 = vsel %vm900, %v596, 0
      %v905 = vsel %vm900, %v746, 0
      %907 = vmatprep.subr.bf16.mxu0 0
      %908 = vmatpush1.bf16.xpose.msra.mxu0 %v905
      %909 = vmatprep.subr.bf16.mxu0 0
      %910 = vmatpush1.bf16.xpose.msra.mxu0 0
      %911 = vmatprep.subr.bf16.mxu0 0
      %912 = vmatpush1.bf16.xpose.msra.mxu0 0
      %913 = vmatprep.subr.bf16.mxu0 0
      %914 = vmatpush1.bf16.xpose.msra.mxu0 0
      %915 = vmatprep.subr.bf16.mxu0 0
      %916 = vmatpush1.bf16.xpose.msra.mxu0 0
      %917 = vmatprep.subr.bf16.mxu0 0
      %918 = vmatpush1.bf16.xpose.msra.mxu0 0
      %919 = vmatprep.subr.bf16.mxu0 0
      %920 = vmatpush1.bf16.xpose.msra.mxu0 0
      %921 = vmatprep.subr.bf16.mxu0 0
      %922 = vmatpush1.bf16.xpose.msra.mxu0 0
      %923 = vmatprep.subr.bf16.mxu0 0
      %924 = vmatpush1.bf16.xpose.msra.mxu0 0
      %925 = vmatprep.subr.bf16.mxu0 0
      %926 = vmatpush1.bf16.xpose.msra.mxu0 0
      %927 = vmatprep.subr.bf16.mxu0 0
      %928 = vmatpush1.bf16.xpose.msra.mxu0 0
      %929 = vmatprep.subr.bf16.mxu0 0
      %930 = vmatpush1.bf16.xpose.msra.mxu0 0
      %931 = vmatprep.subr.bf16.mxu0 0
      %932 = vmatpush1.bf16.xpose.msra.mxu0 0
      %933 = vmatprep.subr.bf16.mxu0 0
      %934 = vmatpush1.bf16.xpose.msra.mxu0 0
      %935 = vmatprep.subr.bf16.mxu0 0
      %936 = vmatpush1.bf16.xpose.msra.mxu0 0
      %937 = vmatprep.subr.bf16.mxu0 0
      %938 = vmatpush1.bf16.xpose.msra.mxu0 0
      %939 = vmatprep.mubr.bf16.mxu0 0
      %940 = vmatmul.mubr.bf16.gmra.mrb[0].mxu0 %v902
      %v941 = vpop.f32.mrb[0].mxu0
      %v942 = vadd.f32 %v449, %v941
      %v943 = vpop.f32.mrb[0].mxu0
      %v944 = vpop.f32.mrb[0].mxu0
      %v945 = vpop.f32.mrb[0].mxu0
      %946 = vdwg.mxu0
      %v948 = vsel %vm900, %v597, 0
      %v951 = vsel %vm900, %v747, 0
      %953 = vmatprep.subr.bf16.mxu0 0
      %954 = vmatpush1.bf16.xpose.msra.mxu0 %v951
      %955 = vmatprep.subr.bf16.mxu0 0
      %956 = vmatpush1.bf16.xpose.msra.mxu0 0
      %957 = vmatprep.subr.bf16.mxu0 0
      %958 = vmatpush1.bf16.xpose.msra.mxu0 0
      %959 = vmatprep.subr.bf16.mxu0 0
      %960 = vmatpush1.bf16.xpose.msra.mxu0 0
      %961 = vmatprep.subr.bf16.mxu0 0
      %962 = vmatpush1.bf16.xpose.msra.mxu0 0
      %963 = vmatprep.subr.bf16.mxu0 0
      %964 = vmatpush1.bf16.xpose.msra.mxu0 0
      %965 = vmatprep.subr.bf16.mxu0 0
      %966 = vmatpush1.bf16.xpose.msra.mxu0 0
      %967 = vmatprep.subr.bf16.mxu0 0
      %968 = vmatpush1.bf16.xpose.msra.mxu0 0
      %969 = vmatprep.subr.bf16.mxu0 0
      %970 = vmatpush1.bf16.xpose.msra.mxu0 0
      %971 = vmatprep.subr.bf16.mxu0 0
      %972 = vmatpush1.bf16.xpose.msra.mxu0 0
      %973 = vmatprep.subr.bf16.mxu0 0
      %974 = vmatpush1.bf16.xpose.msra.mxu0 0
      %975 = vmatprep.subr.bf16.mxu0 0
      %976 = vmatpush1.bf16.xpose.msra.mxu0 0
      %977 = vmatprep.subr.bf16.mxu0 0
      %978 = vmatpush1.bf16.xpose.msra.mxu0 0
      %979 = vmatprep.subr.bf16.mxu0 0
      %980 = vmatpush1.bf16.xpose.msra.mxu0 0
      %981 = vmatprep.subr.bf16.mxu0 0
      %982 = vmatpush1.bf16.xpose.msra.mxu0 0
      %983 = vmatprep.subr.bf16.mxu0 0
      %984 = vmatpush1.bf16.xpose.msra.mxu0 0
      %985 = vmatprep.mubr.bf16.mxu0 0
      %986 = vmatmul.mubr.bf16.gmra.mrb[0].mxu0 %v948
      %v987 = vpop.f32.mrb[0].mxu0
      %v988 = vadd.f32 %v449, %v987
      %v989 = vpop.f32.mrb[0].mxu0
      %v990 = vpop.f32.mrb[0].mxu0
      %v991 = vpop.f32.mrb[0].mxu0
      %992 = vdwg.mxu0
      %v994 = vsel %vm900, %v598, 0
      %v997 = vsel %vm900, %v748, 0
      %999 = vmatprep.subr.bf16.mxu0 0
      %1000 = vmatpush1.bf16.xpose.msra.mxu0 %v997
      %1001 = vmatprep.subr.bf16.mxu0 0
      %1002 = vmatpush1.bf16.xpose.msra.mxu0 0
      %1003 = vmatprep.subr.bf16.mxu0 0
      %1004 = vmatpush1.bf16.xpose.msra.mxu0 0
      %1005 = vmatprep.subr.bf16.mxu0 0
      %1006 = vmatpush1.bf16.xpose.msra.mxu0 0
      %1007 = vmatprep.subr.bf16.mxu0 0
      %1008 = vmatpush1.bf16.xpose.msra.mxu0 0
      %1009 = vmatprep.subr.bf16.mxu0 0
      %1010 = vmatpush1.bf16.xpose.msra.mxu0 0
      %1011 = vmatprep.subr.bf16.mxu0 0
      %1012 = vmatpush1.bf16.xpose.msra.mxu0 0
      %1013 = vmatprep.subr.bf16.mxu0 0
      %1014 = vmatpush1.bf16.xpose.msra.mxu0 0
      %1015 = vmatprep.subr.bf16.mxu0 0
      %1016 = vmatpush1.bf16.xpose.msra.mxu0 0
      %1017 = vmatprep.subr.bf16.mxu0 0
      %1018 = vmatpush1.bf16.xpose.msra.mxu0 0
      %1019 = vmatprep.subr.bf16.mxu0 0
      %1020 = vmatpush1.bf16.xpose.msra.mxu0 0
      %1021 = vmatprep.subr.bf16.mxu0 0
      %1022 = vmatpush1.bf16.xpose.msra.mxu0 0
      %1023 = vmatprep.subr.bf16.mxu0 0
      %1024 = vmatpush1.bf16.xpose.msra.mxu0 0
      %1025 = vmatprep.subr.bf16.mxu0 0
      %1026 = vmatpush1.bf16.xpose.msra.mxu0 0
      %1027 = vmatprep.subr.bf16.mxu0 0
      %1028 = vmatpush1.bf16.xpose.msra.mxu0 0
      %1029 = vmatprep.subr.bf16.mxu0 0
      %1030 = vmatpush1.bf16.xpose.msra.mxu0 0
      %1031 = vmatprep.mubr.bf16.mxu0 0
      %1032 = vmatmul.mubr.bf16.gmra.mrb[0].mxu0 %v994
      %v1033 = vpop.f32.mrb[0].mxu0
      %v1034 = vadd.f32 %v449, %v1033
      %v1035 = vpop.f32.mrb[0].mxu0
      %v1036 = vpop.f32.mrb[0].mxu0
      %v1037 = vpop.f32.mrb[0].mxu0
      %1038 = vdwg.mxu0
      %v1040 = vsel %vm900, %v599, 0
      %v1043 = vsel %vm900, %v749, 0
      %1045 = vmatprep.subr.bf16.mxu0 0
      %1046 = vmatpush1.bf16.xpose.msra.mxu0 %v1043
      %1047 = vmatprep.subr.bf16.mxu0 0
      %1048 = vmatpush1.bf16.xpose.msra.mxu0 0
      %1049 = vmatprep.subr.bf16.mxu0 0
      %1050 = vmatpush1.bf16.xpose.msra.mxu0 0
      %1051 = vmatprep.subr.bf16.mxu0 0
      %1052 = vmatpush1.bf16.xpose.msra.mxu0 0
      %1053 = vmatprep.subr.bf16.mxu0 0
      %1054 = vmatpush1.bf16.xpose.msra.mxu0 0
      %1055 = vmatprep.subr.bf16.mxu0 0
      %1056 = vmatpush1.bf16.xpose.msra.mxu0 0
      %1057 = vmatprep.subr.bf16.mxu0 0
      %1058 = vmatpush1.bf16.xpose.msra.mxu0 0
      %1059 = vmatprep.subr.bf16.mxu0 0
      %1060 = vmatpush1.bf16.xpose.msra.mxu0 0
      %1061 = vmatprep.subr.bf16.mxu0 0
      %1062 = vmatpush1.bf16.xpose.msra.mxu0 0
      %1063 = vmatprep.subr.bf16.mxu0 0
      %1064 = vmatpush1.bf16.xpose.msra.mxu0 0
      %1065 = vmatprep.subr.bf16.mxu0 0
      %1066 = vmatpush1.bf16.xpose.msra.mxu0 0
      %1067 = vmatprep.subr.bf16.mxu0 0
      %1068 = vmatpush1.bf16.xpose.msra.mxu0 0
      %1069 = vmatprep.subr.bf16.mxu0 0
      %1070 = vmatpush1.bf16.xpose.msra.mxu0 0
      %1071 = vmatprep.subr.bf16.mxu0 0
      %1072 = vmatpush1.bf16.xpose.msra.mxu0 0
      %1073 = vmatprep.subr.bf16.mxu0 0
      %1074 = vmatpush1.bf16.xpose.msra.mxu0 0
      %1075 = vmatprep.subr.bf16.mxu0 0
      %1076 = vmatpush1.bf16.xpose.msra.mxu0 0
      %1077 = vmatprep.mubr.bf16.mxu0 0
      %1078 = vmatmul.mubr.bf16.gmra.mrb[0].mxu0 %v1040
      %v1079 = vpop.f32.mrb[0].mxu0
      %v1080 = vadd.f32 %v449, %v1079
      %v1081 = vpop.f32.mrb[0].mxu0
      %v1082 = vpop.f32.mrb[0].mxu0
      %v1083 = vpop.f32.mrb[0].mxu0
      %1084 = vdwg.mxu0
      %vm1085 = vcmask 64512
      %v1086 = vsel %vm1085, %v942, -inf
      %1087 = vmax.xlane.f32.xlu0 %v1086
      %v1088 = vpop.xlane.xlu0 %1087
      %v1089 = vsel %vm1085, %v988, -inf
      %1090 = vmax.xlane.f32.xlu0 %v1089
      %v1091 = vpop.xlane.xlu0 %1090
      %v1092 = vsel %vm1085, %v1034, -inf
      %1093 = vmax.xlane.f32.xlu0 %v1092
      %v1094 = vpop.xlane.xlu0 %1093
      %v1095 = vsel %vm1085, %v1080, -inf
      %1096 = vmax.xlane.f32.xlu0 %v1095
      %v1097 = vpop.xlane.xlu0 %1096
      %v1098 = vmax.f32 %v1088, -1e+30
      %v1099 = vmax.f32 %v1091, -1e+30
      %v1100 = vmax.f32 %v1094, -1e+30
      %v1101 = vmax.f32 %v1097, -1e+30
      %v1102 = vsub.f32 -1e+30, %v1098
      %v1103 = vsub.f32 -1e+30, %v1099
      %v1104 = vsub.f32 -1e+30, %v1100
      %v1105 = vsub.f32 -1e+30, %v1101
      %v1106 = vmul.f32 %v1102, 1.442695
      %v1107 = vpow.pop %v1106
      %v1108 = vmul.f32 %v1103, 1.442695
      %v1109 = vpow.pop %v1108
      %v1110 = vmul.f32 %v1104, 1.442695
      %v1111 = vpow.pop %v1110
      %v1112 = vmul.f32 %v1105, 1.442695
      %v1113 = vpow.pop %v1112
      %v1114 = vsub.f32 %v942, %v1098
      %v1115 = vsub.f32 %v988, %v1099
      %v1116 = vsub.f32 %v1034, %v1100
      %v1117 = vsub.f32 %v1080, %v1101
      %v1118 = vmul.f32 %v1114, 1.442695
      %v1119 = vpow.pop %v1118
      %v1120 = vmul.f32 %v1115, 1.442695
      %v1121 = vpow.pop %v1120
      %v1122 = vmul.f32 %v1116, 1.442695
      %v1123 = vpow.pop %v1122
      %v1124 = vmul.f32 %v1117, 1.442695
      %v1125 = vpow.pop %v1124
      %v1126 = vmul.f32 %v1107, 0.0
      %v1127 = vmul.f32 %v1109, 0.0
      %v1128 = vmul.f32 %v1111, 0.0
      %v1129 = vmul.f32 %v1113, 0.0
      %v1130 = vsel %vm1085, %v1119, 0.0
      %1131 = vadd.xlane.f32.xlu0 %v1130
      %v1132 = vpop.xlane.xlu0 %1131
      %v1133 = vsel %vm1085, %v1121, 0.0
      %1134 = vadd.xlane.f32.xlu0 %v1133
      %v1135 = vpop.xlane.xlu0 %1134
      %v1136 = vsel %vm1085, %v1123, 0.0
      %1137 = vadd.xlane.f32.xlu0 %v1136
      %v1138 = vpop.xlane.xlu0 %1137
      %v1139 = vsel %vm1085, %v1125, 0.0
      %1140 = vadd.xlane.f32.xlu0 %v1139
      %v1141 = vpop.xlane.xlu0 %1140
      %v1142 = vadd.f32 %v1126, %v1132
      %v1143 = vadd.f32 %v1127, %v1135
      %v1144 = vadd.f32 %v1128, %v1138
      %v1145 = vadd.f32 %v1129, %v1141
      %v1146 = vpack.c.bf16 %v1119, %v1119
      %v1147 = vpack.c.bf16 %v1121, %v1121
      %v1148 = vpack.c.bf16 %v1123, %v1123
      %v1149 = vpack.c.bf16 %v1125, %v1125
      %v1151 = vsel %vm1085, %v1146, 0
      %vm1153 = vcmask 1043456
      %v1155 = vsel %vm1153, %v896, 0
      %1157 = vmatprep.subr.bf16.mxu0 0
      %1158 = vmatpush1.bf16.msra.mxu0 %v1155
      %1159 = vmatprep.subr.bf16.mxu0 0
      %1160 = vmatpush1.bf16.msra.mxu0 0
      %1161 = vmatprep.subr.bf16.mxu0 0
      %1162 = vmatpush1.bf16.msra.mxu0 0
      %1163 = vmatprep.subr.bf16.mxu0 0
      %1164 = vmatpush1.bf16.msra.mxu0 0
      %1165 = vmatprep.subr.bf16.mxu0 0
      %1166 = vmatpush1.bf16.msra.mxu0 0
      %1167 = vmatprep.subr.bf16.mxu0 0
      %1168 = vmatpush1.bf16.msra.mxu0 0
      %1169 = vmatprep.subr.bf16.mxu0 0
      %1170 = vmatpush1.bf16.msra.mxu0 0
      %1171 = vmatprep.subr.bf16.mxu0 0
      %1172 = vmatpush1.bf16.msra.mxu0 0
      %1173 = vmatprep.subr.bf16.mxu0 0
      %1174 = vmatpush1.bf16.msra.mxu0 0
      %1175 = vmatprep.subr.bf16.mxu0 0
      %1176 = vmatpush1.bf16.msra.mxu0 0
      %1177 = vmatprep.subr.bf16.mxu0 0
      %1178 = vmatpush1.bf16.msra.mxu0 0
      %1179 = vmatprep.subr.bf16.mxu0 0
      %1180 = vmatpush1.bf16.msra.mxu0 0
      %1181 = vmatprep.subr.bf16.mxu0 0
      %1182 = vmatpush1.bf16.msra.mxu0 0
      %1183 = vmatprep.subr.bf16.mxu0 0
      %1184 = vmatpush1.bf16.msra.mxu0 0
      %1185 = vmatprep.subr.bf16.mxu0 0
      %1186 = vmatpush1.bf16.msra.mxu0 0
      %1187 = vmatprep.subr.bf16.mxu0 0
      %1188 = vmatpush1.bf16.msra.mxu0 0
      %1189 = vmatprep.mubr.bf16.mxu0 0
      %1190 = vmatmul.mubr.bf16.gmra.mrb[0].mxu0 %v1151
      %v1191 = vpop.f32.mrb[0].mxu0
      %v1192 = vadd.f32 0.0, %v1191
      %v1193 = vpop.f32.mrb[0].mxu0
      %v1194 = vpop.f32.mrb[0].mxu0
      %v1195 = vpop.f32.mrb[0].mxu0
      %1196 = vdwg.mxu0
      %v1198 = vsel %vm1085, %v1147, 0
      %v1201 = vsel %vm1153, %v897, 0
      %1203 = vmatprep.subr.bf16.mxu0 0
      %1204 = vmatpush1.bf16.msra.mxu0 %v1201
      %1205 = vmatprep.subr.bf16.mxu0 0
      %1206 = vmatpush1.bf16.msra.mxu0 0
      %1207 = vmatprep.subr.bf16.mxu0 0
      %1208 = vmatpush1.bf16.msra.mxu0 0
      %1209 = vmatprep.subr.bf16.mxu0 0
      %1210 = vmatpush1.bf16.msra.mxu0 0
      %1211 = vmatprep.subr.bf16.mxu0 0
      %1212 = vmatpush1.bf16.msra.mxu0 0
      %1213 = vmatprep.subr.bf16.mxu0 0
      %1214 = vmatpush1.bf16.msra.mxu0 0
      %1215 = vmatprep.subr.bf16.mxu0 0
      %1216 = vmatpush1.bf16.msra.mxu0 0
      %1217 = vmatprep.subr.bf16.mxu0 0
      %1218 = vmatpush1.bf16.msra.mxu0 0
      %1219 = vmatprep.subr.bf16.mxu0 0
      %1220 = vmatpush1.bf16.msra.mxu0 0
      %1221 = vmatprep.subr.bf16.mxu0 0
      %1222 = vmatpush1.bf16.msra.mxu0 0
      %1223 = vmatprep.subr.bf16.mxu0 0
      %1224 = vmatpush1.bf16.msra.mxu0 0
      %1225 = vmatprep.subr.bf16.mxu0 0
      %1226 = vmatpush1.bf16.msra.mxu0 0
      %1227 = vmatprep.subr.bf16.mxu0 0
      %1228 = vmatpush1.bf16.msra.mxu0 0
      %1229 = vmatprep.subr.bf16.mxu0 0
      %1230 = vmatpush1.bf16.msra.mxu0 0
      %1231 = vmatprep.subr.bf16.mxu0 0
      %1232 = vmatpush1.bf16.msra.mxu0 0
      %1233 = vmatprep.subr.bf16.mxu0 0
      %1234 = vmatpush1.bf16.msra.mxu0 0
      %1235 = vmatprep.mubr.bf16.mxu0 0
      %1236 = vmatmul.mubr.bf16.gmra.mrb[0].mxu0 %v1198
      %v1237 = vpop.f32.mrb[0].mxu0
      %v1238 = vadd.f32 0.0, %v1237
      %v1239 = vpop.f32.mrb[0].mxu0
      %v1240 = vpop.f32.mrb[0].mxu0
      %v1241 = vpop.f32.mrb[0].mxu0
      %1242 = vdwg.mxu0
      %v1244 = vsel %vm1085, %v1148, 0
      %v1247 = vsel %vm1153, %v898, 0
      %1249 = vmatprep.subr.bf16.mxu0 0
      %1250 = vmatpush1.bf16.msra.mxu0 %v1247
      %1251 = vmatprep.subr.bf16.mxu0 0
      %1252 = vmatpush1.bf16.msra.mxu0 0
      %1253 = vmatprep.subr.bf16.mxu0 0
      %1254 = vmatpush1.bf16.msra.mxu0 0
      %1255 = vmatprep.subr.bf16.mxu0 0
      %1256 = vmatpush1.bf16.msra.mxu0 0
      %1257 = vmatprep.subr.bf16.mxu0 0
      %1258 = vmatpush1.bf16.msra.mxu0 0
      %1259 = vmatprep.subr.bf16.mxu0 0
      %1260 = vmatpush1.bf16.msra.mxu0 0
      %1261 = vmatprep.subr.bf16.mxu0 0
      %1262 = vmatpush1.bf16.msra.mxu0 0
      %1263 = vmatprep.subr.bf16.mxu0 0
      %1264 = vmatpush1.bf16.msra.mxu0 0
      %1265 = vmatprep.subr.bf16.mxu0 0
      %1266 = vmatpush1.bf16.msra.mxu0 0
      %1267 = vmatprep.subr.bf16.mxu0 0
      %1268 = vmatpush1.bf16.msra.mxu0 0
      %1269 = vmatprep.subr.bf16.mxu0 0
      %1270 = vmatpush1.bf16.msra.mxu0 0
      %1271 = vmatprep.subr.bf16.mxu0 0
      %1272 = vmatpush1.bf16.msra.mxu0 0
      %1273 = vmatprep.subr.bf16.mxu0 0
      %1274 = vmatpush1.bf16.msra.mxu0 0
      %1275 = vmatprep.subr.bf16.mxu0 0
      %1276 = vmatpush1.bf16.msra.mxu0 0
      %1277 = vmatprep.subr.bf16.mxu0 0
      %1278 = vmatpush1.bf16.msra.mxu0 0
      %1279 = vmatprep.subr.bf16.mxu0 0
      %1280 = vmatpush1.bf16.msra.mxu0 0
      %1281 = vmatprep.mubr.bf16.mxu0 0
      %1282 = vmatmul.mubr.bf16.gmra.mrb[0].mxu0 %v1244
      %v1283 = vpop.f32.mrb[0].mxu0
      %v1284 = vadd.f32 0.0, %v1283
      %v1285 = vpop.f32.mrb[0].mxu0
      %v1286 = vpop.f32.mrb[0].mxu0
      %v1287 = vpop.f32.mrb[0].mxu0
      %1288 = vdwg.mxu0
      %v1290 = vsel %vm1085, %v1149, 0
      %v1293 = vsel %vm1153, %v899, 0
      %1295 = vmatprep.subr.bf16.mxu0 0
      %1296 = vmatpush1.bf16.msra.mxu0 %v1293
      %1297 = vmatprep.subr.bf16.mxu0 0
      %1298 = vmatpush1.bf16.msra.mxu0 0
      %1299 = vmatprep.subr.bf16.mxu0 0
      %1300 = vmatpush1.bf16.msra.mxu0 0
      %1301 = vmatprep.subr.bf16.mxu0 0
      %1302 = vmatpush1.bf16.msra.mxu0 0
      %1303 = vmatprep.subr.bf16.mxu0 0
      %1304 = vmatpush1.bf16.msra.mxu0 0
      %1305 = vmatprep.subr.bf16.mxu0 0
      %1306 = vmatpush1.bf16.msra.mxu0 0
      %1307 = vmatprep.subr.bf16.mxu0 0
      %1308 = vmatpush1.bf16.msra.mxu0 0
      %1309 = vmatprep.subr.bf16.mxu0 0
      %1310 = vmatpush1.bf16.msra.mxu0 0
      %1311 = vmatprep.subr.bf16.mxu0 0
      %1312 = vmatpush1.bf16.msra.mxu0 0
      %1313 = vmatprep.subr.bf16.mxu0 0
      %1314 = vmatpush1.bf16.msra.mxu0 0
      %1315 = vmatprep.subr.bf16.mxu0 0
      %1316 = vmatpush1.bf16.msra.mxu0 0
      %1317 = vmatprep.subr.bf16.mxu0 0
      %1318 = vmatpush1.bf16.msra.mxu0 0
      %1319 = vmatprep.subr.bf16.mxu0 0
      %1320 = vmatpush1.bf16.msra.mxu0 0
      %1321 = vmatprep.subr.bf16.mxu0 0
      %1322 = vmatpush1.bf16.msra.mxu0 0
      %1323 = vmatprep.subr.bf16.mxu0 0
      %1324 = vmatpush1.bf16.msra.mxu0 0
      %1325 = vmatprep.subr.bf16.mxu0 0
      %1326 = vmatpush1.bf16.msra.mxu0 0
      %1327 = vmatprep.mubr.bf16.mxu0 0
      %1328 = vmatmul.mubr.bf16.gmra.mrb[0].mxu0 %v1290
      %v1329 = vpop.f32.mrb[0].mxu0
      %v1330 = vadd.f32 0.0, %v1329
      %v1331 = vpop.f32.mrb[0].mxu0
      %v1332 = vpop.f32.mrb[0].mxu0
      %v1333 = vpop.f32.mrb[0].mxu0
      %1334 = vdwg.mxu0
      %v1335 = vadd.f32 %v1126, %v1192
      %v1336 = vadd.f32 %v1127, %v1238
      %v1337 = vadd.f32 %v1128, %v1284
      %v1338 = vadd.f32 %v1129, %v1330
      %v1339 = vrcp.pop %v1142
      %v1340 = vrcp.pop %v1143
      %v1341 = vrcp.pop %v1144
      %v1342 = vrcp.pop %v1145
      %v1343 = vmul.f32 %v1335, %v1339
      %v1344 = vmul.f32 %v1336, %v1340
      %v1345 = vmul.f32 %v1337, %v1341
      %v1346 = vmul.f32 %v1338, %v1342
      %v1347 = vcombine.low %v1343, %v1345
      %v1348 = vcombine.high %v1343, %v1345
      %v1350 = vunpack.c.l.s4 1983009808
      %v1351 = vunpack.c.0.s8 %v1350
      %v1352 = vlaneseq
      %v1353 = vshrl.u32 %v1352, 7
      %v1354 = vsub.s32 %v1351, %v1353
      %v1355 = vrot.slane %v1347, %v1354
      %v1357 = vunpack.c.l.s4 1983009808
      %v1358 = vunpack.c.0.s8 %v1357
      %v1359 = vlaneseq
      %v1360 = vshrl.u32 %v1359, 7
      %v1361 = vsub.s32 %v1358, %v1360
      %v1362 = vrot.slane %v1348, %v1361
      %v1363 = vcombine.low %v1344, %v1346
      %v1364 = vcombine.high %v1344, %v1346
      %v1366 = vunpack.c.l.s4 1983009808
      %v1367 = vunpack.c.0.s8 %v1366
      %v1368 = vlaneseq
      %v1369 = vshrl.u32 %v1368, 7
      %v1370 = vsub.s32 %v1367, %v1369
      %v1371 = vrot.slane %v1363, %v1370
      %v1373 = vunpack.c.l.s4 1983009808
      %v1374 = vunpack.c.0.s8 %v1373
      %v1375 = vlaneseq
      %v1376 = vshrl.u32 %v1375, 7
      %v1377 = vsub.s32 %v1374, %v1376
      %v1378 = vrot.slane %v1364, %v1377
      %v1379 = vcombine.low %v1355, %v1371
      %v1380 = vcombine.high %v1355, %v1371
      %v1382 = vunpack.c.l.s4 1934713408
      %v1383 = vunpack.c.0.s8 %v1382
      %v1384 = vlaneseq
      %v1385 = vshrl.u32 %v1384, 7
      %v1386 = vsub.s32 %v1383, %v1385
      %v1387 = vrot.slane %v1379, %v1386
      %v1389 = vunpack.c.l.s4 1934713408
      %v1390 = vunpack.c.0.s8 %v1389
      %v1391 = vlaneseq
      %v1392 = vshrl.u32 %v1391, 7
      %v1393 = vsub.s32 %v1390, %v1392
      %v1394 = vrot.slane %v1380, %v1393
      %v1395 = vcombine.low %v1362, %v1378
      %v1396 = vcombine.high %v1362, %v1378
      %v1398 = vunpack.c.l.s4 1934713408
      %v1399 = vunpack.c.0.s8 %v1398
      %v1400 = vlaneseq
      %v1401 = vshrl.u32 %v1400, 7
      %v1402 = vsub.s32 %v1399, %v1401
      %v1403 = vrot.slane %v1395, %v1402
      %v1405 = vunpack.c.l.s4 1934713408
      %v1406 = vunpack.c.0.s8 %v1405
      %v1407 = vlaneseq
      %v1408 = vshrl.u32 %v1407, 7
      %v1409 = vsub.s32 %v1406, %v1408
      %v1410 = vrot.slane %v1396, %v1409
      %v1411 = vcombine.high %v1387, 0.0
      %v1412 = vcombine.high %v1394, 0.0
      %v1413 = vcombine.high %v1403, 0.0
      %v1414 = vcombine.high %v1410, 0.0
      %v1415 = vcombine.low %v1387, %v1394
      %v1417 = vunpack.c.l.s4 1983009808
      %v1418 = vunpack.c.0.s8 %v1417
      %v1419 = vlaneseq
      %v1420 = vshrl.u32 %v1419, 7
      %v1421 = vsub.s32 %v1418, %v1420
      %v1422 = vrot.slane %v1415, %v1421
      %v1423 = vcombine.low %v1411, %v1412
      %v1425 = vunpack.c.l.s4 1983009808
      %v1426 = vunpack.c.0.s8 %v1425
      %v1427 = vlaneseq
      %v1428 = vshrl.u32 %v1427, 7
      %v1429 = vsub.s32 %v1426, %v1428
      %v1430 = vrot.slane %v1423, %v1429
      %v1431 = vcombine.low %v1403, %v1410
      %v1433 = vunpack.c.l.s4 1983009808
      %v1434 = vunpack.c.0.s8 %v1433
      %v1435 = vlaneseq
      %v1436 = vshrl.u32 %v1435, 7
      %v1437 = vsub.s32 %v1434, %v1436
      %v1438 = vrot.slane %v1431, %v1437
      %v1439 = vcombine.low %v1413, %v1414
      %v1441 = vunpack.c.l.s4 1983009808
      %v1442 = vunpack.c.0.s8 %v1441
      %v1443 = vlaneseq
      %v1444 = vshrl.u32 %v1443, 7
      %v1445 = vsub.s32 %v1442, %v1444
      %v1446 = vrot.slane %v1439, %v1445
      %v1447 = vcombine.low %v1422, %v1430
      %v1448 = vcombine.high %v1422, %v1430
      %v1450 = vunpack.c.l.s4 1934713408
      %v1451 = vunpack.c.0.s8 %v1450
      %v1452 = vlaneseq
      %v1453 = vshrl.u32 %v1452, 7
      %v1454 = vsub.s32 %v1451, %v1453
      %v1455 = vrot.slane %v1447, %v1454
      %v1457 = vunpack.c.l.s4 1934713408
      %v1458 = vunpack.c.0.s8 %v1457
      %v1459 = vlaneseq
      %v1460 = vshrl.u32 %v1459, 7
      %v1461 = vsub.s32 %v1458, %v1460
      %v1462 = vrot.slane %v1448, %v1461
      %v1463 = vcombine.low %v1438, %v1446
      %v1464 = vcombine.high %v1438, %v1446
      %v1466 = vunpack.c.l.s4 1934713408
      %v1467 = vunpack.c.0.s8 %v1466
      %v1468 = vlaneseq
      %v1469 = vshrl.u32 %v1468, 7
      %v1470 = vsub.s32 %v1467, %v1469
      %v1471 = vrot.slane %v1463, %v1470
      %v1473 = vunpack.c.l.s4 1934713408
      %v1474 = vunpack.c.0.s8 %v1473
      %v1475 = vlaneseq
      %v1476 = vshrl.u32 %v1475, 7
      %v1477 = vsub.s32 %v1474, %v1476
      %v1478 = vrot.slane %v1464, %v1477
      %v1479 = vcombine.low %v1455, %v1471
      %v1480 = vcombine.high %v1455, %v1471
      %v1481 = vcombine.low %v1462, %v1478
      %v1482 = vcombine.high %v1462, %v1478
      %1484 = vrot.lane.b32.xlu0 %v1480, 32
      %v1485 = vpop.permute.xlu0 %1484
      %1488 = vrot.lane.b32.xlu0 %v1481, 64
      %v1489 = vpop.permute.xlu0 %1488
      %1492 = vrot.lane.b32.xlu0 %v1482, 96
      %v1493 = vpop.permute.xlu0 %1492
      %v1495 = vsel %vm900, %v1479, %v1485
      %vm1496 = vcmask 523264
      %v1497 = vsel %vm1496, %v1495, %v1489
      %vm1498 = vcmask 785408
      %v1499 = vsel %vm1498, %v1497, %v1493
      %1500 = vst [vmem:[#allocation3] sm:$0xff] %v1499
      %1502 = vrot.lane.b32.xlu0 %v404, 96
      %v1503 = vpop.permute.xlu0 %1502
      %1505 = vrot.lane.b32.xlu0 %v404, 64
      %v1506 = vpop.permute.xlu0 %1505
      %1508 = vrot.lane.b32.xlu0 %v404, 32
      %v1509 = vpop.permute.xlu0 %1508
      %v1511 = vcombine.low %v404, %v1506
      %v1512 = vcombine.high %v404, %v1506
      %v1514 = vunpack.c.l.s4 1983009808
      %v1515 = vunpack.c.0.s8 %v1514
      %v1516 = vlaneseq
      %v1517 = vshrl.u32 %v1516, 7
      %v1518 = vsub.s32 %v1515, %v1517
      %v1519 = vrot.slane %v1511, %v1518
      %v1521 = vunpack.c.l.s4 1983009808
      %v1522 = vunpack.c.0.s8 %v1521
      %v1523 = vlaneseq
      %v1524 = vshrl.u32 %v1523, 7
      %v1525 = vsub.s32 %v1522, %v1524
      %v1526 = vrot.slane %v1512, %v1525
      %v1527 = vcombine.low %v1503, %v1509
      %v1528 = vcombine.high %v1503, %v1509
      %v1530 = vunpack.c.l.s4 1983009808
      %v1531 = vunpack.c.0.s8 %v1530
      %v1532 = vlaneseq
      %v1533 = vshrl.u32 %v1532, 7
      %v1534 = vsub.s32 %v1531, %v1533
      %v1535 = vrot.slane %v1527, %v1534
      %v1537 = vunpack.c.l.s4 1983009808
      %v1538 = vunpack.c.0.s8 %v1537
      %v1539 = vlaneseq
      %v1540 = vshrl.u32 %v1539, 7
      %v1541 = vsub.s32 %v1538, %v1540
      %v1542 = vrot.slane %v1528, %v1541
      %v1543 = vcombine.low %v1519, %v1535
      %v1544 = vcombine.high %v1519, %v1535
      %v1546 = vunpack.c.l.s4 1934713408
      %v1547 = vunpack.c.0.s8 %v1546
      %v1548 = vlaneseq
      %v1549 = vshrl.u32 %v1548, 7
      %v1550 = vsub.s32 %v1547, %v1549
      %v1551 = vrot.slane %v1543, %v1550
      %v1553 = vunpack.c.l.s4 1934713408
      %v1554 = vunpack.c.0.s8 %v1553
      %v1555 = vlaneseq
      %v1556 = vshrl.u32 %v1555, 7
      %v1557 = vsub.s32 %v1554, %v1556
      %v1558 = vrot.slane %v1544, %v1557
      %v1559 = vcombine.low %v1526, %v1542
      %v1560 = vcombine.high %v1526, %v1542
      %v1562 = vunpack.c.l.s4 1934713408
      %v1563 = vunpack.c.0.s8 %v1562
      %v1564 = vlaneseq
      %v1565 = vshrl.u32 %v1564, 7
      %v1566 = vsub.s32 %v1563, %v1565
      %v1567 = vrot.slane %v1559, %v1566
      %v1569 = vunpack.c.l.s4 1934713408
      %v1570 = vunpack.c.0.s8 %v1569
      %v1571 = vlaneseq
      %v1572 = vshrl.u32 %v1571, 7
      %v1573 = vsub.s32 %v1570, %v1572
      %v1574 = vrot.slane %v1560, %v1573
      %v1575 = vcombine.high %v1551, 0.0
      %v1576 = vcombine.high %v1558, 0.0
      %v1577 = vcombine.high %v1567, 0.0
      %v1578 = vcombine.high %v1574, 0.0
      %v1579 = vcombine.low %v1551, %v1558
      %v1581 = vunpack.c.l.s4 1983009808
      %v1582 = vunpack.c.0.s8 %v1581
      %v1583 = vlaneseq
      %v1584 = vshrl.u32 %v1583, 7
      %v1585 = vsub.s32 %v1582, %v1584
      %v1586 = vrot.slane %v1579, %v1585
      %v1587 = vcombine.low %v1575, %v1576
      %v1589 = vunpack.c.l.s4 1983009808
      %v1590 = vunpack.c.0.s8 %v1589
      %v1591 = vlaneseq
      %v1592 = vshrl.u32 %v1591, 7
      %v1593 = vsub.s32 %v1590, %v1592
      %v1594 = vrot.slane %v1587, %v1593
      %v1595 = vcombine.low %v1567, %v1574
      %v1597 = vunpack.c.l.s4 1983009808
      %v1598 = vunpack.c.0.s8 %v1597
      %v1599 = vlaneseq
      %v1600 = vshrl.u32 %v1599, 7
      %v1601 = vsub.s32 %v1598, %v1600
      %v1602 = vrot.slane %v1595, %v1601
      %v1603 = vcombine.low %v1577, %v1578
      %v1605 = vunpack.c.l.s4 1983009808
      %v1606 = vunpack.c.0.s8 %v1605
      %v1607 = vlaneseq
      %v1608 = vshrl.u32 %v1607, 7
      %v1609 = vsub.s32 %v1606, %v1608
      %v1610 = vrot.slane %v1603, %v1609
      %v1611 = vcombine.low %v1586, %v1594
      %v1612 = vcombine.high %v1586, %v1594
      %v1614 = vunpack.c.l.s4 1934713408
      %v1615 = vunpack.c.0.s8 %v1614
      %v1616 = vlaneseq
      %v1617 = vshrl.u32 %v1616, 7
      %v1618 = vsub.s32 %v1615, %v1617
      %v1619 = vrot.slane %v1611, %v1618
      %v1621 = vunpack.c.l.s4 1934713408
      %v1622 = vunpack.c.0.s8 %v1621
      %v1623 = vlaneseq
      %v1624 = vshrl.u32 %v1623, 7
      %v1625 = vsub.s32 %v1622, %v1624
      %v1626 = vrot.slane %v1612, %v1625
      %v1627 = vcombine.low %v1602, %v1610
      %v1628 = vcombine.high %v1602, %v1610
      %v1630 = vunpack.c.l.s4 1934713408
      %v1631 = vunpack.c.0.s8 %v1630
      %v1632 = vlaneseq
      %v1633 = vshrl.u32 %v1632, 7
      %v1634 = vsub.s32 %v1631, %v1633
      %v1635 = vrot.slane %v1627, %v1634
      %v1637 = vunpack.c.l.s4 1934713408
      %v1638 = vunpack.c.0.s8 %v1637
      %v1639 = vlaneseq
      %v1640 = vshrl.u32 %v1639, 7
      %v1641 = vsub.s32 %v1638, %v1640
      %v1642 = vrot.slane %v1628, %v1641
      %v1643 = vcombine.low %v1619, %v1635
      %v1644 = vcombine.high %v1619, %v1635
      %v1645 = vcombine.low %v1626, %v1642
      %v1646 = vcombine.high %v1626, %v1642
      %v1647 = vpack.c.bf16 %v1643, %v1643
      %v1648 = vpack.c.bf16 %v1644, %v1644
      %v1649 = vpack.c.bf16 %v1645, %v1645
      %v1650 = vpack.c.bf16 %v1646, %v1646
      %1652 = vrot.lane.b32.xlu0 %v406, 96
      %v1653 = vpop.permute.xlu0 %1652
      %1655 = vrot.lane.b32.xlu0 %v406, 64
      %v1656 = vpop.permute.xlu0 %1655
      %1658 = vrot.lane.b32.xlu0 %v406, 32
      %v1659 = vpop.permute.xlu0 %1658
      %v1661 = vcombine.low %v406, %v1656
      %v1662 = vcombine.high %v406, %v1656
      %v1664 = vunpack.c.l.s4 1983009808
      %v1665 = vunpack.c.0.s8 %v1664
      %v1666 = vlaneseq
      %v1667 = vshrl.u32 %v1666, 7
      %v1668 = vsub.s32 %v1665, %v1667
      %v1669 = vrot.slane %v1661, %v1668
      %v1671 = vunpack.c.l.s4 1983009808
      %v1672 = vunpack.c.0.s8 %v1671
      %v1673 = vlaneseq
      %v1674 = vshrl.u32 %v1673, 7
      %v1675 = vsub.s32 %v1672, %v1674
      %v1676 = vrot.slane %v1662, %v1675
      %v1677 = vcombine.low %v1653, %v1659
      %v1678 = vcombine.high %v1653, %v1659
      %v1680 = vunpack.c.l.s4 1983009808
      %v1681 = vunpack.c.0.s8 %v1680
      %v1682 = vlaneseq
      %v1683 = vshrl.u32 %v1682, 7
      %v1684 = vsub.s32 %v1681, %v1683
      %v1685 = vrot.slane %v1677, %v1684
      %v1687 = vunpack.c.l.s4 1983009808
      %v1688 = vunpack.c.0.s8 %v1687
      %v1689 = vlaneseq
      %v1690 = vshrl.u32 %v1689, 7
      %v1691 = vsub.s32 %v1688, %v1690
      %v1692 = vrot.slane %v1678, %v1691
      %v1693 = vcombine.low %v1669, %v1685
      %v1694 = vcombine.high %v1669, %v1685
      %v1696 = vunpack.c.l.s4 1934713408
      %v1697 = vunpack.c.0.s8 %v1696
      %v1698 = vlaneseq
      %v1699 = vshrl.u32 %v1698, 7
      %v1700 = vsub.s32 %v1697, %v1699
      %v1701 = vrot.slane %v1693, %v1700
      %v1703 = vunpack.c.l.s4 1934713408
      %v1704 = vunpack.c.0.s8 %v1703
      %v1705 = vlaneseq
      %v1706 = vshrl.u32 %v1705, 7
      %v1707 = vsub.s32 %v1704, %v1706
      %v1708 = vrot.slane %v1694, %v1707
      %v1709 = vcombine.low %v1676, %v1692
      %v1710 = vcombine.high %v1676, %v1692
      %v1712 = vunpack.c.l.s4 1934713408
      %v1713 = vunpack.c.0.s8 %v1712
      %v1714 = vlaneseq
      %v1715 = vshrl.u32 %v1714, 7
      %v1716 = vsub.s32 %v1713, %v1715
      %v1717 = vrot.slane %v1709, %v1716
      %v1719 = vunpack.c.l.s4 1934713408
      %v1720 = vunpack.c.0.s8 %v1719
      %v1721 = vlaneseq
      %v1722 = vshrl.u32 %v1721, 7
      %v1723 = vsub.s32 %v1720, %v1722
      %v1724 = vrot.slane %v1710, %v1723
      %v1725 = vcombine.high %v1701, 0.0
      %v1726 = vcombine.high %v1708, 0.0
      %v1727 = vcombine.high %v1717, 0.0
      %v1728 = vcombine.high %v1724, 0.0
      %v1729 = vcombine.low %v1701, %v1708
      %v1731 = vunpack.c.l.s4 1983009808
      %v1732 = vunpack.c.0.s8 %v1731
      %v1733 = vlaneseq
      %v1734 = vshrl.u32 %v1733, 7
      %v1735 = vsub.s32 %v1732, %v1734
      %v1736 = vrot.slane %v1729, %v1735
      %v1737 = vcombine.low %v1725, %v1726
      %v1739 = vunpack.c.l.s4 1983009808
      %v1740 = vunpack.c.0.s8 %v1739
      %v1741 = vlaneseq
      %v1742 = vshrl.u32 %v1741, 7
      %v1743 = vsub.s32 %v1740, %v1742
      %v1744 = vrot.slane %v1737, %v1743
      %v1745 = vcombine.low %v1717, %v1724
      %v1747 = vunpack.c.l.s4 1983009808
      %v1748 = vunpack.c.0.s8 %v1747
      %v1749 = vlaneseq
      %v1750 = vshrl.u32 %v1749, 7
      %v1751 = vsub.s32 %v1748, %v1750
      %v1752 = vrot.slane %v1745, %v1751
      %v1753 = vcombine.low %v1727, %v1728
      %v1755 = vunpack.c.l.s4 1983009808
      %v1756 = vunpack.c.0.s8 %v1755
      %v1757 = vlaneseq
      %v1758 = vshrl.u32 %v1757, 7
      %v1759 = vsub.s32 %v1756, %v1758
      %v1760 = vrot.slane %v1753, %v1759
      %v1761 = vcombine.low %v1736, %v1744
      %v1762 = vcombine.high %v1736, %v1744
      %v1764 = vunpack.c.l.s4 1934713408
      %v1765 = vunpack.c.0.s8 %v1764
      %v1766 = vlaneseq
      %v1767 = vshrl.u32 %v1766, 7
      %v1768 = vsub.s32 %v1765, %v1767
      %v1769 = vrot.slane %v1761, %v1768
      %v1771 = vunpack.c.l.s4 1934713408
      %v1772 = vunpack.c.0.s8 %v1771
      %v1773 = vlaneseq
      %v1774 = vshrl.u32 %v1773, 7
      %v1775 = vsub.s32 %v1772, %v1774
      %v1776 = vrot.slane %v1762, %v1775
      %v1777 = vcombine.low %v1752, %v1760
      %v1778 = vcombine.high %v1752, %v1760
      %v1780 = vunpack.c.l.s4 1934713408
      %v1781 = vunpack.c.0.s8 %v1780
      %v1782 = vlaneseq
      %v1783 = vshrl.u32 %v1782, 7
      %v1784 = vsub.s32 %v1781, %v1783
      %v1785 = vrot.slane %v1777, %v1784
      %v1787 = vunpack.c.l.s4 1934713408
      %v1788 = vunpack.c.0.s8 %v1787
      %v1789 = vlaneseq
      %v1790 = vshrl.u32 %v1789, 7
      %v1791 = vsub.s32 %v1788, %v1790
      %v1792 = vrot.slane %v1778, %v1791
      %v1793 = vcombine.low %v1769, %v1785
      %v1794 = vcombine.high %v1769, %v1785
      %v1795 = vcombine.low %v1776, %v1792
      %v1796 = vcombine.high %v1776, %v1792
      %v1797 = vpack.c.bf16 %v1793, %v1793
      %v1798 = vpack.c.bf16 %v1794, %v1794
      %v1799 = vpack.c.bf16 %v1795, %v1795
      %v1800 = vpack.c.bf16 %v1796, %v1796
      %1802 = vrot.lane.b32.xlu0 %v446, 96
      %v1803 = vpop.permute.xlu0 %1802
      %1805 = vrot.lane.b32.xlu0 %v446, 64
      %v1806 = vpop.permute.xlu0 %1805
      %1808 = vrot.lane.b32.xlu0 %v446, 32
      %v1809 = vpop.permute.xlu0 %1808
      %v1811 = vcombine.low %v446, %v1806
      %v1812 = vcombine.high %v446, %v1806
      %v1814 = vunpack.c.l.s4 1983009808
      %v1815 = vunpack.c.0.s8 %v1814
      %v1816 = vlaneseq
      %v1817 = vshrl.u32 %v1816, 7
      %v1818 = vsub.s32 %v1815, %v1817
      %v1819 = vrot.slane %v1811, %v1818
      %v1821 = vunpack.c.l.s4 1983009808
      %v1822 = vunpack.c.0.s8 %v1821
      %v1823 = vlaneseq
      %v1824 = vshrl.u32 %v1823, 7
      %v1825 = vsub.s32 %v1822, %v1824
      %v1826 = vrot.slane %v1812, %v1825
      %v1827 = vcombine.low %v1803, %v1809
      %v1828 = vcombine.high %v1803, %v1809
      %v1830 = vunpack.c.l.s4 1983009808
      %v1831 = vunpack.c.0.s8 %v1830
      %v1832 = vlaneseq
      %v1833 = vshrl.u32 %v1832, 7
      %v1834 = vsub.s32 %v1831, %v1833
      %v1835 = vrot.slane %v1827, %v1834
      %v1837 = vunpack.c.l.s4 1983009808
      %v1838 = vunpack.c.0.s8 %v1837
      %v1839 = vlaneseq
      %v1840 = vshrl.u32 %v1839, 7
      %v1841 = vsub.s32 %v1838, %v1840
      %v1842 = vrot.slane %v1828, %v1841
      %v1843 = vcombine.low %v1819, %v1835
      %v1844 = vcombine.high %v1819, %v1835
      %v1846 = vunpack.c.l.s4 1934713408
      %v1847 = vunpack.c.0.s8 %v1846
      %v1848 = vlaneseq
      %v1849 = vshrl.u32 %v1848, 7
      %v1850 = vsub.s32 %v1847, %v1849
      %v1851 = vrot.slane %v1843, %v1850
      %v1853 = vunpack.c.l.s4 1934713408
      %v1854 = vunpack.c.0.s8 %v1853
      %v1855 = vlaneseq
      %v1856 = vshrl.u32 %v1855, 7
      %v1857 = vsub.s32 %v1854, %v1856
      %v1858 = vrot.slane %v1844, %v1857
      %v1859 = vcombine.low %v1826, %v1842
      %v1860 = vcombine.high %v1826, %v1842
      %v1862 = vunpack.c.l.s4 1934713408
      %v1863 = vunpack.c.0.s8 %v1862
      %v1864 = vlaneseq
      %v1865 = vshrl.u32 %v1864, 7
      %v1866 = vsub.s32 %v1863, %v1865
      %v1867 = vrot.slane %v1859, %v1866
      %v1869 = vunpack.c.l.s4 1934713408
      %v1870 = vunpack.c.0.s8 %v1869
      %v1871 = vlaneseq
      %v1872 = vshrl.u32 %v1871, 7
      %v1873 = vsub.s32 %v1870, %v1872
      %v1874 = vrot.slane %v1860, %v1873
      %v1875 = vcombine.high %v1851, 0.0
      %v1876 = vcombine.high %v1858, 0.0
      %v1877 = vcombine.high %v1867, 0.0
      %v1878 = vcombine.high %v1874, 0.0
      %v1879 = vcombine.low %v1851, %v1858
      %v1881 = vunpack.c.l.s4 1983009808
      %v1882 = vunpack.c.0.s8 %v1881
      %v1883 = vlaneseq
      %v1884 = vshrl.u32 %v1883, 7
      %v1885 = vsub.s32 %v1882, %v1884
      %v1886 = vrot.slane %v1879, %v1885
      %v1887 = vcombine.low %v1875, %v1876
      %v1889 = vunpack.c.l.s4 1983009808
      %v1890 = vunpack.c.0.s8 %v1889
      %v1891 = vlaneseq
      %v1892 = vshrl.u32 %v1891, 7
      %v1893 = vsub.s32 %v1890, %v1892
      %v1894 = vrot.slane %v1887, %v1893
      %v1895 = vcombine.low %v1867, %v1874
      %v1897 = vunpack.c.l.s4 1983009808
      %v1898 = vunpack.c.0.s8 %v1897
      %v1899 = vlaneseq
      %v1900 = vshrl.u32 %v1899, 7
      %v1901 = vsub.s32 %v1898, %v1900
      %v1902 = vrot.slane %v1895, %v1901
      %v1903 = vcombine.low %v1877, %v1878
      %v1905 = vunpack.c.l.s4 1983009808
      %v1906 = vunpack.c.0.s8 %v1905
      %v1907 = vlaneseq
      %v1908 = vshrl.u32 %v1907, 7
      %v1909 = vsub.s32 %v1906, %v1908
      %v1910 = vrot.slane %v1903, %v1909
      %v1911 = vcombine.low %v1886, %v1894
      %v1912 = vcombine.high %v1886, %v1894
      %v1914 = vunpack.c.l.s4 1934713408
      %v1915 = vunpack.c.0.s8 %v1914
      %v1916 = vlaneseq
      %v1917 = vshrl.u32 %v1916, 7
      %v1918 = vsub.s32 %v1915, %v1917
      %v1919 = vrot.slane %v1911, %v1918
      %v1921 = vunpack.c.l.s4 1934713408
      %v1922 = vunpack.c.0.s8 %v1921
      %v1923 = vlaneseq
      %v1924 = vshrl.u32 %v1923, 7
      %v1925 = vsub.s32 %v1922, %v1924
      %v1926 = vrot.slane %v1912, %v1925
      %v1927 = vcombine.low %v1902, %v1910
      %v1928 = vcombine.high %v1902, %v1910
      %v1930 = vunpack.c.l.s4 1934713408
      %v1931 = vunpack.c.0.s8 %v1930
      %v1932 = vlaneseq
      %v1933 = vshrl.u32 %v1932, 7
      %v1934 = vsub.s32 %v1931, %v1933
      %v1935 = vrot.slane %v1927, %v1934
      %v1937 = vunpack.c.l.s4 1934713408
      %v1938 = vunpack.c.0.s8 %v1937
      %v1939 = vlaneseq
      %v1940 = vshrl.u32 %v1939, 7
      %v1941 = vsub.s32 %v1938, %v1940
      %v1942 = vrot.slane %v1928, %v1941
      %v1943 = vcombine.low %v1919, %v1935
      %v1944 = vcombine.high %v1919, %v1935
      %v1945 = vcombine.low %v1926, %v1942
      %v1946 = vcombine.high %v1926, %v1942
      %v1947 = vpack.c.bf16 %v1943, %v1943
      %v1948 = vpack.c.bf16 %v1944, %v1944
      %v1949 = vpack.c.bf16 %v1945, %v1945
      %v1950 = vpack.c.bf16 %v1946, %v1946
      %v1952 = vsel %vm900, %v1647, 0
      %v1955 = vsel %vm900, %v1797, 0
      %1957 = vmatprep.subr.bf16.mxu0 0
      %1958 = vmatpush1.bf16.xpose.msra.mxu0 %v1955
      %1959 = vmatprep.subr.bf16.mxu0 0
      %1960 = vmatpush1.bf16.xpose.msra.mxu0 0
      %1961 = vmatprep.subr.bf16.mxu0 0
      %1962 = vmatpush1.bf16.xpose.msra.mxu0 0
      %1963 = vmatprep.subr.bf16.mxu0 0
      %1964 = vmatpush1.bf16.xpose.msra.mxu0 0
      %1965 = vmatprep.subr.bf16.mxu0 0
      %1966 = vmatpush1.bf16.xpose.msra.mxu0 0
      %1967 = vmatprep.subr.bf16.mxu0 0
      %1968 = vmatpush1.bf16.xpose.msra.mxu0 0
      %1969 = vmatprep.subr.bf16.mxu0 0
      %1970 = vmatpush1.bf16.xpose.msra.mxu0 0
      %1971 = vmatprep.subr.bf16.mxu0 0
      %1972 = vmatpush1.bf16.xpose.msra.mxu0 0
      %1973 = vmatprep.subr.bf16.mxu0 0
      %1974 = vmatpush1.bf16.xpose.msra.mxu0 0
      %1975 = vmatprep.subr.bf16.mxu0 0
      %1976 = vmatpush1.bf16.xpose.msra.mxu0 0
      %1977 = vmatprep.subr.bf16.mxu0 0
      %1978 = vmatpush1.bf16.xpose.msra.mxu0 0
      %1979 = vmatprep.subr.bf16.mxu0 0
      %1980 = vmatpush1.bf16.xpose.msra.mxu0 0
      %1981 = vmatprep.subr.bf16.mxu0 0
      %1982 = vmatpush1.bf16.xpose.msra.mxu0 0
      %1983 = vmatprep.subr.bf16.mxu0 0
      %1984 = vmatpush1.bf16.xpose.msra.mxu0 0
      %1985 = vmatprep.subr.bf16.mxu0 0
      %1986 = vmatpush1.bf16.xpose.msra.mxu0 0
      %1987 = vmatprep.subr.bf16.mxu0 0
      %1988 = vmatpush1.bf16.xpose.msra.mxu0 0
      %1989 = vmatprep.mubr.bf16.mxu0 0
      %1990 = vmatmul.mubr.bf16.gmra.mrb[0].mxu0 %v1952
      %v1991 = vpop.f32.mrb[0].mxu0
      %v1992 = vadd.f32 %v449, %v1991
      %v1993 = vpop.f32.mrb[0].mxu0
      %v1994 = vpop.f32.mrb[0].mxu0
      %v1995 = vpop.f32.mrb[0].mxu0
      %1996 = vdwg.mxu0
      %v1998 = vsel %vm900, %v1648, 0
      %v2001 = vsel %vm900, %v1798, 0
      %2003 = vmatprep.subr.bf16.mxu0 0
      %2004 = vmatpush1.bf16.xpose.msra.mxu0 %v2001
      %2005 = vmatprep.subr.bf16.mxu0 0
      %2006 = vmatpush1.bf16.xpose.msra.mxu0 0
      %2007 = vmatprep.subr.bf16.mxu0 0
      %2008 = vmatpush1.bf16.xpose.msra.mxu0 0
      %2009 = vmatprep.subr.bf16.mxu0 0
      %2010 = vmatpush1.bf16.xpose.msra.mxu0 0
      %2011 = vmatprep.subr.bf16.mxu0 0
      %2012 = vmatpush1.bf16.xpose.msra.mxu0 0
      %2013 = vmatprep.subr.bf16.mxu0 0
      %2014 = vmatpush1.bf16.xpose.msra.mxu0 0
      %2015 = vmatprep.subr.bf16.mxu0 0
      %2016 = vmatpush1.bf16.xpose.msra.mxu0 0
      %2017 = vmatprep.subr.bf16.mxu0 0
      %2018 = vmatpush1.bf16.xpose.msra.mxu0 0
      %2019 = vmatprep.subr.bf16.mxu0 0
      %2020 = vmatpush1.bf16.xpose.msra.mxu0 0
      %2021 = vmatprep.subr.bf16.mxu0 0
      %2022 = vmatpush1.bf16.xpose.msra.mxu0 0
      %2023 = vmatprep.subr.bf16.mxu0 0
      %2024 = vmatpush1.bf16.xpose.msra.mxu0 0
      %2025 = vmatprep.subr.bf16.mxu0 0
      %2026 = vmatpush1.bf16.xpose.msra.mxu0 0
      %2027 = vmatprep.subr.bf16.mxu0 0
      %2028 = vmatpush1.bf16.xpose.msra.mxu0 0
      %2029 = vmatprep.subr.bf16.mxu0 0
      %2030 = vmatpush1.bf16.xpose.msra.mxu0 0
      %2031 = vmatprep.subr.bf16.mxu0 0
      %2032 = vmatpush1.bf16.xpose.msra.mxu0 0
      %2033 = vmatprep.subr.bf16.mxu0 0
      %2034 = vmatpush1.bf16.xpose.msra.mxu0 0
      %2035 = vmatprep.mubr.bf16.mxu0 0
      %2036 = vmatmul.mubr.bf16.gmra.mrb[0].mxu0 %v1998
      %v2037 = vpop.f32.mrb[0].mxu0
      %v2038 = vadd.f32 %v449, %v2037
      %v2039 = vpop.f32.mrb[0].mxu0
      %v2040 = vpop.f32.mrb[0].mxu0
      %v2041 = vpop.f32.mrb[0].mxu0
      %2042 = vdwg.mxu0
      %v2044 = vsel %vm900, %v1649, 0
      %v2047 = vsel %vm900, %v1799, 0
      %2049 = vmatprep.subr.bf16.mxu0 0
      %2050 = vmatpush1.bf16.xpose.msra.mxu0 %v2047
      %2051 = vmatprep.subr.bf16.mxu0 0
      %2052 = vmatpush1.bf16.xpose.msra.mxu0 0
      %2053 = vmatprep.subr.bf16.mxu0 0
      %2054 = vmatpush1.bf16.xpose.msra.mxu0 0
      %2055 = vmatprep.subr.bf16.mxu0 0
      %2056 = vmatpush1.bf16.xpose.msra.mxu0 0
      %2057 = vmatprep.subr.bf16.mxu0 0
      %2058 = vmatpush1.bf16.xpose.msra.mxu0 0
      %2059 = vmatprep.subr.bf16.mxu0 0
      %2060 = vmatpush1.bf16.xpose.msra.mxu0 0
      %2061 = vmatprep.subr.bf16.mxu0 0
      %2062 = vmatpush1.bf16.xpose.msra.mxu0 0
      %2063 = vmatprep.subr.bf16.mxu0 0
      %2064 = vmatpush1.bf16.xpose.msra.mxu0 0
      %2065 = vmatprep.subr.bf16.mxu0 0
      %2066 = vmatpush1.bf16.xpose.msra.mxu0 0
      %2067 = vmatprep.subr.bf16.mxu0 0
      %2068 = vmatpush1.bf16.xpose.msra.mxu0 0
      %2069 = vmatprep.subr.bf16.mxu0 0
      %2070 = vmatpush1.bf16.xpose.msra.mxu0 0
      %2071 = vmatprep.subr.bf16.mxu0 0
      %2072 = vmatpush1.bf16.xpose.msra.mxu0 0
      %2073 = vmatprep.subr.bf16.mxu0 0
      %2074 = vmatpush1.bf16.xpose.msra.mxu0 0
      %2075 = vmatprep.subr.bf16.mxu0 0
      %2076 = vmatpush1.bf16.xpose.msra.mxu0 0
      %2077 = vmatprep.subr.bf16.mxu0 0
      %2078 = vmatpush1.bf16.xpose.msra.mxu0 0
      %2079 = vmatprep.subr.bf16.mxu0 0
      %2080 = vmatpush1.bf16.xpose.msra.mxu0 0
      %2081 = vmatprep.mubr.bf16.mxu0 0
      %2082 = vmatmul.mubr.bf16.gmra.mrb[0].mxu0 %v2044
      %v2083 = vpop.f32.mrb[0].mxu0
      %v2084 = vadd.f32 %v449, %v2083
      %v2085 = vpop.f32.mrb[0].mxu0
      %v2086 = vpop.f32.mrb[0].mxu0
      %v2087 = vpop.f32.mrb[0].mxu0
      %2088 = vdwg.mxu0
      %v2090 = vsel %vm900, %v1650, 0
      %v2093 = vsel %vm900, %v1800, 0
      %2095 = vmatprep.subr.bf16.mxu0 0
      %2096 = vmatpush1.bf16.xpose.msra.mxu0 %v2093
      %2097 = vmatprep.subr.bf16.mxu0 0
      %2098 = vmatpush1.bf16.xpose.msra.mxu0 0
      %2099 = vmatprep.subr.bf16.mxu0 0
      %2100 = vmatpush1.bf16.xpose.msra.mxu0 0
      %2101 = vmatprep.subr.bf16.mxu0 0
      %2102 = vmatpush1.bf16.xpose.msra.mxu0 0
      %2103 = vmatprep.subr.bf16.mxu0 0
      %2104 = vmatpush1.bf16.xpose.msra.mxu0 0
      %2105 = vmatprep.subr.bf16.mxu0 0
      %2106 = vmatpush1.bf16.xpose.msra.mxu0 0
      %2107 = vmatprep.subr.bf16.mxu0 0
      %2108 = vmatpush1.bf16.xpose.msra.mxu0 0
      %2109 = vmatprep.subr.bf16.mxu0 0
      %2110 = vmatpush1.bf16.xpose.msra.mxu0 0
      %2111 = vmatprep.subr.bf16.mxu0 0
      %2112 = vmatpush1.bf16.xpose.msra.mxu0 0
      %2113 = vmatprep.subr.bf16.mxu0 0
      %2114 = vmatpush1.bf16.xpose.msra.mxu0 0
      %2115 = vmatprep.subr.bf16.mxu0 0
      %2116 = vmatpush1.bf16.xpose.msra.mxu0 0
      %2117 = vmatprep.subr.bf16.mxu0 0
      %2118 = vmatpush1.bf16.xpose.msra.mxu0 0
      %2119 = vmatprep.subr.bf16.mxu0 0
      %2120 = vmatpush1.bf16.xpose.msra.mxu0 0
      %2121 = vmatprep.subr.bf16.mxu0 0
      %2122 = vmatpush1.bf16.xpose.msra.mxu0 0
      %2123 = vmatprep.subr.bf16.mxu0 0
      %2124 = vmatpush1.bf16.xpose.msra.mxu0 0
      %2125 = vmatprep.subr.bf16.mxu0 0
      %2126 = vmatpush1.bf16.xpose.msra.mxu0 0
      %2127 = vmatprep.mubr.bf16.mxu0 0
      %2128 = vmatmul.mubr.bf16.gmra.mrb[0].mxu0 %v2090
      %v2129 = vpop.f32.mrb[0].mxu0
      %v2130 = vadd.f32 %v449, %v2129
      %v2131 = vpop.f32.mrb[0].mxu0
      %v2132 = vpop.f32.mrb[0].mxu0
      %v2133 = vpop.f32.mrb[0].mxu0
      %2134 = vdwg.mxu0
      %v2135 = vsel %vm1085, %v1992, -inf
      %2136 = vmax.xlane.f32.xlu0 %v2135
      %v2137 = vpop.xlane.xlu0 %2136
      %v2138 = vsel %vm1085, %v2038, -inf
      %2139 = vmax.xlane.f32.xlu0 %v2138
      %v2140 = vpop.xlane.xlu0 %2139
      %v2141 = vsel %vm1085, %v2084, -inf
      %2142 = vmax.xlane.f32.xlu0 %v2141
      %v2143 = vpop.xlane.xlu0 %2142
      %v2144 = vsel %vm1085, %v2130, -inf
      %2145 = vmax.xlane.f32.xlu0 %v2144
      %v2146 = vpop.xlane.xlu0 %2145
      %v2147 = vmax.f32 %v2137, -1e+30
      %v2148 = vmax.f32 %v2140, -1e+30
      %v2149 = vmax.f32 %v2143, -1e+30
      %v2150 = vmax.f32 %v2146, -1e+30
      %v2151 = vsub.f32 -1e+30, %v2147
      %v2152 = vsub.f32 -1e+30, %v2148
      %v2153 = vsub.f32 -1e+30, %v2149
      %v2154 = vsub.f32 -1e+30, %v2150
      %v2155 = vmul.f32 %v2151, 1.442695
      %v2156 = vpow.pop %v2155
      %v2157 = vmul.f32 %v2152, 1.442695
      %v2158 = vpow.pop %v2157
      %v2159 = vmul.f32 %v2153, 1.442695
      %v2160 = vpow.pop %v2159
      %v2161 = vmul.f32 %v2154, 1.442695
      %v2162 = vpow.pop %v2161
      %v2163 = vsub.f32 %v1992, %v2147
      %v2164 = vsub.f32 %v2038, %v2148
      %v2165 = vsub.f32 %v2084, %v2149
      %v2166 = vsub.f32 %v2130, %v2150
      %v2167 = vmul.f32 %v2163, 1.442695
      %v2168 = vpow.pop %v2167
      %v2169 = vmul.f32 %v2164, 1.442695
      %v2170 = vpow.pop %v2169
      %v2171 = vmul.f32 %v2165, 1.442695
      %v2172 = vpow.pop %v2171
      %v2173 = vmul.f32 %v2166, 1.442695
      %v2174 = vpow.pop %v2173
      %v2175 = vmul.f32 %v2156, 0.0
      %v2176 = vmul.f32 %v2158, 0.0
      %v2177 = vmul.f32 %v2160, 0.0
      %v2178 = vmul.f32 %v2162, 0.0
      %v2179 = vsel %vm1085, %v2168, 0.0
      %2180 = vadd.xlane.f32.xlu0 %v2179
      %v2181 = vpop.xlane.xlu0 %2180
      %v2182 = vsel %vm1085, %v2170, 0.0
      %2183 = vadd.xlane.f32.xlu0 %v2182
      %v2184 = vpop.xlane.xlu0 %2183
      %v2185 = vsel %vm1085, %v2172, 0.0
      %2186 = vadd.xlane.f32.xlu0 %v2185
      %v2187 = vpop.xlane.xlu0 %2186
      %v2188 = vsel %vm1085, %v2174, 0.0
      %2189 = vadd.xlane.f32.xlu0 %v2188
      %v2190 = vpop.xlane.xlu0 %2189
      %v2191 = vadd.f32 %v2175, %v2181
      %v2192 = vadd.f32 %v2176, %v2184
      %v2193 = vadd.f32 %v2177, %v2187
      %v2194 = vadd.f32 %v2178, %v2190
      %v2195 = vpack.c.bf16 %v2168, %v2168
      %v2196 = vpack.c.bf16 %v2170, %v2170
      %v2197 = vpack.c.bf16 %v2172, %v2172
      %v2198 = vpack.c.bf16 %v2174, %v2174
      %v2200 = vsel %vm1085, %v2195, 0
      %v2203 = vsel %vm1153, %v1947, 0
      %2205 = vmatprep.subr.bf16.mxu0 0
      %2206 = vmatpush1.bf16.msra.mxu0 %v2203
      %2207 = vmatprep.subr.bf16.mxu0 0
      %2208 = vmatpush1.bf16.msra.mxu0 0
      %2209 = vmatprep.subr.bf16.mxu0 0
      %2210 = vmatpush1.bf16.msra.mxu0 0
      %2211 = vmatprep.subr.bf16.mxu0 0
      %2212 = vmatpush1.bf16.msra.mxu0 0
      %2213 = vmatprep.subr.bf16.mxu0 0
      %2214 = vmatpush1.bf16.msra.mxu0 0
      %2215 = vmatprep.subr.bf16.mxu0 0
      %2216 = vmatpush1.bf16.msra.mxu0 0
      %2217 = vmatprep.subr.bf16.mxu0 0
      %2218 = vmatpush1.bf16.msra.mxu0 0
      %2219 = vmatprep.subr.bf16.mxu0 0
      %2220 = vmatpush1.bf16.msra.mxu0 0
      %2221 = vmatprep.subr.bf16.mxu0 0
      %2222 = vmatpush1.bf16.msra.mxu0 0
      %2223 = vmatprep.subr.bf16.mxu0 0
      %2224 = vmatpush1.bf16.msra.mxu0 0
      %2225 = vmatprep.subr.bf16.mxu0 0
      %2226 = vmatpush1.bf16.msra.mxu0 0
      %2227 = vmatprep.subr.bf16.mxu0 0
      %2228 = vmatpush1.bf16.msra.mxu0 0
      %2229 = vmatprep.subr.bf16.mxu0 0
      %2230 = vmatpush1.bf16.msra.mxu0 0
      %2231 = vmatprep.subr.bf16.mxu0 0
      %2232 = vmatpush1.bf16.msra.mxu0 0
      %2233 = vmatprep.subr.bf16.mxu0 0
      %2234 = vmatpush1.bf16.msra.mxu0 0
      %2235 = vmatprep.subr.bf16.mxu0 0
      %2236 = vmatpush1.bf16.msra.mxu0 0
      %2237 = vmatprep.mubr.bf16.mxu0 0
      %2238 = vmatmul.mubr.bf16.gmra.mrb[0].mxu0 %v2200
      %v2239 = vpop.f32.mrb[0].mxu0
      %v2240 = vadd.f32 0.0, %v2239
      %v2241 = vpop.f32.mrb[0].mxu0
      %v2242 = vpop.f32.mrb[0].mxu0
      %v2243 = vpop.f32.mrb[0].mxu0
      %2244 = vdwg.mxu0
      %v2246 = vsel %vm1085, %v2196, 0
      %v2249 = vsel %vm1153, %v1948, 0
      %2251 = vmatprep.subr.bf16.mxu0 0
      %2252 = vmatpush1.bf16.msra.mxu0 %v2249
      %2253 = vmatprep.subr.bf16.mxu0 0
      %2254 = vmatpush1.bf16.msra.mxu0 0
      %2255 = vmatprep.subr.bf16.mxu0 0
      %2256 = vmatpush1.bf16.msra.mxu0 0
      %2257 = vmatprep.subr.bf16.mxu0 0
      %2258 = vmatpush1.bf16.msra.mxu0 0
      %2259 = vmatprep.subr.bf16.mxu0 0
      %2260 = vmatpush1.bf16.msra.mxu0 0
      %2261 = vmatprep.subr.bf16.mxu0 0
      %2262 = vmatpush1.bf16.msra.mxu0 0
      %2263 = vmatprep.subr.bf16.mxu0 0
      %2264 = vmatpush1.bf16.msra.mxu0 0
      %2265 = vmatprep.subr.bf16.mxu0 0
      %2266 = vmatpush1.bf16.msra.mxu0 0
      %2267 = vmatprep.subr.bf16.mxu0 0
      %2268 = vmatpush1.bf16.msra.mxu0 0
      %2269 = vmatprep.subr.bf16.mxu0 0
      %2270 = vmatpush1.bf16.msra.mxu0 0
      %2271 = vmatprep.subr.bf16.mxu0 0
      %2272 = vmatpush1.bf16.msra.mxu0 0
      %2273 = vmatprep.subr.bf16.mxu0 0
      %2274 = vmatpush1.bf16.msra.mxu0 0
      %2275 = vmatprep.subr.bf16.mxu0 0
      %2276 = vmatpush1.bf16.msra.mxu0 0
      %2277 = vmatprep.subr.bf16.mxu0 0
      %2278 = vmatpush1.bf16.msra.mxu0 0
      %2279 = vmatprep.subr.bf16.mxu0 0
      %2280 = vmatpush1.bf16.msra.mxu0 0
      %2281 = vmatprep.subr.bf16.mxu0 0
      %2282 = vmatpush1.bf16.msra.mxu0 0
      %2283 = vmatprep.mubr.bf16.mxu0 0
      %2284 = vmatmul.mubr.bf16.gmra.mrb[0].mxu0 %v2246
      %v2285 = vpop.f32.mrb[0].mxu0
      %v2286 = vadd.f32 0.0, %v2285
      %v2287 = vpop.f32.mrb[0].mxu0
      %v2288 = vpop.f32.mrb[0].mxu0
      %v2289 = vpop.f32.mrb[0].mxu0
      %2290 = vdwg.mxu0
      %v2292 = vsel %vm1085, %v2197, 0
      %v2295 = vsel %vm1153, %v1949, 0
      %2297 = vmatprep.subr.bf16.mxu0 0
      %2298 = vmatpush1.bf16.msra.mxu0 %v2295
      %2299 = vmatprep.subr.bf16.mxu0 0
      %2300 = vmatpush1.bf16.msra.mxu0 0
      %2301 = vmatprep.subr.bf16.mxu0 0
      %2302 = vmatpush1.bf16.msra.mxu0 0
      %2303 = vmatprep.subr.bf16.mxu0 0
      %2304 = vmatpush1.bf16.msra.mxu0 0
      %2305 = vmatprep.subr.bf16.mxu0 0
      %2306 = vmatpush1.bf16.msra.mxu0 0
      %2307 = vmatprep.subr.bf16.mxu0 0
      %2308 = vmatpush1.bf16.msra.mxu0 0
      %2309 = vmatprep.subr.bf16.mxu0 0
      %2310 = vmatpush1.bf16.msra.mxu0 0
      %2311 = vmatprep.subr.bf16.mxu0 0
      %2312 = vmatpush1.bf16.msra.mxu0 0
      %2313 = vmatprep.subr.bf16.mxu0 0
      %2314 = vmatpush1.bf16.msra.mxu0 0
      %2315 = vmatprep.subr.bf16.mxu0 0
      %2316 = vmatpush1.bf16.msra.mxu0 0
      %2317 = vmatprep.subr.bf16.mxu0 0
      %2318 = vmatpush1.bf16.msra.mxu0 0
      %2319 = vmatprep.subr.bf16.mxu0 0
      %2320 = vmatpush1.bf16.msra.mxu0 0
      %2321 = vmatprep.subr.bf16.mxu0 0
      %2322 = vmatpush1.bf16.msra.mxu0 0
      %2323 = vmatprep.subr.bf16.mxu0 0
      %2324 = vmatpush1.bf16.msra.mxu0 0
      %2325 = vmatprep.subr.bf16.mxu0 0
      %2326 = vmatpush1.bf16.msra.mxu0 0
      %2327 = vmatprep.subr.bf16.mxu0 0
      %2328 = vmatpush1.bf16.msra.mxu0 0
      %2329 = vmatprep.mubr.bf16.mxu0 0
      %2330 = vmatmul.mubr.bf16.gmra.mrb[0].mxu0 %v2292
      %v2331 = vpop.f32.mrb[0].mxu0
      %v2332 = vadd.f32 0.0, %v2331
      %v2333 = vpop.f32.mrb[0].mxu0
      %v2334 = vpop.f32.mrb[0].mxu0
      %v2335 = vpop.f32.mrb[0].mxu0
      %2336 = vdwg.mxu0
      %v2338 = vsel %vm1085, %v2198, 0
      %v2341 = vsel %vm1153, %v1950, 0
      %2343 = vmatprep.subr.bf16.mxu0 0
      %2344 = vmatpush1.bf16.msra.mxu0 %v2341
      %2345 = vmatprep.subr.bf16.mxu0 0
      %2346 = vmatpush1.bf16.msra.mxu0 0
      %2347 = vmatprep.subr.bf16.mxu0 0
      %2348 = vmatpush1.bf16.msra.mxu0 0
      %2349 = vmatprep.subr.bf16.mxu0 0
      %2350 = vmatpush1.bf16.msra.mxu0 0
      %2351 = vmatprep.subr.bf16.mxu0 0
      %2352 = vmatpush1.bf16.msra.mxu0 0
      %2353 = vmatprep.subr.bf16.mxu0 0
      %2354 = vmatpush1.bf16.msra.mxu0 0
      %2355 = vmatprep.subr.bf16.mxu0 0
      %2356 = vmatpush1.bf16.msra.mxu0 0
      %2357 = vmatprep.subr.bf16.mxu0 0
      %2358 = vmatpush1.bf16.msra.mxu0 0
      %2359 = vmatprep.subr.bf16.mxu0 0
      %2360 = vmatpush1.bf16.msra.mxu0 0
      %2361 = vmatprep.subr.bf16.mxu0 0
      %2362 = vmatpush1.bf16.msra.mxu0 0
      %2363 = vmatprep.subr.bf16.mxu0 0
      %2364 = vmatpush1.bf16.msra.mxu0 0
      %2365 = vmatprep.subr.bf16.mxu0 0
      %2366 = vmatpush1.bf16.msra.mxu0 0
      %2367 = vmatprep.subr.bf16.mxu0 0
      %2368 = vmatpush1.bf16.msra.mxu0 0
      %2369 = vmatprep.subr.bf16.mxu0 0
      %2370 = vmatpush1.bf16.msra.mxu0 0
      %2371 = vmatprep.subr.bf16.mxu0 0
      %2372 = vmatpush1.bf16.msra.mxu0 0
      %2373 = vmatprep.subr.bf16.mxu0 0
      %2374 = vmatpush1.bf16.msra.mxu0 0
      %2375 = vmatprep.mubr.bf16.mxu0 0
      %2376 = vmatmul.mubr.bf16.gmra.mrb[0].mxu0 %v2338
      %v2377 = vpop.f32.mrb[0].mxu0
      %v2378 = vadd.f32 0.0, %v2377
      %v2379 = vpop.f32.mrb[0].mxu0
      %v2380 = vpop.f32.mrb[0].mxu0
      %v2381 = vpop.f32.mrb[0].mxu0
      %2382 = vdwg.mxu0
      %v2383 = vadd.f32 %v2175, %v2240
      %v2384 = vadd.f32 %v2176, %v2286
      %v2385 = vadd.f32 %v2177, %v2332
      %v2386 = vadd.f32 %v2178, %v2378
      %v2387 = vrcp.pop %v2191
      %v2388 = vrcp.pop %v2192
      %v2389 = vrcp.pop %v2193
      %v2390 = vrcp.pop %v2194
      %v2391 = vmul.f32 %v2383, %v2387
      %v2392 = vmul.f32 %v2384, %v2388
      %v2393 = vmul.f32 %v2385, %v2389
      %v2394 = vmul.f32 %v2386, %v2390
      %v2395 = vcombine.low %v2391, %v2393
      %v2396 = vcombine.high %v2391, %v2393
      %v2398 = vunpack.c.l.s4 1983009808
      %v2399 = vunpack.c.0.s8 %v2398
      %v2400 = vlaneseq
      %v2401 = vshrl.u32 %v2400, 7
      %v2402 = vsub.s32 %v2399, %v2401
      %v2403 = vrot.slane %v2395, %v2402
      %v2405 = vunpack.c.l.s4 1983009808
      %v2406 = vunpack.c.0.s8 %v2405
      %v2407 = vlaneseq
      %v2408 = vshrl.u32 %v2407, 7
      %v2409 = vsub.s32 %v2406, %v2408
      %v2410 = vrot.slane %v2396, %v2409
      %v2411 = vcombine.low %v2392, %v2394
      %v2412 = vcombine.high %v2392, %v2394
      %v2414 = vunpack.c.l.s4 1983009808
      %v2415 = vunpack.c.0.s8 %v2414
      %v2416 = vlaneseq
      %v2417 = vshrl.u32 %v2416, 7
      %v2418 = vsub.s32 %v2415, %v2417
      %v2419 = vrot.slane %v2411, %v2418
      %v2421 = vunpack.c.l.s4 1983009808
      %v2422 = vunpack.c.0.s8 %v2421
      %v2423 = vlaneseq
      %v2424 = vshrl.u32 %v2423, 7
      %v2425 = vsub.s32 %v2422, %v2424
      %v2426 = vrot.slane %v2412, %v2425
      %v2427 = vcombine.low %v2403, %v2419
      %v2428 = vcombine.high %v2403, %v2419
      %v2430 = vunpack.c.l.s4 1934713408
      %v2431 = vunpack.c.0.s8 %v2430
      %v2432 = vlaneseq
      %v2433 = vshrl.u32 %v2432, 7
      %v2434 = vsub.s32 %v2431, %v2433
      %v2435 = vrot.slane %v2427, %v2434
      %v2437 = vunpack.c.l.s4 1934713408
      %v2438 = vunpack.c.0.s8 %v2437
      %v2439 = vlaneseq
      %v2440 = vshrl.u32 %v2439, 7
      %v2441 = vsub.s32 %v2438, %v2440
      %v2442 = vrot.slane %v2428, %v2441
      %v2443 = vcombine.low %v2410, %v2426
      %v2444 = vcombine.high %v2410, %v2426
      %v2446 = vunpack.c.l.s4 1934713408
      %v2447 = vunpack.c.0.s8 %v2446
      %v2448 = vlaneseq
      %v2449 = vshrl.u32 %v2448, 7
      %v2450 = vsub.s32 %v2447, %v2449
      %v2451 = vrot.slane %v2443, %v2450
      %v2453 = vunpack.c.l.s4 1934713408
      %v2454 = vunpack.c.0.s8 %v2453
      %v2455 = vlaneseq
      %v2456 = vshrl.u32 %v2455, 7
      %v2457 = vsub.s32 %v2454, %v2456
      %v2458 = vrot.slane %v2444, %v2457
      %v2459 = vcombine.high %v2435, 0.0
      %v2460 = vcombine.high %v2442, 0.0
      %v2461 = vcombine.high %v2451, 0.0
      %v2462 = vcombine.high %v2458, 0.0
      %v2463 = vcombine.low %v2435, %v2442
      %v2465 = vunpack.c.l.s4 1983009808
      %v2466 = vunpack.c.0.s8 %v2465
      %v2467 = vlaneseq
      %v2468 = vshrl.u32 %v2467, 7
      %v2469 = vsub.s32 %v2466, %v2468
      %v2470 = vrot.slane %v2463, %v2469
      %v2471 = vcombine.low %v2459, %v2460
      %v2473 = vunpack.c.l.s4 1983009808
      %v2474 = vunpack.c.0.s8 %v2473
      %v2475 = vlaneseq
      %v2476 = vshrl.u32 %v2475, 7
      %v2477 = vsub.s32 %v2474, %v2476
      %v2478 = vrot.slane %v2471, %v2477
      %v2479 = vcombine.low %v2451, %v2458
      %v2481 = vunpack.c.l.s4 1983009808
      %v2482 = vunpack.c.0.s8 %v2481
      %v2483 = vlaneseq
      %v2484 = vshrl.u32 %v2483, 7
      %v2485 = vsub.s32 %v2482, %v2484
      %v2486 = vrot.slane %v2479, %v2485
      %v2487 = vcombine.low %v2461, %v2462
      %v2489 = vunpack.c.l.s4 1983009808
      %v2490 = vunpack.c.0.s8 %v2489
      %v2491 = vlaneseq
      %v2492 = vshrl.u32 %v2491, 7
      %v2493 = vsub.s32 %v2490, %v2492
      %v2494 = vrot.slane %v2487, %v2493
      %v2495 = vcombine.low %v2470, %v2478
      %v2496 = vcombine.high %v2470, %v2478
      %v2498 = vunpack.c.l.s4 1934713408
      %v2499 = vunpack.c.0.s8 %v2498
      %v2500 = vlaneseq
      %v2501 = vshrl.u32 %v2500, 7
      %v2502 = vsub.s32 %v2499, %v2501
      %v2503 = vrot.slane %v2495, %v2502
      %v2505 = vunpack.c.l.s4 1934713408
      %v2506 = vunpack.c.0.s8 %v2505
      %v2507 = vlaneseq
      %v2508 = vshrl.u32 %v2507, 7
      %v2509 = vsub.s32 %v2506, %v2508
      %v2510 = vrot.slane %v2496, %v2509
      %v2511 = vcombine.low %v2486, %v2494
      %v2512 = vcombine.high %v2486, %v2494
      %v2514 = vunpack.c.l.s4 1934713408
      %v2515 = vunpack.c.0.s8 %v2514
      %v2516 = vlaneseq
      %v2517 = vshrl.u32 %v2516, 7
      %v2518 = vsub.s32 %v2515, %v2517
      %v2519 = vrot.slane %v2511, %v2518
      %v2521 = vunpack.c.l.s4 1934713408
      %v2522 = vunpack.c.0.s8 %v2521
      %v2523 = vlaneseq
      %v2524 = vshrl.u32 %v2523, 7
      %v2525 = vsub.s32 %v2522, %v2524
      %v2526 = vrot.slane %v2512, %v2525
      %v2527 = vcombine.low %v2503, %v2519
      %v2528 = vcombine.high %v2503, %v2519
      %v2529 = vcombine.low %v2510, %v2526
      %v2530 = vcombine.high %v2510, %v2526
      %2532 = vrot.lane.b32.xlu0 %v2528, 32
      %v2533 = vpop.permute.xlu0 %2532
      %2536 = vrot.lane.b32.xlu0 %v2529, 64
      %v2537 = vpop.permute.xlu0 %2536
      %2540 = vrot.lane.b32.xlu0 %v2530, 96
      %v2541 = vpop.permute.xlu0 %2540
      %v2543 = vsel %vm900, %v2527, %v2533
      %v2544 = vsel %vm1496, %v2543, %v2537
      %v2545 = vsel %vm1498, %v2544, %v2541
      %2546 = vst [vmem:[#allocation3 + $0x8] sm:$0xff] %v2545
      %v2547 = vld [vmem:[#allocation3] sm:$0xff]
      %v2548 = vld [vmem:[#allocation3 + $0x8] sm:$0xff]
      %v2549 = vpack.c.bf16 %v2548, %v2547
      %v2550 = vld [vmem:[#allocation12] sm:$0xf]
      %v2551 = vld [vmem:[#allocation12 + $0x4] sm:$0xf]
      %v2552 = vld [vmem:[#allocation12 + $0x8] sm:$0xf]
      %v2553 = vld [vmem:[#allocation12 + $0xc] sm:$0xf]
      %v2554 = vld [vmem:[#allocation12 + $0x10] sm:$0xf]
      %v2555 = vld [vmem:[#allocation12 + $0x14] sm:$0xf]
      %v2556 = vld [vmem:[#allocation12 + $0x18] sm:$0xf]
      %v2557 = vld [vmem:[#allocation12 + $0x1c] sm:$0xf]
      %v2558 = vld [vmem:[#allocation12 + $0x20] sm:$0xf]
      %v2559 = vld [vmem:[#allocation12 + $0x24] sm:$0xf]
      %v2560 = vld [vmem:[#allocation12 + $0x28] sm:$0xf]
      %v2561 = vld [vmem:[#allocation12 + $0x2c] sm:$0xf]
      %v2562 = vld [vmem:[#allocation12 + $0x30] sm:$0xf]
      %v2563 = vld [vmem:[#allocation12 + $0x34] sm:$0xf]
      %v2564 = vld [vmem:[#allocation12 + $0x38] sm:$0xf]
      %v2565 = vld [vmem:[#allocation12 + $0x3c] sm:$0xf]
      %v2566 = vld [vmem:[%s7] sm:$0x1]
      %v2568 = vlaneseq
      %v2569 = vshrl.u32 %v2568, 7
      %v2570 = vsub.s32 0, %v2569
      %v2571 = vrot.slane %v2566, %v2570
      %v2589 = vunpack.c.l.b16 %v2550
      %v2590 = vunpack.c.l.b16 %v2551
      %v2591 = vunpack.c.l.b16 %v2552
      %v2592 = vunpack.c.l.b16 %v2553
      %v2593 = vunpack.c.l.b16 %v2554
      %v2594 = vunpack.c.l.b16 %v2555
      %v2595 = vunpack.c.l.b16 %v2556
      %v2596 = vunpack.c.l.b16 %v2557
      %v2597 = vunpack.c.l.b16 %v2558
      %v2598 = vunpack.c.l.b16 %v2559
      %v2599 = vunpack.c.l.b16 %v2560
      %v2600 = vunpack.c.l.b16 %v2561
      %v2601 = vunpack.c.l.b16 %v2562
      %v2602 = vunpack.c.l.b16 %v2563
      %v2603 = vunpack.c.l.b16 %v2564
      %v2604 = vunpack.c.l.b16 %v2565
      %v2605 = vpack.c.b16 %v2590, %v2589
      %v2606 = vpack.c.b16 %v2592, %v2591
      %v2607 = vpack.c.b16 %v2594, %v2593
      %v2608 = vpack.c.b16 %v2596, %v2595
      %v2609 = vpack.c.b16 %v2598, %v2597
      %v2610 = vpack.c.b16 %v2600, %v2599
      %v2611 = vpack.c.b16 %v2602, %v2601
      %v2612 = vpack.c.b16 %v2604, %v2603
      %2621 = vmatprep.subr.bf16.mxu0 0
      %2622 = vmatpush1.bf16.msra.mxu0 %v2605
      %2623 = vmatprep.subr.bf16.mxu0 0
      %2624 = vmatpush1.bf16.msra.mxu0 %v2606
      %2625 = vmatprep.subr.bf16.mxu0 0
      %2626 = vmatpush1.bf16.msra.mxu0 %v2607
      %2627 = vmatprep.subr.bf16.mxu0 0
      %2628 = vmatpush1.bf16.msra.mxu0 %v2608
      %2629 = vmatprep.subr.bf16.mxu0 0
      %2630 = vmatpush1.bf16.msra.mxu0 %v2609
      %2631 = vmatprep.subr.bf16.mxu0 0
      %2632 = vmatpush1.bf16.msra.mxu0 %v2610
      %2633 = vmatprep.subr.bf16.mxu0 0
      %2634 = vmatpush1.bf16.msra.mxu0 %v2611
      %2635 = vmatprep.subr.bf16.mxu0 0
      %2636 = vmatpush1.bf16.msra.mxu0 %v2612
      %2637 = vmatprep.subr.bf16.mxu0 0
      %2638 = vmatpush1.bf16.msra.mxu0 0
      %2639 = vmatprep.subr.bf16.mxu0 0
      %2640 = vmatpush1.bf16.msra.mxu0 0
      %2641 = vmatprep.subr.bf16.mxu0 0
      %2642 = vmatpush1.bf16.msra.mxu0 0
      %2643 = vmatprep.subr.bf16.mxu0 0
      %2644 = vmatpush1.bf16.msra.mxu0 0
      %2645 = vmatprep.subr.bf16.mxu0 0
      %2646 = vmatpush1.bf16.msra.mxu0 0
      %2647 = vmatprep.subr.bf16.mxu0 0
      %2648 = vmatpush1.bf16.msra.mxu0 0
      %2649 = vmatprep.subr.bf16.mxu0 0
      %2650 = vmatpush1.bf16.msra.mxu0 0
      %2651 = vmatprep.subr.bf16.mxu0 0
      %2652 = vmatpush1.bf16.msra.mxu0 0
      %2653 = vmatprep.mubr.bf16.mxu0 0
      %2654 = vmatmul.mubr.bf16.gmra.mrb[0].mxu0 %v2549
      %v2655 = vpop.f32.mrb[0].mxu0
      %v2656 = vadd.f32 %v2571, %v2655
      %v2657 = vpop.f32.mrb[0].mxu0
      %v2658 = vpop.f32.mrb[0].mxu0
      %v2659 = vadd.f32 %v2571, %v2658
      %v2660 = vpop.f32.mrb[0].mxu0
      %2661 = vdwg.mxu0
      %v2662 = vadd.f32 %v144, %v2656
      %v2663 = vadd.f32 %v145, %v2659
      %2664 = vadd.xlane.f32.xlu0 %v2662
      %v2665 = vpop.xlane.xlu0 %2664
      %2666 = vadd.xlane.f32.xlu0 %v2663
      %v2667 = vpop.xlane.xlu0 %2666
      %v2668 = vmul.f32 %v2665, %v150
      %v2669 = vmul.f32 %v2667, %v150
      %v2670 = vsub.f32 %v2662, %v2668
      %v2671 = vsub.f32 %v2663, %v2669
      %v2672 = vmul.f32 %v2670, %v2670
      %v2673 = vmul.f32 %v2671, %v2671
      %2674 = vadd.xlane.f32.xlu0 %v2672
      %v2675 = vpop.xlane.xlu0 %2674
      %2676 = vadd.xlane.f32.xlu0 %v2673
      %v2677 = vpop.xlane.xlu0 %2676
      %v2678 = vmul.f32 %v2675, %v150
      %v2679 = vmul.f32 %v2677, %v150
      %v2680 = vadd.f32 %v2678, 1e-05
      %v2681 = vadd.f32 %v2679, 1e-05
      %v2682 = vrsqrt.pop %v2680
      %v2683 = vrsqrt.pop %v2681
      %v2684 = vmul.f32 %v2670, %v2682
      %v2685 = vmul.f32 %v2671, %v2683
      %v2686 = vld [vmem:[%s8] sm:$0x1]
      %v2688 = vlaneseq
      %v2689 = vshrl.u32 %v2688, 7
      %v2690 = vsub.s32 0, %v2689
      %v2691 = vrot.slane %v2686, %v2690
      %v2693 = vmul.f32 %v2684, %v2691
      %v2694 = vmul.f32 %v2685, %v2691
      %v2695 = vld [vmem:[%s9] sm:$0x1]
      %v2697 = vlaneseq
      %v2698 = vshrl.u32 %v2697, 7
      %v2699 = vsub.s32 0, %v2698
      %v2700 = vrot.slane %v2695, %v2699
      %v2702 = vadd.f32 %v2693, %v2700
      %v2703 = vadd.f32 %v2694, %v2700
      %v2704 = vpack.c.bf16 %v2703, %v2702
      %2705 = vst [vmem:[#allocation2] sm:$0xff] %v2704
      %v2706 = vld [vmem:[%s13] sm:$0x1]
      %v2708 = vlaneseq
      %v2709 = vshrl.u32 %v2708, 7
      %v2710 = vsub.s32 0, %v2709
      %v2711 = vrot.slane %v2706, %v2710
      %v2713 = vadd.f32 %v2662, %v2711
      %v2714 = vadd.f32 %v2663, %v2711
      %2715 = vst [vmem:[#allocation3] sm:$0xff] %v2713
      %2716 = vst [vmem:[#allocation3 + $0x8] sm:$0xff] %v2714
    $region89: #{tpu_custom_call.1} parent=1 // pred_fallthru
      _
    %v2717 = vld [vmem:[#allocation2] sm:$0xff]
    %v2718 = vld [vmem:[#allocation13] sm:$0xff]
    %v2719 = vld [vmem:[#allocation13 + $0x8] sm:$0xff]
    %v2720 = vld [vmem:[#allocation13 + $0x10] sm:$0xff]
    %v2721 = vld [vmem:[#allocation13 + $0x18] sm:$0xff]
    %v2722 = vld [vmem:[#allocation13 + $0x20] sm:$0xff]
    %v2723 = vld [vmem:[#allocation13 + $0x28] sm:$0xff]
    %v2724 = vld [vmem:[#allocation13 + $0x30] sm:$0xff]
    %v2725 = vld [vmem:[#allocation13 + $0x38] sm:$0xff]
    %v2726 = vld [vmem:[#allocation13 + $0x40] sm:$0xff]
    %v2727 = vld [vmem:[#allocation13 + $0x48] sm:$0xff]
    %v2728 = vld [vmem:[#allocation13 + $0x50] sm:$0xff]
    %v2729 = vld [vmem:[#allocation13 + $0x58] sm:$0xff]
    %v2730 = vld [vmem:[#allocation13 + $0x60] sm:$0xff]
    %v2731 = vld [vmem:[#allocation13 + $0x68] sm:$0xff]
    %v2732 = vld [vmem:[#allocation13 + $0x70] sm:$0xff]
    %v2733 = vld [vmem:[#allocation13 + $0x78] sm:$0xff]
    %v2734 = vld [vmem:[#allocation13 + $0x80] sm:$0xff]
    %v2735 = vld [vmem:[#allocation13 + $0x88] sm:$0xff]
    %v2736 = vld [vmem:[#allocation13 + $0x90] sm:$0xff]
    %v2737 = vld [vmem:[#allocation13 + $0x98] sm:$0xff]
    %v2738 = vld [vmem:[#allocation13 + $0xa0] sm:$0xff]
    %v2739 = vld [vmem:[#allocation13 + $0xa8] sm:$0xff]
    %v2740 = vld [vmem:[#allocation13 + $0xb0] sm:$0xff]
    %v2741 = vld [vmem:[#allocation13 + $0xb8] sm:$0xff]
    %v2742 = vld [vmem:[#allocation13 + $0xc0] sm:$0xff]
    %v2743 = vld [vmem:[#allocation13 + $0xc8] sm:$0xff]
    %v2744 = vld [vmem:[#allocation13 + $0xd0] sm:$0xff]
    %v2745 = vld [vmem:[#allocation13 + $0xd8] sm:$0xff]
    %v2746 = vld [vmem:[#allocation13 + $0xe0] sm:$0xff]
    %v2747 = vld [vmem:[#allocation13 + $0xe8] sm:$0xff]
    %v2748 = vld [vmem:[#allocation13 + $0xf0] sm:$0xff]
    %v2749 = vld [vmem:[#allocation13 + $0xf8] sm:$0xff]
    %v2750 = vld [vmem:[%s11] sm:$0xf]
    %v2752 = vlaneseq
    %v2753 = vshrl.u32 %v2752, 7
    %v2754 = vsub.s32 0, %v2753
    %v2755 = vrot.slane %v2750, %v2754
    %v2756 = vlaneseq
    %v2757 = vshrl.u32 %v2756, 7
    %v2758 = vsub.s32 1, %v2757
    %v2759 = vrot.slane %v2750, %v2758
    %v2760 = vlaneseq
    %v2761 = vshrl.u32 %v2760, 7
    %v2762 = vsub.s32 2, %v2761
    %v2763 = vrot.slane %v2750, %v2762
    %v2764 = vlaneseq
    %v2765 = vshrl.u32 %v2764, 7
    %v2766 = vsub.s32 3, %v2765
    %v2767 = vrot.slane %v2750, %v2766
    %v2804 = vunpack.c.l.b16 %v2718
    %v2805 = vunpack.c.h.b16 %v2718
    %v2806 = vunpack.c.l.b16 %v2719
    %v2807 = vunpack.c.h.b16 %v2719
    %v2808 = vunpack.c.l.b16 %v2720
    %v2809 = vunpack.c.h.b16 %v2720
    %v2810 = vunpack.c.l.b16 %v2721
    %v2811 = vunpack.c.h.b16 %v2721
    %v2812 = vunpack.c.l.b16 %v2722
    %v2813 = vunpack.c.h.b16 %v2722
    %v2814 = vunpack.c.l.b16 %v2723
    %v2815 = vunpack.c.h.b16 %v2723
    %v2816 = vunpack.c.l.b16 %v2724
    %v2817 = vunpack.c.h.b16 %v2724
    %v2818 = vunpack.c.l.b16 %v2725
    %v2819 = vunpack.c.h.b16 %v2725
    %v2820 = vunpack.c.l.b16 %v2726
    %v2821 = vunpack.c.h.b16 %v2726
    %v2822 = vunpack.c.l.b16 %v2727
    %v2823 = vunpack.c.h.b16 %v2727
    %v2824 = vunpack.c.l.b16 %v2728
    %v2825 = vunpack.c.h.b16 %v2728
    %v2826 = vunpack.c.l.b16 %v2729
    %v2827 = vunpack.c.h.b16 %v2729
    %v2828 = vunpack.c.l.b16 %v2730
    %v2829 = vunpack.c.h.b16 %v2730
    %v2830 = vunpack.c.l.b16 %v2731
    %v2831 = vunpack.c.h.b16 %v2731
    %v2832 = vunpack.c.l.b16 %v2732
    %v2833 = vunpack.c.h.b16 %v2732
    %v2834 = vunpack.c.l.b16 %v2733
    %v2835 = vunpack.c.h.b16 %v2733
    %v2836 = vunpack.c.l.b16 %v2734
    %v2837 = vunpack.c.h.b16 %v2734
    %v2838 = vunpack.c.l.b16 %v2735
    %v2839 = vunpack.c.h.b16 %v2735
    %v2840 = vunpack.c.l.b16 %v2736
    %v2841 = vunpack.c.h.b16 %v2736
    %v2842 = vunpack.c.l.b16 %v2737
    %v2843 = vunpack.c.h.b16 %v2737
    %v2844 = vunpack.c.l.b16 %v2738
    %v2845 = vunpack.c.h.b16 %v2738
    %v2846 = vunpack.c.l.b16 %v2739
    %v2847 = vunpack.c.h.b16 %v2739
    %v2848 = vunpack.c.l.b16 %v2740
    %v2849 = vunpack.c.h.b16 %v2740
    %v2850 = vunpack.c.l.b16 %v2741
    %v2851 = vunpack.c.h.b16 %v2741
    %v2852 = vunpack.c.l.b16 %v2742
    %v2853 = vunpack.c.h.b16 %v2742
    %v2854 = vunpack.c.l.b16 %v2743
    %v2855 = vunpack.c.h.b16 %v2743
    %v2856 = vunpack.c.l.b16 %v2744
    %v2857 = vunpack.c.h.b16 %v2744
    %v2858 = vunpack.c.l.b16 %v2745
    %v2859 = vunpack.c.h.b16 %v2745
    %v2860 = vunpack.c.l.b16 %v2746
    %v2861 = vunpack.c.h.b16 %v2746
    %v2862 = vunpack.c.l.b16 %v2747
    %v2863 = vunpack.c.h.b16 %v2747
    %v2864 = vunpack.c.l.b16 %v2748
    %v2865 = vunpack.c.h.b16 %v2748
    %v2866 = vunpack.c.l.b16 %v2749
    %v2867 = vunpack.c.h.b16 %v2749
    %v2868 = vpack.c.b16 %v2808, %v2804
    %v2869 = vpack.c.b16 %v2809, %v2805
    %v2870 = vpack.c.b16 %v2810, %v2806
    %v2871 = vpack.c.b16 %v2811, %v2807
    %v2872 = vpack.c.b16 %v2816, %v2812
    %v2873 = vpack.c.b16 %v2817, %v2813
    %v2874 = vpack.c.b16 %v2818, %v2814
    %v2875 = vpack.c.b16 %v2819, %v2815
    %v2876 = vpack.c.b16 %v2824, %v2820
    %v2877 = vpack.c.b16 %v2825, %v2821
    %v2878 = vpack.c.b16 %v2826, %v2822
    %v2879 = vpack.c.b16 %v2827, %v2823
    %v2880 = vpack.c.b16 %v2832, %v2828
    %v2881 = vpack.c.b16 %v2833, %v2829
    %v2882 = vpack.c.b16 %v2834, %v2830
    %v2883 = vpack.c.b16 %v2835, %v2831
    %v2884 = vpack.c.b16 %v2840, %v2836
    %v2885 = vpack.c.b16 %v2841, %v2837
    %v2886 = vpack.c.b16 %v2842, %v2838
    %v2887 = vpack.c.b16 %v2843, %v2839
    %v2888 = vpack.c.b16 %v2848, %v2844
    %v2889 = vpack.c.b16 %v2849, %v2845
    %v2890 = vpack.c.b16 %v2850, %v2846
    %v2891 = vpack.c.b16 %v2851, %v2847
    %v2892 = vpack.c.b16 %v2856, %v2852
    %v2893 = vpack.c.b16 %v2857, %v2853
    %v2894 = vpack.c.b16 %v2858, %v2854
    %v2895 = vpack.c.b16 %v2859, %v2855
    %v2896 = vpack.c.b16 %v2864, %v2860
    %v2897 = vpack.c.b16 %v2865, %v2861
    %v2898 = vpack.c.b16 %v2866, %v2862
    %v2899 = vpack.c.b16 %v2867, %v2863
    %2932 = vmatprep.subr.bf16.mxu0 %v2869
    %2933 = vmatpush1.bf16.msra.mxu0 %v2868
    %2934 = vmatprep.subr.bf16.mxu0 %v2873
    %2935 = vmatpush1.bf16.msra.mxu0 %v2872
    %2936 = vmatprep.subr.bf16.mxu0 %v2877
    %2937 = vmatpush1.bf16.msra.mxu0 %v2876
    %2938 = vmatprep.subr.bf16.mxu0 %v2881
    %2939 = vmatpush1.bf16.msra.mxu0 %v2880
    %2940 = vmatprep.subr.bf16.mxu0 %v2885
    %2941 = vmatpush1.bf16.msra.mxu0 %v2884
    %2942 = vmatprep.subr.bf16.mxu0 %v2889
    %2943 = vmatpush1.bf16.msra.mxu0 %v2888
    %2944 = vmatprep.subr.bf16.mxu0 %v2893
    %2945 = vmatpush1.bf16.msra.mxu0 %v2892
    %2946 = vmatprep.subr.bf16.mxu0 %v2897
    %2947 = vmatpush1.bf16.msra.mxu0 %v2896
    %2948 = vmatprep.subr.bf16.mxu0 0
    %2949 = vmatpush1.bf16.msra.mxu0 0
    %2950 = vmatprep.subr.bf16.mxu0 0
    %2951 = vmatpush1.bf16.msra.mxu0 0
    %2952 = vmatprep.subr.bf16.mxu0 0
    %2953 = vmatpush1.bf16.msra.mxu0 0
    %2954 = vmatprep.subr.bf16.mxu0 0
    %2955 = vmatpush1.bf16.msra.mxu0 0
    %2956 = vmatprep.subr.bf16.mxu0 0
    %2957 = vmatpush1.bf16.msra.mxu0 0
    %2958 = vmatprep.subr.bf16.mxu0 0
    %2959 = vmatpush1.bf16.msra.mxu0 0
    %2960 = vmatprep.subr.bf16.mxu0 0
    %2961 = vmatpush1.bf16.msra.mxu0 0
    %2962 = vmatprep.subr.bf16.mxu0 0
    %2963 = vmatpush1.bf16.msra.mxu0 0
    %2964 = vmatprep.mubr.bf16.mxu0 0
    %2965 = vmatmul.mubr.bf16.gmra.mrb[0].mxu0 %v2717
    %v2966 = vpop.f32.mrb[0].mxu0
    %v2967 = vadd.f32 %v2755, %v2966
    %v2968 = vpop.f32.mrb[0].mxu0
    %v2969 = vadd.f32 %v2759, %v2968
    %v2970 = vpop.f32.mrb[0].mxu0
    %v2971 = vadd.f32 %v2755, %v2970
    %v2972 = vpop.f32.mrb[0].mxu0
    %v2973 = vadd.f32 %v2759, %v2972
    %2974 = vdwg.mxu0
    %2975 = vmatprep.subr.bf16.mxu0 %v2871
    %2976 = vmatpush1.bf16.msra.mxu0 %v2870
    %2977 = vmatprep.subr.bf16.mxu0 %v2875
    %2978 = vmatpush1.bf16.msra.mxu0 %v2874
    %2979 = vmatprep.subr.bf16.mxu0 %v2879
    %2980 = vmatpush1.bf16.msra.mxu0 %v2878
    %2981 = vmatprep.subr.bf16.mxu0 %v2883
    %2982 = vmatpush1.bf16.msra.mxu0 %v2882
    %2983 = vmatprep.subr.bf16.mxu0 %v2887
    %2984 = vmatpush1.bf16.msra.mxu0 %v2886
    %2985 = vmatprep.subr.bf16.mxu0 %v2891
    %2986 = vmatpush1.bf16.msra.mxu0 %v2890
    %2987 = vmatprep.subr.bf16.mxu0 %v2895
    %2988 = vmatpush1.bf16.msra.mxu0 %v2894
    %2989 = vmatprep.subr.bf16.mxu0 %v2899
    %2990 = vmatpush1.bf16.msra.mxu0 %v2898
    %2991 = vmatprep.subr.bf16.mxu0 0
    %2992 = vmatpush1.bf16.msra.mxu0 0
    %2993 = vmatprep.subr.bf16.mxu0 0
    %2994 = vmatpush1.bf16.msra.mxu0 0
    %2995 = vmatprep.subr.bf16.mxu0 0
    %2996 = vmatpush1.bf16.msra.mxu0 0
    %2997 = vmatprep.subr.bf16.mxu0 0
    %2998 = vmatpush1.bf16.msra.mxu0 0
    %2999 = vmatprep.subr.bf16.mxu0 0
    %3000 = vmatpush1.bf16.msra.mxu0 0
    %3001 = vmatprep.subr.bf16.mxu0 0
    %3002 = vmatpush1.bf16.msra.mxu0 0
    %3003 = vmatprep.subr.bf16.mxu0 0
    %3004 = vmatpush1.bf16.msra.mxu0 0
    %3005 = vmatprep.subr.bf16.mxu0 0
    %3006 = vmatpush1.bf16.msra.mxu0 0
    %3007 = vmatprep.mubr.bf16.mxu0 0
    %3008 = vmatmul.mubr.bf16.gmra.mrb[0].mxu0 %v2717
    %v3009 = vpop.f32.mrb[0].mxu0
    %v3010 = vadd.f32 %v2763, %v3009
    %v3011 = vpop.f32.mrb[0].mxu0
    %v3012 = vadd.f32 %v2767, %v3011
    %v3013 = vpop.f32.mrb[0].mxu0
    %v3014 = vadd.f32 %v2763, %v3013
    %v3015 = vpop.f32.mrb[0].mxu0
    %v3016 = vadd.f32 %v2767, %v3015
    %3017 = vdwg.mxu0
    %v3018 = vmul.f32 %v2967, 1.702
    %v3019 = vmul.f32 %v2969, 1.702
    %v3020 = vmul.f32 %v3010, 1.702
    %v3021 = vmul.f32 %v3012, 1.702
    %v3022 = vmul.f32 %v2971, 1.702
    %v3023 = vmul.f32 %v2973, 1.702
    %v3024 = vmul.f32 %v3014, 1.702
    %v3025 = vmul.f32 %v3016, 1.702
    %v3026 = vxor.u32 %v3018, 2147483648
    %v3027 = vxor.u32 %v3019, 2147483648
    %v3028 = vxor.u32 %v3020, 2147483648
    %v3029 = vxor.u32 %v3021, 2147483648
    %v3030 = vxor.u32 %v3022, 2147483648
    %v3031 = vxor.u32 %v3023, 2147483648
    %v3032 = vxor.u32 %v3024, 2147483648
    %v3033 = vxor.u32 %v3025, 2147483648
    %v3034 = vmul.f32 %v3026, 1.442695
    %v3035 = vpow.pop %v3034
    %v3036 = vmul.f32 %v3027, 1.442695
    %v3037 = vpow.pop %v3036
    %v3038 = vmul.f32 %v3028, 1.442695
    %v3039 = vpow.pop %v3038
    %v3040 = vmul.f32 %v3029, 1.442695
    %v3041 = vpow.pop %v3040
    %v3042 = vmul.f32 %v3030, 1.442695
    %v3043 = vpow.pop %v3042
    %v3044 = vmul.f32 %v3031, 1.442695
    %v3045 = vpow.pop %v3044
    %v3046 = vmul.f32 %v3032, 1.442695
    %v3047 = vpow.pop %v3046
    %v3048 = vmul.f32 %v3033, 1.442695
    %v3049 = vpow.pop %v3048
    %v3050 = vadd.f32 %v3035, 1.0
    %v3051 = vadd.f32 %v3037, 1.0
    %v3052 = vadd.f32 %v3039, 1.0
    %v3053 = vadd.f32 %v3041, 1.0
    %v3054 = vadd.f32 %v3043, 1.0
    %v3055 = vadd.f32 %v3045, 1.0
    %v3056 = vadd.f32 %v3047, 1.0
    %v3057 = vadd.f32 %v3049, 1.0
    %v3058 = vrcp.pop %v3050
    %v3059 = vmul.f32 1.0, %v3058
    %v3060 = vrcp.pop %v3051
    %v3061 = vmul.f32 1.0, %v3060
    %v3062 = vrcp.pop %v3052
    %v3063 = vmul.f32 1.0, %v3062
    %v3064 = vrcp.pop %v3053
    %v3065 = vmul.f32 1.0, %v3064
    %v3066 = vrcp.pop %v3054
    %v3067 = vmul.f32 1.0, %v3066
    %v3068 = vrcp.pop %v3055
    %v3069 = vmul.f32 1.0, %v3068
    %v3070 = vrcp.pop %v3056
    %v3071 = vmul.f32 1.0, %v3070
    %v3072 = vrcp.pop %v3057
    %v3073 = vmul.f32 1.0, %v3072
    %v3074 = vmul.f32 %v2967, %v3059
    %v3075 = vmul.f32 %v2969, %v3061
    %v3076 = vmul.f32 %v3010, %v3063
    %v3077 = vmul.f32 %v3012, %v3065
    %v3078 = vmul.f32 %v2971, %v3067
    %v3079 = vmul.f32 %v2973, %v3069
    %v3080 = vmul.f32 %v3014, %v3071
    %v3081 = vmul.f32 %v3016, %v3073
    %v3082 = vld [vmem:[#allocation3] sm:$0xff]
    %v3083 = vld [vmem:[#allocation3 + $0x8] sm:$0xff]
    %v3084 = vpack.c.bf16 %v3078, %v3074
    %v3085 = vpack.c.bf16 %v3079, %v3075
    %v3086 = vpack.c.bf16 %v3080, %v3076
    %v3087 = vpack.c.bf16 %v3081, %v3077
    %v3088 = vld [vmem:[#allocation15] sm:$0xf]
    %v3089 = vld [vmem:[#allocation15 + $0x4] sm:$0xf]
    %v3090 = vld [vmem:[#allocation15 + $0x8] sm:$0xf]
    %v3091 = vld [vmem:[#allocation15 + $0xc] sm:$0xf]
    %v3092 = vld [vmem:[#allocation15 + $0x10] sm:$0xf]
    %v3093 = vld [vmem:[#allocation15 + $0x14] sm:$0xf]
    %v3094 = vld [vmem:[#allocation15 + $0x18] sm:$0xf]
    %v3095 = vld [vmem:[#allocation15 + $0x1c] sm:$0xf]
    %v3096 = vld [vmem:[#allocation15 + $0x20] sm:$0xf]
    %v3097 = vld [vmem:[#allocation15 + $0x24] sm:$0xf]
    %v3098 = vld [vmem:[#allocation15 + $0x28] sm:$0xf]
    %v3099 = vld [vmem:[#allocation15 + $0x2c] sm:$0xf]
    %v3100 = vld [vmem:[#allocation15 + $0x30] sm:$0xf]
    %v3101 = vld [vmem:[#allocation15 + $0x34] sm:$0xf]
    %v3102 = vld [vmem:[#allocation15 + $0x38] sm:$0xf]
    %v3103 = vld [vmem:[#allocation15 + $0x3c] sm:$0xf]
    %v3104 = vld [vmem:[#allocation15 + $0x40] sm:$0xf]
    %v3105 = vld [vmem:[#allocation15 + $0x44] sm:$0xf]
    %v3106 = vld [vmem:[#allocation15 + $0x48] sm:$0xf]
    %v3107 = vld [vmem:[#allocation15 + $0x4c] sm:$0xf]
    %v3108 = vld [vmem:[#allocation15 + $0x50] sm:$0xf]
    %v3109 = vld [vmem:[#allocation15 + $0x54] sm:$0xf]
    %v3110 = vld [vmem:[#allocation15 + $0x58] sm:$0xf]
    %v3111 = vld [vmem:[#allocation15 + $0x5c] sm:$0xf]
    %v3112 = vld [vmem:[#allocation15 + $0x60] sm:$0xf]
    %v3113 = vld [vmem:[#allocation15 + $0x64] sm:$0xf]
    %v3114 = vld [vmem:[#allocation15 + $0x68] sm:$0xf]
    %v3115 = vld [vmem:[#allocation15 + $0x6c] sm:$0xf]
    %v3116 = vld [vmem:[#allocation15 + $0x70] sm:$0xf]
    %v3117 = vld [vmem:[#allocation15 + $0x74] sm:$0xf]
    %v3118 = vld [vmem:[#allocation15 + $0x78] sm:$0xf]
    %v3119 = vld [vmem:[#allocation15 + $0x7c] sm:$0xf]
    %v3120 = vld [vmem:[#allocation15 + $0x80] sm:$0xf]
    %v3121 = vld [vmem:[#allocation15 + $0x84] sm:$0xf]
    %v3122 = vld [vmem:[#allocation15 + $0x88] sm:$0xf]
    %v3123 = vld [vmem:[#allocation15 + $0x8c] sm:$0xf]
    %v3124 = vld [vmem:[#allocation15 + $0x90] sm:$0xf]
    %v3125 = vld [vmem:[#allocation15 + $0x94] sm:$0xf]
    %v3126 = vld [vmem:[#allocation15 + $0x98] sm:$0xf]
    %v3127 = vld [vmem:[#allocation15 + $0x9c] sm:$0xf]
    %v3128 = vld [vmem:[#allocation15 + $0xa0] sm:$0xf]
    %v3129 = vld [vmem:[#allocation15 + $0xa4] sm:$0xf]
    %v3130 = vld [vmem:[#allocation15 + $0xa8] sm:$0xf]
    %v3131 = vld [vmem:[#allocation15 + $0xac] sm:$0xf]
    %v3132 = vld [vmem:[#allocation15 + $0xb0] sm:$0xf]
    %v3133 = vld [vmem:[#allocation15 + $0xb4] sm:$0xf]
    %v3134 = vld [vmem:[#allocation15 + $0xb8] sm:$0xf]
    %v3135 = vld [vmem:[#allocation15 + $0xbc] sm:$0xf]
    %v3136 = vld [vmem:[#allocation15 + $0xc0] sm:$0xf]
    %v3137 = vld [vmem:[#allocation15 + $0xc4] sm:$0xf]
    %v3138 = vld [vmem:[#allocation15 + $0xc8] sm:$0xf]
    %v3139 = vld [vmem:[#allocation15 + $0xcc] sm:$0xf]
    %v3140 = vld [vmem:[#allocation15 + $0xd0] sm:$0xf]
    %v3141 = vld [vmem:[#allocation15 + $0xd4] sm:$0xf]
    %v3142 = vld [vmem:[#allocation15 + $0xd8] sm:$0xf]
    %v3143 = vld [vmem:[#allocation15 + $0xdc] sm:$0xf]
    %v3144 = vld [vmem:[#allocation15 + $0xe0] sm:$0xf]
    %v3145 = vld [vmem:[#allocation15 + $0xe4] sm:$0xf]
    %v3146 = vld [vmem:[#allocation15 + $0xe8] sm:$0xf]
    %v3147 = vld [vmem:[#allocation15 + $0xec] sm:$0xf]
    %v3148 = vld [vmem:[#allocation15 + $0xf0] sm:$0xf]
    %v3149 = vld [vmem:[#allocation15 + $0xf4] sm:$0xf]
    %v3150 = vld [vmem:[#allocation15 + $0xf8] sm:$0xf]
    %v3151 = vld [vmem:[#allocation15 + $0xfc] sm:$0xf]
    %v3216 = vunpack.c.l.b16 %v3088
    %v3217 = vunpack.c.l.b16 %v3089
    %v3218 = vunpack.c.l.b16 %v3090
    %v3219 = vunpack.c.l.b16 %v3091
    %v3220 = vunpack.c.l.b16 %v3092
    %v3221 = vunpack.c.l.b16 %v3093
    %v3222 = vunpack.c.l.b16 %v3094
    %v3223 = vunpack.c.l.b16 %v3095
    %v3224 = vunpack.c.l.b16 %v3096
    %v3225 = vunpack.c.l.b16 %v3097
    %v3226 = vunpack.c.l.b16 %v3098
    %v3227 = vunpack.c.l.b16 %v3099
    %v3228 = vunpack.c.l.b16 %v3100
    %v3229 = vunpack.c.l.b16 %v3101
    %v3230 = vunpack.c.l.b16 %v3102
    %v3231 = vunpack.c.l.b16 %v3103
    %v3232 = vunpack.c.l.b16 %v3104
    %v3233 = vunpack.c.l.b16 %v3105
    %v3234 = vunpack.c.l.b16 %v3106
    %v3235 = vunpack.c.l.b16 %v3107
    %v3236 = vunpack.c.l.b16 %v3108
    %v3237 = vunpack.c.l.b16 %v3109
    %v3238 = vunpack.c.l.b16 %v3110
    %v3239 = vunpack.c.l.b16 %v3111
    %v3240 = vunpack.c.l.b16 %v3112
    %v3241 = vunpack.c.l.b16 %v3113
    %v3242 = vunpack.c.l.b16 %v3114
    %v3243 = vunpack.c.l.b16 %v3115
    %v3244 = vunpack.c.l.b16 %v3116
    %v3245 = vunpack.c.l.b16 %v3117
    %v3246 = vunpack.c.l.b16 %v3118
    %v3247 = vunpack.c.l.b16 %v3119
    %v3248 = vunpack.c.l.b16 %v3120
    %v3249 = vunpack.c.l.b16 %v3121
    %v3250 = vunpack.c.l.b16 %v3122
    %v3251 = vunpack.c.l.b16 %v3123
    %v3252 = vunpack.c.l.b16 %v3124
    %v3253 = vunpack.c.l.b16 %v3125
    %v3254 = vunpack.c.l.b16 %v3126
    %v3255 = vunpack.c.l.b16 %v3127
    %v3256 = vunpack.c.l.b16 %v3128
    %v3257 = vunpack.c.l.b16 %v3129
    %v3258 = vunpack.c.l.b16 %v3130
    %v3259 = vunpack.c.l.b16 %v3131
    %v3260 = vunpack.c.l.b16 %v3132
    %v3261 = vunpack.c.l.b16 %v3133
    %v3262 = vunpack.c.l.b16 %v3134
    %v3263 = vunpack.c.l.b16 %v3135
    %v3264 = vunpack.c.l.b16 %v3136
    %v3265 = vunpack.c.l.b16 %v3137
    %v3266 = vunpack.c.l.b16 %v3138
    %v3267 = vunpack.c.l.b16 %v3139
    %v3268 = vunpack.c.l.b16 %v3140
    %v3269 = vunpack.c.l.b16 %v3141
    %v3270 = vunpack.c.l.b16 %v3142
    %v3271 = vunpack.c.l.b16 %v3143
    %v3272 = vunpack.c.l.b16 %v3144
    %v3273 = vunpack.c.l.b16 %v3145
    %v3274 = vunpack.c.l.b16 %v3146
    %v3275 = vunpack.c.l.b16 %v3147
    %v3276 = vunpack.c.l.b16 %v3148
    %v3277 = vunpack.c.l.b16 %v3149
    %v3278 = vunpack.c.l.b16 %v3150
    %v3279 = vunpack.c.l.b16 %v3151
    %v3280 = vpack.c.b16 %v3217, %v3216
    %v3281 = vpack.c.b16 %v3219, %v3218
    %v3282 = vpack.c.b16 %v3221, %v3220
    %v3283 = vpack.c.b16 %v3223, %v3222
    %v3284 = vpack.c.b16 %v3225, %v3224
    %v3285 = vpack.c.b16 %v3227, %v3226
    %v3286 = vpack.c.b16 %v3229, %v3228
    %v3287 = vpack.c.b16 %v3231, %v3230
    %v3288 = vpack.c.b16 %v3233, %v3232
    %v3289 = vpack.c.b16 %v3235, %v3234
    %v3290 = vpack.c.b16 %v3237, %v3236
    %v3291 = vpack.c.b16 %v3239, %v3238
    %v3292 = vpack.c.b16 %v3241, %v3240
    %v3293 = vpack.c.b16 %v3243, %v3242
    %v3294 = vpack.c.b16 %v3245, %v3244
    %v3295 = vpack.c.b16 %v3247, %v3246
    %v3296 = vpack.c.b16 %v3249, %v3248
    %v3297 = vpack.c.b16 %v3251, %v3250
    %v3298 = vpack.c.b16 %v3253, %v3252
    %v3299 = vpack.c.b16 %v3255, %v3254
    %v3300 = vpack.c.b16 %v3257, %v3256
    %v3301 = vpack.c.b16 %v3259, %v3258
    %v3302 = vpack.c.b16 %v3261, %v3260
    %v3303 = vpack.c.b16 %v3263, %v3262
    %v3304 = vpack.c.b16 %v3265, %v3264
    %v3305 = vpack.c.b16 %v3267, %v3266
    %v3306 = vpack.c.b16 %v3269, %v3268
    %v3307 = vpack.c.b16 %v3271, %v3270
    %v3308 = vpack.c.b16 %v3273, %v3272
    %v3309 = vpack.c.b16 %v3275, %v3274
    %v3310 = vpack.c.b16 %v3277, %v3276
    %v3311 = vpack.c.b16 %v3279, %v3278
    %3344 = vmatprep.subr.bf16.mxu0 0
    %3345 = vmatpush1.bf16.msra.mxu0 %v3280
    %3346 = vmatprep.subr.bf16.mxu0 0
    %3347 = vmatpush1.bf16.msra.mxu0 %v3281
    %3348 = vmatprep.subr.bf16.mxu0 0
    %3349 = vmatpush1.bf16.msra.mxu0 %v3282
    %3350 = vmatprep.subr.bf16.mxu0 0
    %3351 = vmatpush1.bf16.msra.mxu0 %v3283
    %3352 = vmatprep.subr.bf16.mxu0 0
    %3353 = vmatpush1.bf16.msra.mxu0 %v3284
    %3354 = vmatprep.subr.bf16.mxu0 0
    %3355 = vmatpush1.bf16.msra.mxu0 %v3285
    %3356 = vmatprep.subr.bf16.mxu0 0
    %3357 = vmatpush1.bf16.msra.mxu0 %v3286
    %3358 = vmatprep.subr.bf16.mxu0 0
    %3359 = vmatpush1.bf16.msra.mxu0 %v3287
    %3360 = vmatprep.subr.bf16.mxu0 0
    %3361 = vmatpush1.bf16.msra.mxu0 %v3288
    %3362 = vmatprep.subr.bf16.mxu0 0
    %3363 = vmatpush1.bf16.msra.mxu0 %v3289
    %3364 = vmatprep.subr.bf16.mxu0 0
    %3365 = vmatpush1.bf16.msra.mxu0 %v3290
    %3366 = vmatprep.subr.bf16.mxu0 0
    %3367 = vmatpush1.bf16.msra.mxu0 %v3291
    %3368 = vmatprep.subr.bf16.mxu0 0
    %3369 = vmatpush1.bf16.msra.mxu0 %v3292
    %3370 = vmatprep.subr.bf16.mxu0 0
    %3371 = vmatpush1.bf16.msra.mxu0 %v3293
    %3372 = vmatprep.subr.bf16.mxu0 0
    %3373 = vmatpush1.bf16.msra.mxu0 %v3294
    %3374 = vmatprep.subr.bf16.mxu0 0
    %3375 = vmatpush1.bf16.msra.mxu0 %v3295
    %3376 = vmatprep.mubr.bf16.mxu0 %v3085
    %3377 = vmatmul.mubr.bf16.gmra.mrb[0].mxu0 %v3084
    %v3378 = vpop.f32.mrb[0].mxu0
    %v3379 = vadd.f32 0.0, %v3378
    %v3380 = vpop.f32.mrb[0].mxu0
    %v3381 = vpop.f32.mrb[0].mxu0
    %v3382 = vadd.f32 0.0, %v3381
    %v3383 = vpop.f32.mrb[0].mxu0
    %3384 = vdwg.mxu0
    %3385 = vmatprep.subr.bf16.mxu0 0
    %3386 = vmatpush1.bf16.msra.mxu0 %v3296
    %3387 = vmatprep.subr.bf16.mxu0 0
    %3388 = vmatpush1.bf16.msra.mxu0 %v3297
    %3389 = vmatprep.subr.bf16.mxu0 0
    %3390 = vmatpush1.bf16.msra.mxu0 %v3298
    %3391 = vmatprep.subr.bf16.mxu0 0
    %3392 = vmatpush1.bf16.msra.mxu0 %v3299
    %3393 = vmatprep.subr.bf16.mxu0 0
    %3394 = vmatpush1.bf16.msra.mxu0 %v3300
    %3395 = vmatprep.subr.bf16.mxu0 0
    %3396 = vmatpush1.bf16.msra.mxu0 %v3301
    %3397 = vmatprep.subr.bf16.mxu0 0
    %3398 = vmatpush1.bf16.msra.mxu0 %v3302
    %3399 = vmatprep.subr.bf16.mxu0 0
    %3400 = vmatpush1.bf16.msra.mxu0 %v3303
    %3401 = vmatprep.subr.bf16.mxu0 0
    %3402 = vmatpush1.bf16.msra.mxu0 %v3304
    %3403 = vmatprep.subr.bf16.mxu0 0
    %3404 = vmatpush1.bf16.msra.mxu0 %v3305
    %3405 = vmatprep.subr.bf16.mxu0 0
    %3406 = vmatpush1.bf16.msra.mxu0 %v3306
    %3407 = vmatprep.subr.bf16.mxu0 0
    %3408 = vmatpush1.bf16.msra.mxu0 %v3307
    %3409 = vmatprep.subr.bf16.mxu0 0
    %3410 = vmatpush1.bf16.msra.mxu0 %v3308
    %3411 = vmatprep.subr.bf16.mxu0 0
    %3412 = vmatpush1.bf16.msra.mxu0 %v3309
    %3413 = vmatprep.subr.bf16.mxu0 0
    %3414 = vmatpush1.bf16.msra.mxu0 %v3310
    %3415 = vmatprep.subr.bf16.mxu0 0
    %3416 = vmatpush1.bf16.msra.mxu0 %v3311
    %3417 = vmatprep.mubr.bf16.mxu0 %v3087
    %3418 = vmatmul.mubr.bf16.gmra.mrb[0].mxu0 %v3086
    %v3419 = vpop.f32.mrb[0].mxu0
    %v3420 = vadd.f32 %v3379, %v3419
    %v3421 = vpop.f32.mrb[0].mxu0
    %v3422 = vpop.f32.mrb[0].mxu0
    %v3423 = vadd.f32 %v3382, %v3422
    %v3424 = vpop.f32.mrb[0].mxu0
    %3425 = vdwg.mxu0
    %v3426 = vadd.f32 %v3082, %v3420
    %v3427 = vadd.f32 %v3083, %v3423
    %3428 = vst [vmem:[#allocation3] sm:$0xff] %v3426
    %3429 = vst [vmem:[#allocation3 + $0x8] sm:$0xff] %v3427
    // Predicated region
    $region90: #{tpu_custom_call.1} parent=1 // pred_check
      %p3430 = pneg %p140
    $region91: #{tpu_custom_call.1} parent=1 // pred_check_branch
      %3432 = sbr.rel (%p3430) target = $region93
    $region92: #{tpu_custom_call.1} parent=1 // pred_region
      %v3433 = vld [vmem:[#allocation3] sm:$0xff]
      %v3434 = vld [vmem:[#allocation3 + $0x8] sm:$0xff]
      %3435 = vst [vmem:[#allocation16] sm:$0xff] %v3433
      %3436 = vst [vmem:[#allocation16 + $0x8] sm:$0xff] %v3434
    $region93: #{tpu_custom_call.1} parent=1 // pred_fallthru
      _
    // Predicated region
    $region94: #{tpu_custom_call.1} parent=1 // pred_check
      _
    $region95: #{tpu_custom_call.1} parent=1 // pred_check_branch
      %3438 = sbr.rel (0) target = $region97
    $region96: #{tpu_custom_call.1} parent=1 // pred_region
      %s3440 = ssub.s32 256, 256
      %3441 = vsyncadd [#allocation6], %s3440
      %s3442 = sshll.u32 [#allocation16], 4
      %s3443 = int_to_ptr.vmem [resolvable:$true] %s3442
      %3448 = dma.vmem_to_hbm [thread:$0]  %s3443, 256, %s14, [#allocation6], 128, 128, 8
    $region97: #{tpu_custom_call.1} parent=1 // pred_fallthru
      _
    // Predicated region
    $region98: #{tpu_custom_call.1} parent=1 // pred_check
      _
    $region99: #{tpu_custom_call.1} parent=1 // pred_check_branch
      %3450 = sbr.rel (0) target = $region101
    $region100: #{tpu_custom_call.1} parent=1 // pred_region
      %3451 = dma.done [#allocation6], 256
    $region101: #{tpu_custom_call.1} parent=1 // pred_fallthru
      _
    %3452 = vsyncpa [#allocation5], 1
    %3453 = vsyncpa [#allocation8], 1
    %3454 = vsyncpa [#allocation11], 1
    %3455 = vsyncpa [#allocation14], 1
    %3456 = vsyncpa [#allocation6], 1

</llo_original>
